<compile_context>
chip_gen: v7x
topology: tpu7x:2x2x1
jax: 0.10.0
libtpu: 0.0.40
codegen_flags: <defaults>
</compile_context>

<pallas_src>
import functools

import jax
import jax.numpy as jnp
from jax import lax
from jax.experimental import pallas as pl
from jax.experimental.pallas import tpu as pltpu


def _default_vmem_limit():
    try:
        cap = pltpu.get_tpu_info().vmem_capacity_bytes
    except Exception:
        cap = 128 * 1024 * 1024
    # ~70% of physical VMEM, capped at 96 MiB (v5e/v6e: ~90 MiB, v7x: ~45 MiB).
    return min(int(cap * 0.7), 96 * 1024 * 1024)


_VMEM_LIMIT = _default_vmem_limit()


def _round_up(x, m):
    return ((x + m - 1) // m) * m


def _proj_kernel(h_ref, w_ref, b_ref, q_ref, k_ref, v_ref, *, qk_pad):
    """One fused MXU matmul per row tile, sliced into lane-aligned q / k / v."""
    qkv = jnp.dot(h_ref[...], w_ref[...],
                  preferred_element_type=jnp.float32) + b_ref[...]
    q_ref[...] = qkv[:, :qk_pad]
    k_ref[...] = qkv[:, qk_pad:2 * qk_pad]
    v_ref[...] = qkv[:, 2 * qk_pad:]


def _stats_kernel(q_ref, k_ref, adj_ref, part_ref):
    """Phase 1: per-dst-tile partials [sum(s*adj), sum(s^2*adj)].

    adj is streamed as int8 and converted once; the score already carries the
    original /(8*num_heads*64) scale (folded into the q weights), so the
    one-pass sum-of-squares stays well conditioned.
    """
    # s tile = q @ k_tile^T, contraction expressed so no transpose materializes.
    s = lax.dot_general(q_ref[...], k_ref[...],
                        (((1,), (1,)), ((), ())),
                        preferred_element_type=jnp.float32)        # (Np, TN)
    adj_f = adj_ref[...].astype(jnp.float32)
    sm = s * adj_f
    p_sum = jnp.sum(sm)
    p_sq = jnp.sum(sm * s)        # == sum(s*s*adj) since adj is a 0/1 mask

    # Lane-dense (1, 8, 128) partial block: sublane 0 = sum, sublane 1 = sumsq.
    row = lax.broadcasted_iota(jnp.int32, part_ref.shape, 1)
    part_ref[...] = jnp.where(row == 0, p_sum,
                              jnp.where(row == 1, p_sq, jnp.float32(0.0)))


def _softmax_agg_kernel(stats_ref, q_ref, k_ref, v_ref, adj_ref,
                        a_out_ref, v_out_ref):
    """Phase 2: per-destination (column) edge softmax + aggregation.

    The mean shift is dropped (softmax is shift-invariant per column); only
    inv_scale = 1/(std*temperature) is needed.
    """
    inv_scale = stats_ref[0]
    neg_inf = jnp.float32(-1e30)

    # Recompute the score tile (cheaper than spilling N^2 scores to HBM).
    s = lax.dot_general(q_ref[...], k_ref[...],
                        (((1,), (1,)), ((), ())),
                        preferred_element_type=jnp.float32)        # (Np, TN)
    adj_f = adj_ref[...].astype(jnp.float32)

    a_m = jnp.where(adj_f > 0, s * inv_scale, neg_inf)
    col_max = jnp.max(a_m, axis=0, keepdims=True)                  # (1, TN)
    # a_m - col_max <= 0 so exp never overflows; the 0/1 mask zeroes non-edges
    # (and whole columns with no incoming edge, e.g. padded nodes).
    p = jnp.exp(a_m - col_max) * adj_f
    denom = jnp.sum(p, axis=0, keepdims=True)                      # (1, TN)
    inv_denom = jnp.where(denom > 0, pl.reciprocal(denom, approx=False), 0.0)
    a_soft = p * inv_denom

    a_out_ref[...] = a_soft

    # new_v[dst] = sum_src a_soft[src, dst] * v[src]  ==  a_soft^T @ v,
    # again via dimension_numbers so no transpose is materialized.
    v_out_ref[...] = lax.dot_general(a_soft, v_ref[...],
                                     (((0,), (0,)), ((), ())),
                                     preferred_element_type=jnp.float32)


@functools.partial(jax.jit, static_argnames=("num_heads", "temperature", "tile_n"))
def gcs_layer_pallas(h, attn_q, attn_k, w_iv_t, b_iv, adj, *, num_heads,
                     temperature, tile_n=256):
    n, dim_num = h.shape
    qk_dim = num_heads * 64

    # Lane-dense padded widths (128-lane boundaries for every segment).
    qk_pad = _round_up(qk_dim, 128)
    d_pad = _round_up(dim_num, 128)
    w_tot = 2 * qk_pad + d_pad

    # Pad node count to a multiple of tile_n (padded nodes have no edges, so
    # masked reductions and the softmax ignore them).
    n_pad = _round_up(n, tile_n)
    num_tiles = n_pad // tile_n

    h_p = jnp.pad(h, ((0, n_pad - n), (0, d_pad - dim_num)))
    # Adjacency streamed as int8 (dominant HBM stream of both heavy phases).
    adj_i8 = jnp.pad(adj, ((0, n_pad - n), (0, n_pad - n))).astype(jnp.int8)
    # Edge count hoisted out of phase 1.
    cnt = jnp.sum(adj)

    # Fused, lane-padded weight/bias slabs; fold the /(8*num_heads*64) score
    # scale into Wq (zero runtime cost, keeps the one-pass variance sane).
    scale = jnp.float32(1.0 / (8.0 * qk_dim))
    wq = jnp.pad(attn_q * scale, ((0, d_pad - dim_num), (0, qk_pad - qk_dim)))
    wk = jnp.pad(attn_k, ((0, d_pad - dim_num), (0, qk_pad - qk_dim)))
    wv = jnp.pad(w_iv_t, ((0, d_pad - dim_num), (0, d_pad - dim_num)))
    w_cat = jnp.concatenate([wq, wk, wv], axis=1)                  # (d_pad, w_tot)
    b_cat = jnp.concatenate(
        [jnp.zeros((1, 2 * qk_pad), jnp.float32),
         jnp.pad(b_iv.reshape(1, dim_num), ((0, 0), (0, d_pad - dim_num)))],
        axis=1)                                                    # (1, w_tot)

    cparams = pltpu.CompilerParams(dimension_semantics=("parallel",),
                                   vmem_limit_bytes=_VMEM_LIMIT)

    # ---- fused q/k/v projection (large row tiles; weights resident) -------
    proj_rows = min(n_pad, 512)
    q, k, v = pl.pallas_call(
        functools.partial(_proj_kernel, qk_pad=qk_pad),
        out_shape=(jax.ShapeDtypeStruct((n_pad, qk_pad), jnp.float32),
                   jax.ShapeDtypeStruct((n_pad, qk_pad), jnp.float32),
                   jax.ShapeDtypeStruct((n_pad, d_pad), jnp.float32)),
        grid=(pl.cdiv(n_pad, proj_rows),),
        in_specs=[pl.BlockSpec((proj_rows, d_pad), lambda i: (i, 0)),
                  pl.BlockSpec(memory_space=pltpu.MemorySpace.VMEM),   # w_cat (whole, single copy)
                  pl.BlockSpec(memory_space=pltpu.MemorySpace.VMEM)],  # b_cat
        out_specs=(pl.BlockSpec((proj_rows, qk_pad), lambda i: (i, 0)),
                   pl.BlockSpec((proj_rows, qk_pad), lambda i: (i, 0)),
                   pl.BlockSpec((proj_rows, d_pad), lambda i: (i, 0))),
        compiler_params=cparams,
    )(h_p, w_cat, b_cat)

    # ---- phase 1: parallel per-dst-tile masked sum / sum-of-squares -------
    parts = pl.pallas_call(
        _stats_kernel,
        out_shape=jax.ShapeDtypeStruct((num_tiles, 8, 128), jnp.float32),
        grid=(num_tiles,),
        in_specs=[pl.BlockSpec(memory_space=pltpu.MemorySpace.VMEM),   # q (whole, single copy)
                  pl.BlockSpec((tile_n, qk_pad), lambda j: (j, 0)),    # k dst tile
                  pl.BlockSpec((n_pad, tile_n), lambda j: (0, j))],    # adj int8 columns
        out_specs=pl.BlockSpec((1, 8, 128), lambda j: (j, 0, 0)),
        compiler_params=cparams,
    )(q, k, adj_i8)

    s_sum = jnp.sum(parts[:, 0, 0])
    s_sq = jnp.sum(parts[:, 1, 0])
    mean = s_sum / cnt
    var = jnp.maximum(s_sq / cnt - mean * mean, 0.0)   # std(unbiased=False)^2
    inv_scale = 1.0 / (jnp.sqrt(var) * jnp.float32(temperature))
    stats = jnp.reshape(inv_scale, (1,)).astype(jnp.float32)

    # ---- phase 2: column softmax + aggregation -----------------------------
    a_p, v_p = pl.pallas_call(
        _softmax_agg_kernel,
        out_shape=(jax.ShapeDtypeStruct((n_pad, n_pad), jnp.float32),
                   jax.ShapeDtypeStruct((n_pad, d_pad), jnp.float32)),
        grid=(num_tiles,),
        in_specs=[pl.BlockSpec(memory_space=pltpu.MemorySpace.SMEM),   # inv_scale scalar
                  pl.BlockSpec(memory_space=pltpu.MemorySpace.VMEM),   # q (whole, single copy)
                  pl.BlockSpec((tile_n, qk_pad), lambda j: (j, 0)),    # k dst tile
                  pl.BlockSpec(memory_space=pltpu.MemorySpace.VMEM),   # v (whole, single copy)
                  pl.BlockSpec((n_pad, tile_n), lambda j: (0, j))],    # adj int8 columns
        out_specs=(pl.BlockSpec((n_pad, tile_n), lambda j: (0, j)),    # a_soft cols
                   pl.BlockSpec((tile_n, d_pad), lambda j: (j, 0))),   # v_out rows
        compiler_params=cparams,
    )(stats, q, k, v, adj_i8)

    return v_p[:n, :dim_num], a_p[:n, :n]


def gcs_layer_ref(h, attn_q, attn_k, w_iv_t, b_iv, adj, *, num_heads,
                  temperature):
    """Pure-JAX reference faithful to the torch math (incl. the /8 scale)."""
    qk_dim = num_heads * 64
    v = h @ w_iv_t + b_iv
    q = h @ attn_q
    k = h @ attn_k
    s = (q @ k.T) / (8.0 * qk_dim)
    cnt = jnp.sum(adj)
    mean = jnp.sum(s * adj) / cnt
    std = jnp.sqrt(jnp.sum(((s - mean) ** 2) * adj) / cnt)
    a = (s - mean) / std / temperature
    a_masked = jnp.where(adj > 0, a, -1e30)
    e = jnp.where(adj > 0,
                  jnp.exp(a_masked - jnp.max(a_masked, axis=0, keepdims=True)),
                  0.0)
    denom = jnp.sum(e, axis=0, keepdims=True)
    a_soft = jnp.where(denom > 0, e / denom, 0.0)
    return a_soft.T @ v, a_soft


if __name__ == "__main__":
    # Small shapes consistent with the module.
    N = 8            # number of graph nodes
    DIM = 32         # dim_num
    NUM_HEADS = 2    # -> q/k projection width = 128
    TEMPERATURE = 0.5

    key = jax.random.PRNGKey(0)
    k_h, k_w, k_b, k_adj = jax.random.split(key, 4)

    # Node features.
    h = jax.random.normal(k_h, (N, DIM), dtype=jnp.float32)

    # Parameters (matching __init__ shapes/semantics):
    #   attn_q, attn_k: constant 1.0, shape (dim_num, num_heads*64)
    #   iv: Linear(dim_num, dim_num); xavier_normal weight, small uniform bias.
    attn_q = jnp.ones((DIM, NUM_HEADS * 64), dtype=jnp.float32)
    attn_k = jnp.ones((DIM, NUM_HEADS * 64), dtype=jnp.float32)
    xavier_std = (2.0 / (DIM + DIM)) ** 0.5
    w_iv = xavier_std * jax.random.normal(k_w, (DIM, DIM), dtype=jnp.float32)
    w_iv_t = w_iv.T                                   # use h @ W^T + b layout
    bound = 1.0 / (DIM ** 0.5)
    b_iv = jax.random.uniform(k_b, (1, DIM), dtype=jnp.float32,
                              minval=-bound, maxval=bound)

    # Deterministic random graph (dense adjacency); self-loops guarantee every
    # dst node has at least one incoming edge.
    adj = jax.random.bernoulli(k_adj, 0.4, (N, N)).astype(jnp.float32)
    adj = jnp.maximum(adj, jnp.eye(N, dtype=jnp.float32))

    v_out, a_out = gcs_layer_pallas(h, attn_q, attn_k, w_iv_t, b_iv, adj,
                                    num_heads=NUM_HEADS,
                                    temperature=TEMPERATURE)
    jax.block_until_ready((v_out, a_out))

    v_ref, a_ref = gcs_layer_ref(h, attn_q, attn_k, w_iv_t, b_iv, adj,
                                 num_heads=NUM_HEADS,
                                 temperature=TEMPERATURE)

    assert v_out.shape == v_ref.shape and a_out.shape == a_ref.shape
    assert jnp.allclose(a_out, a_ref, atol=1e-4, rtol=1e-3), "edge attention mismatch"
    assert jnp.allclose(v_out, v_ref, atol=1e-3, rtol=1e-3), "node output mismatch"

    print("KERNEL_OK")
</pallas_src>

<mosaic_0001>
module attributes {stable_mosaic.version = 11 : i64} {
  func.func @_proj_kernel(%arg0: i32, %arg1: memref<256x128xf32, #tpu.memory_space<vmem>>, %arg2: memref<128x384xf32, #tpu.memory_space<vmem>>, %arg3: memref<1x384xf32, #tpu.memory_space<vmem>>, %arg4: memref<256x128xf32, #tpu.memory_space<vmem>>, %arg5: memref<256x128xf32, #tpu.memory_space<vmem>>, %arg6: memref<256x128xf32, #tpu.memory_space<vmem>>) attributes {dimension_semantics = [#tpu.dimension_semantics<parallel>], iteration_bounds = array<i64: 1>, scalar_prefetch = 0 : i64, scratch_operands = 0 : i64, tpu.core_type = #tpu.core_type<tc>, window_params = [{transform_indices = @transform_0, window_bounds = array<i64: 256, 128>}, {pipeline_mode = #tpu.pipeline_mode<synchronous>, transform_indices = @transform_1, window_bounds = array<i64: 128, 384>}, {pipeline_mode = #tpu.pipeline_mode<synchronous>, transform_indices = @transform_2, window_bounds = array<i64: 1, 384>}, {transform_indices = @transform_3, window_bounds = array<i64: 256, 128>}, {transform_indices = @transform_4, window_bounds = array<i64: 256, 128>}, {transform_indices = @transform_5, window_bounds = array<i64: 256, 128>}]} {
    %c0 = arith.constant 0 : index
    %c0_0 = arith.constant 0 : index
    %0 = vector.load %arg1[%c0, %c0_0] : memref<256x128xf32, #tpu.memory_space<vmem>>, vector<256x128xf32>
    %c0_1 = arith.constant 0 : index
    %c0_2 = arith.constant 0 : index
    %1 = vector.load %arg2[%c0_1, %c0_2] : memref<128x384xf32, #tpu.memory_space<vmem>>, vector<128x384xf32>
    %cst = arith.constant dense<0.000000e+00> : vector<256x384xf32>
    %2 = tpu.matmul %0, %1, %cst {dimension_numbers = #tpu.dot_dimension_numbers<[1], [0], [0], [1], [0, 0, 1, 1], [], []>} : vector<256x128xf32>, vector<128x384xf32>, vector<256x384xf32> -> vector<256x384xf32>
    %c0_3 = arith.constant 0 : index
    %c0_4 = arith.constant 0 : index
    %3 = vector.load %arg3[%c0_3, %c0_4] : memref<1x384xf32, #tpu.memory_space<vmem>>, vector<1x384xf32>
    %4 = vector.broadcast %3 : vector<1x384xf32> to vector<256x384xf32>
    %5 = arith.addf %2, %4 : vector<256x384xf32>
    %6 = vector.extract_strided_slice %5 {offsets = [0, 0], sizes = [256, 128], strides = [1, 1]} : vector<256x384xf32> to vector<256x128xf32>
    %c0_5 = arith.constant 0 : index
    %c0_6 = arith.constant 0 : index
    %7 = vector.load %arg4[%c0_5, %c0_6] : memref<256x128xf32, #tpu.memory_space<vmem>>, vector<256x128xf32>
    tpu.vector_store %arg4[%c0_5, %c0_6], %6 {strides = array<i32>} : memref<256x128xf32, #tpu.memory_space<vmem>>, vector<256x128xf32>,
    %8 = vector.extract_strided_slice %5 {offsets = [0, 128], sizes = [256, 128], strides = [1, 1]} : vector<256x384xf32> to vector<256x128xf32>
    %c0_7 = arith.constant 0 : index
    %c0_8 = arith.constant 0 : index
    %9 = vector.load %arg5[%c0_7, %c0_8] : memref<256x128xf32, #tpu.memory_space<vmem>>, vector<256x128xf32>
    tpu.vector_store %arg5[%c0_7, %c0_8], %8 {strides = array<i32>} : memref<256x128xf32, #tpu.memory_space<vmem>>, vector<256x128xf32>,
    %10 = vector.extract_strided_slice %5 {offsets = [0, 256], sizes = [256, 128], strides = [1, 1]} : vector<256x384xf32> to vector<256x128xf32>
    %c0_9 = arith.constant 0 : index
    %c0_10 = arith.constant 0 : index
    %11 = vector.load %arg6[%c0_9, %c0_10] : memref<256x128xf32, #tpu.memory_space<vmem>>, vector<256x128xf32>
    tpu.vector_store %arg6[%c0_9, %c0_10], %10 {strides = array<i32>} : memref<256x128xf32, #tpu.memory_space<vmem>>, vector<256x128xf32>,
    return
  }
  func.func @transform_0(%arg0: i32) -> (i32, i32) {
    %c0_i32 = arith.constant 0 : i32
    %c0_i32_0 = arith.constant 0 : i32
    return %arg0, %c0_i32 : i32, i32
  }
  func.func @transform_1(%arg0: i32) -> (i32, i32) {
    %c0_i32 = arith.constant 0 : i32
    %c0_i32_0 = arith.constant 0 : i32
    %c0_i32_1 = arith.constant 0 : i32
    return %c0_i32, %c0_i32_0 : i32, i32
  }
  func.func @transform_2(%arg0: i32) -> (i32, i32) {
    %c0_i32 = arith.constant 0 : i32
    %c0_i32_0 = arith.constant 0 : i32
    %c0_i32_1 = arith.constant 0 : i32
    return %c0_i32, %c0_i32_0 : i32, i32
  }
  func.func @transform_3(%arg0: i32) -> (i32, i32) {
    %c0_i32 = arith.constant 0 : i32
    %c0_i32_0 = arith.constant 0 : i32
    return %arg0, %c0_i32 : i32, i32
  }
  func.func @transform_4(%arg0: i32) -> (i32, i32) {
    %c0_i32 = arith.constant 0 : i32
    %c0_i32_0 = arith.constant 0 : i32
    return %arg0, %c0_i32 : i32, i32
  }
  func.func @transform_5(%arg0: i32) -> (i32, i32) {
    %c0_i32 = arith.constant 0 : i32
    %c0_i32_0 = arith.constant 0 : i32
    return %arg0, %c0_i32 : i32, i32
  }
}

module attributes {stable_mosaic.version = 11 : i64} {
  func.func @_stats_kernel(%arg0: i32, %arg1: memref<256x128xf32, #tpu.memory_space<vmem>>, %arg2: memref<256x128xf32, #tpu.memory_space<vmem>>, %arg3: memref<256x256xi8, #tpu.memory_space<vmem>>, %arg4: memref<1x8x128xf32, #tpu.memory_space<vmem>>) attributes {dimension_semantics = [#tpu.dimension_semantics<parallel>], iteration_bounds = array<i64: 1>, scalar_prefetch = 0 : i64, scratch_operands = 0 : i64, tpu.core_type = #tpu.core_type<tc>, window_params = [{pipeline_mode = #tpu.pipeline_mode<synchronous>, transform_indices = @transform_0, window_bounds = array<i64: 256, 128>}, {transform_indices = @transform_1, window_bounds = array<i64: 256, 128>}, {transform_indices = @transform_2, window_bounds = array<i64: 256, 256>}, {transform_indices = @transform_3, window_bounds = array<i64: 1, 8, 128>}]} {
    %c0 = arith.constant 0 : index
    %c0_0 = arith.constant 0 : index
    %0 = vector.load %arg1[%c0, %c0_0] : memref<256x128xf32, #tpu.memory_space<vmem>>, vector<256x128xf32>
    %c0_1 = arith.constant 0 : index
    %c0_2 = arith.constant 0 : index
    %1 = vector.load %arg2[%c0_1, %c0_2] : memref<256x128xf32, #tpu.memory_space<vmem>>, vector<256x128xf32>
    %cst = arith.constant dense<0.000000e+00> : vector<256x256xf32>
    %2 = tpu.matmul %0, %1, %cst {dimension_numbers = #tpu.dot_dimension_numbers<[1], [1], [0], [0], [0, 0, 1, 0], [], []>} : vector<256x128xf32>, vector<256x128xf32>, vector<256x256xf32> -> vector<256x256xf32>
    %c0_3 = arith.constant 0 : index
    %c0_4 = arith.constant 0 : index
    %3 = vector.load %arg3[%c0_3, %c0_4] : memref<256x256xi8, #tpu.memory_space<vmem>>, vector<256x256xi8>
    %4 = arith.sitofp %3 : vector<256x256xi8> to vector<256x256xf32>
    %5 = arith.mulf %2, %4 : vector<256x256xf32>
    %6 = vector.shape_cast %5 : vector<256x256xf32> to vector<1x256x256xf32>
    %cst_5 = arith.constant dense<0.000000e+00> : vector<1xf32>
    %7 = vector.multi_reduction <add>, %6, %cst_5 [1, 2] : vector<1x256x256xf32> to vector<1xf32>
    %8 = vector.shape_cast %7 : vector<1xf32> to vector<1x1x1xf32>
    %9 = vector.extract %8[0, 0, 0] : f32 from vector<1x1x1xf32>
    %10 = arith.mulf %5, %2 : vector<256x256xf32>
    %11 = vector.shape_cast %10 : vector<256x256xf32> to vector<1x256x256xf32>
    %cst_6 = arith.constant dense<0.000000e+00> : vector<1xf32>
    %12 = vector.multi_reduction <add>, %11, %cst_6 [1, 2] : vector<1x256x256xf32> to vector<1xf32>
    %13 = vector.shape_cast %12 : vector<1xf32> to vector<1x1x1xf32>
    %14 = vector.extract %13[0, 0, 0] : f32 from vector<1x1x1xf32>
    %15 = tpu.iota {dimensions = array<i32: 1>} : vector<1x8x128xi32>
    %c0_i32 = arith.constant 0 : i32
    %16 = vector.broadcast %c0_i32 : i32 to vector<1x8x128xi32>
    %17 = arith.cmpi eq, %15, %16 : vector<1x8x128xi32>
    %c1_i32 = arith.constant 1 : i32
    %18 = vector.broadcast %c1_i32 : i32 to vector<1x8x128xi32>
    %19 = arith.cmpi eq, %15, %18 : vector<1x8x128xi32>
    %cst_7 = arith.constant 0.000000e+00 : f32
    %20 = vector.broadcast %14 : f32 to vector<1x8x128xf32>
    %21 = vector.broadcast %cst_7 : f32 to vector<1x8x128xf32>
    %22 = arith.select %19, %20, %21 : vector<1x8x128xi1>, vector<1x8x128xf32>
    %23 = vector.broadcast %9 : f32 to vector<1x8x128xf32>
    %24 = arith.select %17, %23, %22 : vector<1x8x128xi1>, vector<1x8x128xf32>
    %c0_8 = arith.constant 0 : index
    %c0_9 = arith.constant 0 : index
    %c0_10 = arith.constant 0 : index
    %25 = vector.load %arg4[%c0_8, %c0_9, %c0_10] : memref<1x8x128xf32, #tpu.memory_space<vmem>>, vector<1x8x128xf32>
    tpu.vector_store %arg4[%c0_8, %c0_9, %c0_10], %24 {strides = array<i32>} : memref<1x8x128xf32, #tpu.memory_space<vmem>>, vector<1x8x128xf32>,
    return
  }
  func.func @transform_0(%arg0: i32) -> (i32, i32) {
    %c0_i32 = arith.constant 0 : i32
    %c0_i32_0 = arith.constant 0 : i32
    %c0_i32_1 = arith.constant 0 : i32
    return %c0_i32, %c0_i32_0 : i32, i32
  }
  func.func @transform_1(%arg0: i32) -> (i32, i32) {
    %c0_i32 = arith.constant 0 : i32
    %c0_i32_0 = arith.constant 0 : i32
    return %arg0, %c0_i32 : i32, i32
  }
  func.func @transform_2(%arg0: i32) -> (i32, i32) {
    %c0_i32 = arith.constant 0 : i32
    %c0_i32_0 = arith.constant 0 : i32
    return %c0_i32, %arg0 : i32, i32
  }
  func.func @transform_3(%arg0: i32) -> (i32, i32, i32) {
    %c0_i32 = arith.constant 0 : i32
    %c0_i32_0 = arith.constant 0 : i32
    %c0_i32_1 = arith.constant 0 : i32
    return %arg0, %c0_i32, %c0_i32_0 : i32, i32, i32
  }
}

module attributes {stable_mosaic.version = 11 : i64} {
  func.func @_softmax_agg_kernel(%arg0: i32, %arg1: memref<1xf32, #tpu.memory_space<smem>>, %arg2: memref<256x128xf32, #tpu.memory_space<vmem>>, %arg3: memref<256x128xf32, #tpu.memory_space<vmem>>, %arg4: memref<256x128xf32, #tpu.memory_space<vmem>>, %arg5: memref<256x256xi8, #tpu.memory_space<vmem>>, %arg6: memref<256x256xf32, #tpu.memory_space<vmem>>, %arg7: memref<256x128xf32, #tpu.memory_space<vmem>>) attributes {dimension_semantics = [#tpu.dimension_semantics<parallel>], iteration_bounds = array<i64: 1>, scalar_prefetch = 0 : i64, scratch_operands = 0 : i64, tpu.core_type = #tpu.core_type<tc>, window_params = [{transform_indices = @transform_0, window_bounds = array<i64: 1>}, {pipeline_mode = #tpu.pipeline_mode<synchronous>, transform_indices = @transform_1, window_bounds = array<i64: 256, 128>}, {transform_indices = @transform_2, window_bounds = array<i64: 256, 128>}, {pipeline_mode = #tpu.pipeline_mode<synchronous>, transform_indices = @transform_3, window_bounds = array<i64: 256, 128>}, {transform_indices = @transform_4, window_bounds = array<i64: 256, 256>}, {transform_indices = @transform_5, window_bounds = array<i64: 256, 256>}, {transform_indices = @transform_6, window_bounds = array<i64: 256, 128>}]} {
    %c0 = arith.constant 0 : index
    %0 = memref.load %arg1[%c0] : memref<1xf32, #tpu.memory_space<smem>>
    %c0_0 = arith.constant 0 : index
    %c0_1 = arith.constant 0 : index
    %1 = vector.load %arg2[%c0_0, %c0_1] : memref<256x128xf32, #tpu.memory_space<vmem>>, vector<256x128xf32>
    %c0_2 = arith.constant 0 : index
    %c0_3 = arith.constant 0 : index
    %2 = vector.load %arg3[%c0_2, %c0_3] : memref<256x128xf32, #tpu.memory_space<vmem>>, vector<256x128xf32>
    %cst = arith.constant dense<0.000000e+00> : vector<256x256xf32>
    %3 = tpu.matmul %1, %2, %cst {dimension_numbers = #tpu.dot_dimension_numbers<[1], [1], [0], [0], [0, 0, 1, 0], [], []>} : vector<256x128xf32>, vector<256x128xf32>, vector<256x256xf32> -> vector<256x256xf32>
    %c0_4 = arith.constant 0 : index
    %c0_5 = arith.constant 0 : index
    %4 = vector.load %arg5[%c0_4, %c0_5] : memref<256x256xi8, #tpu.memory_space<vmem>>, vector<256x256xi8>
    %5 = arith.sitofp %4 : vector<256x256xi8> to vector<256x256xf32>
    %cst_6 = arith.constant 0.000000e+00 : f32
    %6 = vector.broadcast %cst_6 : f32 to vector<256x256xf32>
    %7 = arith.cmpf ogt, %5, %6 : vector<256x256xf32>
    %8 = vector.broadcast %0 : f32 to vector<256x256xf32>
    %9 = arith.mulf %3, %8 : vector<256x256xf32>
    %cst_7 = arith.constant -1.000000e+30 : f32
    %10 = vector.broadcast %cst_7 : f32 to vector<256x256xf32>
    %11 = arith.select %7, %9, %10 : vector<256x256xi1>, vector<256x256xf32>
    %cst_8 = arith.constant dense<0xFF800000> : vector<256xf32>
    %12 = vector.multi_reduction <maximumf>, %11, %cst_8 [0] : vector<256x256xf32> to vector<256xf32>
    %13 = vector.shape_cast %12 : vector<256xf32> to vector<1x256xf32>
    %14 = vector.broadcast %13 : vector<1x256xf32> to vector<256x256xf32>
    %15 = arith.subf %11, %14 : vector<256x256xf32>
    %16 = math.exp %15 : vector<256x256xf32>
    %17 = arith.mulf %16, %5 : vector<256x256xf32>
    %cst_9 = arith.constant dense<0.000000e+00> : vector<256xf32>
    %18 = vector.multi_reduction <add>, %17, %cst_9 [0] : vector<256x256xf32> to vector<256xf32>
    %19 = vector.shape_cast %18 : vector<256xf32> to vector<1x256xf32>
    %cst_10 = arith.constant 0.000000e+00 : f32
    %20 = vector.broadcast %cst_10 : f32 to vector<1x256xf32>
    %21 = arith.cmpf ogt, %19, %20 : vector<1x256xf32>
    %22 = tpu.reciprocal %19 : vector<1x256xf32> -> vector<1x256xf32>
    %cst_11 = arith.constant 0.000000e+00 : f32
    %23 = vector.broadcast %cst_11 : f32 to vector<1x256xf32>
    %24 = arith.select %21, %22, %23 : vector<1x256xi1>, vector<1x256xf32>
    %25 = vector.broadcast %24 : vector<1x256xf32> to vector<256x256xf32>
    %26 = arith.mulf %17, %25 : vector<256x256xf32>
    %c0_12 = arith.constant 0 : index
    %c0_13 = arith.constant 0 : index
    %27 = vector.load %arg6[%c0_12, %c0_13] : memref<256x256xf32, #tpu.memory_space<vmem>>, vector<256x256xf32>
    tpu.vector_store %arg6[%c0_12, %c0_13], %26 {strides = array<i32>} : memref<256x256xf32, #tpu.memory_space<vmem>>, vector<256x256xf32>,
    %c0_14 = arith.constant 0 : index
    %c0_15 = arith.constant 0 : index
    %28 = vector.load %arg4[%c0_14, %c0_15] : memref<256x128xf32, #tpu.memory_space<vmem>>, vector<256x128xf32>
    %cst_16 = arith.constant dense<0.000000e+00> : vector<256x128xf32>
    %29 = tpu.matmul %26, %28, %cst_16 {dimension_numbers = #tpu.dot_dimension_numbers<[0], [0], [1], [1], [0, 1, 1, 1], [], []>} : vector<256x256xf32>, vector<256x128xf32>, vector<256x128xf32> -> vector<256x128xf32>
    %c0_17 = arith.constant 0 : index
    %c0_18 = arith.constant 0 : index
    %30 = vector.load %arg7[%c0_17, %c0_18] : memref<256x128xf32, #tpu.memory_space<vmem>>, vector<256x128xf32>
    tpu.vector_store %arg7[%c0_17, %c0_18], %29 {strides = array<i32>} : memref<256x128xf32, #tpu.memory_space<vmem>>, vector<256x128xf32>,
    return
  }
  func.func @transform_0(%arg0: i32) -> i32 {
    %c0_i32 = arith.constant 0 : i32
    %c0_i32_0 = arith.constant 0 : i32
    return %c0_i32 : i32
  }
  func.func @transform_1(%arg0: i32) -> (i32, i32) {
    %c0_i32 = arith.constant 0 : i32
    %c0_i32_0 = arith.constant 0 : i32
    %c0_i32_1 = arith.constant 0 : i32
    return %c0_i32, %c0_i32_0 : i32, i32
  }
  func.func @transform_2(%arg0: i32) -> (i32, i32) {
    %c0_i32 = arith.constant 0 : i32
    %c0_i32_0 = arith.constant 0 : i32
    return %arg0, %c0_i32 : i32, i32
  }
  func.func @transform_3(%arg0: i32) -> (i32, i32) {
    %c0_i32 = arith.constant 0 : i32
    %c0_i32_0 = arith.constant 0 : i32
    %c0_i32_1 = arith.constant 0 : i32
    return %c0_i32, %c0_i32_0 : i32, i32
  }
  func.func @transform_4(%arg0: i32) -> (i32, i32) {
    %c0_i32 = arith.constant 0 : i32
    %c0_i32_0 = arith.constant 0 : i32
    return %c0_i32, %arg0 : i32, i32
  }
  func.func @transform_5(%arg0: i32) -> (i32, i32) {
    %c0_i32 = arith.constant 0 : i32
    %c0_i32_0 = arith.constant 0 : i32
    return %c0_i32, %arg0 : i32, i32
  }
  func.func @transform_6(%arg0: i32) -> (i32, i32) {
    %c0_i32 = arith.constant 0 : i32
    %c0_i32_0 = arith.constant 0 : i32
    return %arg0, %c0_i32 : i32, i32
  }
}

</mosaic_0001>

<llo_original>
// kernel: gcs_layer_pallas.4
$region0: #{gcs_layer_pallas.4}
  #allocation0 [shape = 'u32[]', space=smem, size = 0x4, offset = 0x4, fixed_abs, tag = 'smem constant byte address 0x4 - core index']
  #allocation1 [shape = 'u32[144,128]{1,0:T(1,128)}', space=vmem, size = 0x12000, scoped, tag = 'internal scratch']
  %s0 = inlined_call_operand.hbm [shape: f32[256,128], index: 0, kind: input, shape index: {}]
  %s1 = inlined_call_operand.hbm [shape: f32[256,128], index: 1, kind: input, shape index: {}]
  %s2 = inlined_call_operand.hbm [shape: s8[256,256], index: 2, kind: input, shape index: {}]
  %s3 = inlined_call_operand.hbm [shape: f32[1,8,128], index: 3, kind: output, shape index: {}]
  %s4 = sld [smem:[#allocation0]]
  $region34: #{gcs_layer_pallas.4} parent=0
    _
  %s6 = ssub.s32 1, %s4
  %s7 = scalar_select 0, %s6, %s4
  $region1: #{gcs_layer_pallas.4} parent=0
    #allocation2 [shape = 'u8[131072]{0}', space=vmem, size = 0x20000, scoped, tag = 'input window, operand 0, single buffered']
    #allocation3 [shape = 's32[1]{0}', space=sflag, size = 0x4, scoped, tag = 'scoped memory for gcs_layer_pallas.4']
    #allocation4 [shape = 's32[1]{0}', space=sflag, size = 0x4, scoped, tag = 'scoped memory for gcs_layer_pallas.4']
    #allocation5 [shape = 'u8[131072]{0}', space=vmem, size = 0x20000, scoped, tag = 'input window, operand 1, single buffered']
    #allocation6 [shape = 's32[1]{0}', space=sflag, size = 0x4, scoped, tag = 'scoped memory for gcs_layer_pallas.4']
    #allocation7 [shape = 'u8[65536]{0}', space=vmem, size = 0x10000, scoped, tag = 'input window, operand 2, single buffered']
    #allocation8 [shape = 'u8[4096]{0}', space=vmem, size = 0x1000, scoped, tag = 'output window, operand 0, single buffered']
    %8 = vsyncpa [#allocation3], 0
    %9 = vsyncpa [#allocation6], 0
    %10 = vsyncpa [#allocation4], 0
    // Predicated region
    $region2: #{gcs_layer_pallas.4} parent=1 // pred_check
      _
    $region3: #{gcs_layer_pallas.4} parent=1 // pred_check_branch
      %12 = sbr.rel (0) target = $region5
    $region4: #{gcs_layer_pallas.4} parent=1 // pred_region
      %s14 = ssub.s32 4096, 4096
      %15 = vsyncadd [#allocation3], %s14
      %s16 = sshll.u32 [#allocation2], 4
      %s17 = int_to_ptr.vmem [resolvable:$true] %s16
      %22 = dma.hbm_to_vmem [thread:$0]  %s0, 4096, %s17, [#allocation3], 128, 128, 8
    $region5: #{gcs_layer_pallas.4} parent=1 // pred_fallthru
      _
    // Predicated region
    $region6: #{gcs_layer_pallas.4} parent=1 // pred_check
      _
    $region7: #{gcs_layer_pallas.4} parent=1 // pred_check_branch
      %24 = sbr.rel (0) target = $region9
    $region8: #{gcs_layer_pallas.4} parent=1 // pred_region
      %s26 = ssub.s32 4096, 4096
      %27 = vsyncadd [#allocation6], %s26
      %s28 = sshll.u32 [#allocation5], 4
      %s29 = int_to_ptr.vmem [resolvable:$true] %s28
      %34 = dma.hbm_to_vmem [thread:$0]  %s1, 4096, %s29, [#allocation6], 128, 128, 8
    $region9: #{gcs_layer_pallas.4} parent=1 // pred_fallthru
      _
    // Predicated region
    $region10: #{gcs_layer_pallas.4} parent=1 // pred_check
      _
    $region11: #{gcs_layer_pallas.4} parent=1 // pred_check_branch
      %36 = sbr.rel (0) target = $region13
    $region12: #{gcs_layer_pallas.4} parent=1 // pred_region
      %s38 = ssub.s32 2048, 2048
      %39 = vsyncadd [#allocation6], %s38
      %s40 = sshll.u32 [#allocation7], 4
      %s41 = int_to_ptr.vmem [resolvable:$true] %s40
      %46 = dma.hbm_to_vmem [thread:$0]  %s2, 2048, %s41, [#allocation6], 256, 256, 16
    $region13: #{gcs_layer_pallas.4} parent=1 // pred_fallthru
      _
    // Predicated region
    $region14: #{gcs_layer_pallas.4} parent=1 // pred_check
      _
    $region15: #{gcs_layer_pallas.4} parent=1 // pred_check_branch
      %48 = sbr.rel (0) target = $region17
    $region16: #{gcs_layer_pallas.4} parent=1 // pred_region
      %49 = dma.done [#allocation3], 4096
    $region17: #{gcs_layer_pallas.4} parent=1 // pred_fallthru
      _
    // Predicated region
    $region18: #{gcs_layer_pallas.4} parent=1 // pred_check
      _
    $region19: #{gcs_layer_pallas.4} parent=1 // pred_check_branch
      %51 = sbr.rel (0) target = $region21
    $region20: #{gcs_layer_pallas.4} parent=1 // pred_region
      %52 = dma.done [#allocation6], 4096
    $region21: #{gcs_layer_pallas.4} parent=1 // pred_fallthru
      _
    // Predicated region
    $region22: #{gcs_layer_pallas.4} parent=1 // pred_check
      _
    $region23: #{gcs_layer_pallas.4} parent=1 // pred_check_branch
      %54 = sbr.rel (0) target = $region25
    $region24: #{gcs_layer_pallas.4} parent=1 // pred_region
      %55 = dma.done [#allocation6], 2048
    $region25: #{gcs_layer_pallas.4} parent=1 // pred_fallthru
      _
    %v56 = vld [vmem:[#allocation2] sm:$0xff]
    %v57 = vld [vmem:[#allocation2 + $0x8] sm:$0xff]
    %v58 = vld [vmem:[#allocation2 + $0x10] sm:$0xff]
    %v59 = vld [vmem:[#allocation2 + $0x18] sm:$0xff]
    %v60 = vld [vmem:[#allocation2 + $0x20] sm:$0xff]
    %v61 = vld [vmem:[#allocation2 + $0x28] sm:$0xff]
    %v62 = vld [vmem:[#allocation2 + $0x30] sm:$0xff]
    %v63 = vld [vmem:[#allocation2 + $0x38] sm:$0xff]
    %v64 = vld [vmem:[#allocation2 + $0x40] sm:$0xff]
    %v65 = vld [vmem:[#allocation2 + $0x48] sm:$0xff]
    %v66 = vld [vmem:[#allocation2 + $0x50] sm:$0xff]
    %v67 = vld [vmem:[#allocation2 + $0x58] sm:$0xff]
    %v68 = vld [vmem:[#allocation2 + $0x60] sm:$0xff]
    %v69 = vld [vmem:[#allocation2 + $0x68] sm:$0xff]
    %v70 = vld [vmem:[#allocation2 + $0x70] sm:$0xff]
    %v71 = vld [vmem:[#allocation2 + $0x78] sm:$0xff]
    %v72 = vld [vmem:[#allocation2 + $0x80] sm:$0xff]
    %v73 = vld [vmem:[#allocation2 + $0x88] sm:$0xff]
    %v74 = vld [vmem:[#allocation2 + $0x90] sm:$0xff]
    %v75 = vld [vmem:[#allocation2 + $0x98] sm:$0xff]
    %v76 = vld [vmem:[#allocation2 + $0xa0] sm:$0xff]
    %v77 = vld [vmem:[#allocation2 + $0xa8] sm:$0xff]
    %v78 = vld [vmem:[#allocation2 + $0xb0] sm:$0xff]
    %v79 = vld [vmem:[#allocation2 + $0xb8] sm:$0xff]
    %v80 = vld [vmem:[#allocation2 + $0xc0] sm:$0xff]
    %v81 = vld [vmem:[#allocation2 + $0xc8] sm:$0xff]
    %v82 = vld [vmem:[#allocation2 + $0xd0] sm:$0xff]
    %v83 = vld [vmem:[#allocation2 + $0xd8] sm:$0xff]
    %v84 = vld [vmem:[#allocation2 + $0xe0] sm:$0xff]
    %v85 = vld [vmem:[#allocation2 + $0xe8] sm:$0xff]
    %v86 = vld [vmem:[#allocation2 + $0xf0] sm:$0xff]
    %v87 = vld [vmem:[#allocation2 + $0xf8] sm:$0xff]
    %v88 = vld [vmem:[#allocation5] sm:$0xff]
    %v89 = vld [vmem:[#allocation5 + $0x8] sm:$0xff]
    %v90 = vld [vmem:[#allocation5 + $0x10] sm:$0xff]
    %v91 = vld [vmem:[#allocation5 + $0x18] sm:$0xff]
    %v92 = vld [vmem:[#allocation5 + $0x20] sm:$0xff]
    %v93 = vld [vmem:[#allocation5 + $0x28] sm:$0xff]
    %v94 = vld [vmem:[#allocation5 + $0x30] sm:$0xff]
    %v95 = vld [vmem:[#allocation5 + $0x38] sm:$0xff]
    %v96 = vld [vmem:[#allocation5 + $0x40] sm:$0xff]
    %v97 = vld [vmem:[#allocation5 + $0x48] sm:$0xff]
    %v98 = vld [vmem:[#allocation5 + $0x50] sm:$0xff]
    %v99 = vld [vmem:[#allocation5 + $0x58] sm:$0xff]
    %v100 = vld [vmem:[#allocation5 + $0x60] sm:$0xff]
    %v101 = vld [vmem:[#allocation5 + $0x68] sm:$0xff]
    %v102 = vld [vmem:[#allocation5 + $0x70] sm:$0xff]
    %v103 = vld [vmem:[#allocation5 + $0x78] sm:$0xff]
    %v104 = vld [vmem:[#allocation5 + $0x80] sm:$0xff]
    %v105 = vld [vmem:[#allocation5 + $0x88] sm:$0xff]
    %v106 = vld [vmem:[#allocation5 + $0x90] sm:$0xff]
    %v107 = vld [vmem:[#allocation5 + $0x98] sm:$0xff]
    %v108 = vld [vmem:[#allocation5 + $0xa0] sm:$0xff]
    %v109 = vld [vmem:[#allocation5 + $0xa8] sm:$0xff]
    %v110 = vld [vmem:[#allocation5 + $0xb0] sm:$0xff]
    %v111 = vld [vmem:[#allocation5 + $0xb8] sm:$0xff]
    %v112 = vld [vmem:[#allocation5 + $0xc0] sm:$0xff]
    %v113 = vld [vmem:[#allocation5 + $0xc8] sm:$0xff]
    %v114 = vld [vmem:[#allocation5 + $0xd0] sm:$0xff]
    %v115 = vld [vmem:[#allocation5 + $0xd8] sm:$0xff]
    %v116 = vld [vmem:[#allocation5 + $0xe0] sm:$0xff]
    %v117 = vld [vmem:[#allocation5 + $0xe8] sm:$0xff]
    %v118 = vld [vmem:[#allocation5 + $0xf0] sm:$0xff]
    %v119 = vld [vmem:[#allocation5 + $0xf8] sm:$0xff]
    %120 = vmatprep.subr.mxu0 0.0
    %121 = vmatpush1.xpose.msra.mxu0 %v88
    %122 = vmatprep.subr.mxu0 0.0
    %123 = vmatpush1.xpose.msra.mxu0 %v89
    %124 = vmatprep.subr.mxu0 0.0
    %125 = vmatpush1.xpose.msra.mxu0 %v90
    %126 = vmatprep.subr.mxu0 0.0
    %127 = vmatpush1.xpose.msra.mxu0 %v91
    %128 = vmatprep.subr.mxu0 0.0
    %129 = vmatpush1.xpose.msra.mxu0 %v92
    %130 = vmatprep.subr.mxu0 0.0
    %131 = vmatpush1.xpose.msra.mxu0 %v93
    %132 = vmatprep.subr.mxu0 0.0
    %133 = vmatpush1.xpose.msra.mxu0 %v94
    %134 = vmatprep.subr.mxu0 0.0
    %135 = vmatpush1.xpose.msra.mxu0 %v95
    %136 = vmatprep.subr.mxu0 0.0
    %137 = vmatpush1.xpose.msra.mxu0 %v96
    %138 = vmatprep.subr.mxu0 0.0
    %139 = vmatpush1.xpose.msra.mxu0 %v97
    %140 = vmatprep.subr.mxu0 0.0
    %141 = vmatpush1.xpose.msra.mxu0 %v98
    %142 = vmatprep.subr.mxu0 0.0
    %143 = vmatpush1.xpose.msra.mxu0 %v99
    %144 = vmatprep.subr.mxu0 0.0
    %145 = vmatpush1.xpose.msra.mxu0 %v100
    %146 = vmatprep.subr.mxu0 0.0
    %147 = vmatpush1.xpose.msra.mxu0 %v101
    %148 = vmatprep.subr.mxu0 0.0
    %149 = vmatpush1.xpose.msra.mxu0 %v102
    %150 = vmatprep.subr.mxu0 0.0
    %151 = vmatpush1.xpose.msra.mxu0 %v103
    %152 = vmatprep.subr.mxu0 0.0
    %153 = vmatpush1.xpose.msra.mxu0 %v104
    %154 = vmatprep.subr.mxu0 0.0
    %155 = vmatpush1.xpose.msra.mxu0 %v105
    %156 = vmatprep.subr.mxu0 0.0
    %157 = vmatpush1.xpose.msra.mxu0 %v106
    %158 = vmatprep.subr.mxu0 0.0
    %159 = vmatpush1.xpose.msra.mxu0 %v107
    %160 = vmatprep.subr.mxu0 0.0
    %161 = vmatpush1.xpose.msra.mxu0 %v108
    %162 = vmatprep.subr.mxu0 0.0
    %163 = vmatpush1.xpose.msra.mxu0 %v109
    %164 = vmatprep.subr.mxu0 0.0
    %165 = vmatpush1.xpose.msra.mxu0 %v110
    %166 = vmatprep.subr.mxu0 0.0
    %167 = vmatpush1.xpose.msra.mxu0 %v111
    %168 = vmatprep.subr.mxu0 0.0
    %169 = vmatpush1.xpose.msra.mxu0 %v112
    %170 = vmatprep.subr.mxu0 0.0
    %171 = vmatpush1.xpose.msra.mxu0 %v113
    %172 = vmatprep.subr.mxu0 0.0
    %173 = vmatpush1.xpose.msra.mxu0 %v114
    %174 = vmatprep.subr.mxu0 0.0
    %175 = vmatpush1.xpose.msra.mxu0 %v115
    %176 = vmatprep.subr.mxu0 0.0
    %177 = vmatpush1.xpose.msra.mxu0 %v116
    %178 = vmatprep.subr.mxu0 0.0
    %179 = vmatpush1.xpose.msra.mxu0 %v117
    %180 = vmatprep.subr.mxu0 0.0
    %181 = vmatpush1.xpose.msra.mxu0 %v118
    %182 = vmatprep.subr.mxu0 0.0
    %183 = vmatpush1.xpose.msra.mxu0 %v119
    %184 = vmatprep.mubr.f32.mxu0 0.0
    %185 = vmatmul.mubr.f32.gmra.mrb[0].mxu0 %v56
    %v186 = vpop.f32.mrb[0].mxu0
    %v187 = vadd.f32 0.0, %v186
    %v188 = vpop.f32.mrb[0].mxu0
    %v189 = vadd.f32 0.0, %v188
    %190 = vmatprep.mubr.f32.mxu0 0.0
    %191 = vmatmul.mubr.f32.gmra.mrb[0].mxu0 %v57
    %v192 = vpop.f32.mrb[0].mxu0
    %v193 = vadd.f32 0.0, %v192
    %v194 = vpop.f32.mrb[0].mxu0
    %v195 = vadd.f32 0.0, %v194
    %196 = vmatprep.mubr.f32.mxu0 0.0
    %197 = vmatmul.mubr.f32.gmra.mrb[0].mxu0 %v58
    %v198 = vpop.f32.mrb[0].mxu0
    %v199 = vadd.f32 0.0, %v198
    %v200 = vpop.f32.mrb[0].mxu0
    %v201 = vadd.f32 0.0, %v200
    %202 = vmatprep.mubr.f32.mxu0 0.0
    %203 = vmatmul.mubr.f32.gmra.mrb[0].mxu0 %v59
    %v204 = vpop.f32.mrb[0].mxu0
    %v205 = vadd.f32 0.0, %v204
    %v206 = vpop.f32.mrb[0].mxu0
    %v207 = vadd.f32 0.0, %v206
    %208 = vmatprep.mubr.f32.mxu0 0.0
    %209 = vmatmul.mubr.f32.gmra.mrb[0].mxu0 %v60
    %v210 = vpop.f32.mrb[0].mxu0
    %v211 = vadd.f32 0.0, %v210
    %v212 = vpop.f32.mrb[0].mxu0
    %v213 = vadd.f32 0.0, %v212
    %214 = vmatprep.mubr.f32.mxu0 0.0
    %215 = vmatmul.mubr.f32.gmra.mrb[0].mxu0 %v61
    %v216 = vpop.f32.mrb[0].mxu0
    %v217 = vadd.f32 0.0, %v216
    %v218 = vpop.f32.mrb[0].mxu0
    %v219 = vadd.f32 0.0, %v218
    %220 = vmatprep.mubr.f32.mxu0 0.0
    %221 = vmatmul.mubr.f32.gmra.mrb[0].mxu0 %v62
    %v222 = vpop.f32.mrb[0].mxu0
    %v223 = vadd.f32 0.0, %v222
    %v224 = vpop.f32.mrb[0].mxu0
    %v225 = vadd.f32 0.0, %v224
    %226 = vmatprep.mubr.f32.mxu0 0.0
    %227 = vmatmul.mubr.f32.gmra.mrb[0].mxu0 %v63
    %v228 = vpop.f32.mrb[0].mxu0
    %v229 = vadd.f32 0.0, %v228
    %v230 = vpop.f32.mrb[0].mxu0
    %v231 = vadd.f32 0.0, %v230
    %232 = vmatprep.mubr.f32.mxu0 0.0
    %233 = vmatmul.mubr.f32.gmra.mrb[0].mxu0 %v64
    %v234 = vpop.f32.mrb[0].mxu0
    %v235 = vadd.f32 0.0, %v234
    %v236 = vpop.f32.mrb[0].mxu0
    %v237 = vadd.f32 0.0, %v236
    %238 = vmatprep.mubr.f32.mxu0 0.0
    %239 = vmatmul.mubr.f32.gmra.mrb[0].mxu0 %v65
    %v240 = vpop.f32.mrb[0].mxu0
    %v241 = vadd.f32 0.0, %v240
    %v242 = vpop.f32.mrb[0].mxu0
    %v243 = vadd.f32 0.0, %v242
    %244 = vmatprep.mubr.f32.mxu0 0.0
    %245 = vmatmul.mubr.f32.gmra.mrb[0].mxu0 %v66
    %v246 = vpop.f32.mrb[0].mxu0
    %v247 = vadd.f32 0.0, %v246
    %v248 = vpop.f32.mrb[0].mxu0
    %v249 = vadd.f32 0.0, %v248
    %250 = vmatprep.mubr.f32.mxu0 0.0
    %251 = vmatmul.mubr.f32.gmra.mrb[0].mxu0 %v67
    %v252 = vpop.f32.mrb[0].mxu0
    %v253 = vadd.f32 0.0, %v252
    %v254 = vpop.f32.mrb[0].mxu0
    %v255 = vadd.f32 0.0, %v254
    %256 = vmatprep.mubr.f32.mxu0 0.0
    %257 = vmatmul.mubr.f32.gmra.mrb[0].mxu0 %v68
    %v258 = vpop.f32.mrb[0].mxu0
    %v259 = vadd.f32 0.0, %v258
    %v260 = vpop.f32.mrb[0].mxu0
    %v261 = vadd.f32 0.0, %v260
    %262 = vmatprep.mubr.f32.mxu0 0.0
    %263 = vmatmul.mubr.f32.gmra.mrb[0].mxu0 %v69
    %v264 = vpop.f32.mrb[0].mxu0
    %v265 = vadd.f32 0.0, %v264
    %v266 = vpop.f32.mrb[0].mxu0
    %v267 = vadd.f32 0.0, %v266
    %268 = vmatprep.mubr.f32.mxu0 0.0
    %269 = vmatmul.mubr.f32.gmra.mrb[0].mxu0 %v70
    %v270 = vpop.f32.mrb[0].mxu0
    %v271 = vadd.f32 0.0, %v270
    %v272 = vpop.f32.mrb[0].mxu0
    %v273 = vadd.f32 0.0, %v272
    %274 = vmatprep.mubr.f32.mxu0 0.0
    %275 = vmatmul.mubr.f32.gmra.mrb[0].mxu0 %v71
    %v276 = vpop.f32.mrb[0].mxu0
    %v277 = vadd.f32 0.0, %v276
    %v278 = vpop.f32.mrb[0].mxu0
    %v279 = vadd.f32 0.0, %v278
    %280 = vmatprep.mubr.f32.mxu0 0.0
    %281 = vmatmul.mubr.f32.gmra.mrb[0].mxu0 %v72
    %v282 = vpop.f32.mrb[0].mxu0
    %v283 = vadd.f32 0.0, %v282
    %v284 = vpop.f32.mrb[0].mxu0
    %v285 = vadd.f32 0.0, %v284
    %286 = vmatprep.mubr.f32.mxu0 0.0
    %287 = vmatmul.mubr.f32.gmra.mrb[0].mxu0 %v73
    %v288 = vpop.f32.mrb[0].mxu0
    %v289 = vadd.f32 0.0, %v288
    %v290 = vpop.f32.mrb[0].mxu0
    %v291 = vadd.f32 0.0, %v290
    %292 = vmatprep.mubr.f32.mxu0 0.0
    %293 = vmatmul.mubr.f32.gmra.mrb[0].mxu0 %v74
    %v294 = vpop.f32.mrb[0].mxu0
    %v295 = vadd.f32 0.0, %v294
    %v296 = vpop.f32.mrb[0].mxu0
    %v297 = vadd.f32 0.0, %v296
    %298 = vmatprep.mubr.f32.mxu0 0.0
    %299 = vmatmul.mubr.f32.gmra.mrb[0].mxu0 %v75
    %v300 = vpop.f32.mrb[0].mxu0
    %v301 = vadd.f32 0.0, %v300
    %v302 = vpop.f32.mrb[0].mxu0
    %v303 = vadd.f32 0.0, %v302
    %304 = vmatprep.mubr.f32.mxu0 0.0
    %305 = vmatmul.mubr.f32.gmra.mrb[0].mxu0 %v76
    %v306 = vpop.f32.mrb[0].mxu0
    %v307 = vadd.f32 0.0, %v306
    %v308 = vpop.f32.mrb[0].mxu0
    %v309 = vadd.f32 0.0, %v308
    %310 = vmatprep.mubr.f32.mxu0 0.0
    %311 = vmatmul.mubr.f32.gmra.mrb[0].mxu0 %v77
    %v312 = vpop.f32.mrb[0].mxu0
    %v313 = vadd.f32 0.0, %v312
    %v314 = vpop.f32.mrb[0].mxu0
    %v315 = vadd.f32 0.0, %v314
    %316 = vmatprep.mubr.f32.mxu0 0.0
    %317 = vmatmul.mubr.f32.gmra.mrb[0].mxu0 %v78
    %v318 = vpop.f32.mrb[0].mxu0
    %v319 = vadd.f32 0.0, %v318
    %v320 = vpop.f32.mrb[0].mxu0
    %v321 = vadd.f32 0.0, %v320
    %322 = vmatprep.mubr.f32.mxu0 0.0
    %323 = vmatmul.mubr.f32.gmra.mrb[0].mxu0 %v79
    %v324 = vpop.f32.mrb[0].mxu0
    %v325 = vadd.f32 0.0, %v324
    %v326 = vpop.f32.mrb[0].mxu0
    %v327 = vadd.f32 0.0, %v326
    %328 = vmatprep.mubr.f32.mxu0 0.0
    %329 = vmatmul.mubr.f32.gmra.mrb[0].mxu0 %v80
    %v330 = vpop.f32.mrb[0].mxu0
    %v331 = vadd.f32 0.0, %v330
    %v332 = vpop.f32.mrb[0].mxu0
    %v333 = vadd.f32 0.0, %v332
    %334 = vmatprep.mubr.f32.mxu0 0.0
    %335 = vmatmul.mubr.f32.gmra.mrb[0].mxu0 %v81
    %v336 = vpop.f32.mrb[0].mxu0
    %v337 = vadd.f32 0.0, %v336
    %v338 = vpop.f32.mrb[0].mxu0
    %v339 = vadd.f32 0.0, %v338
    %340 = vmatprep.mubr.f32.mxu0 0.0
    %341 = vmatmul.mubr.f32.gmra.mrb[0].mxu0 %v82
    %v342 = vpop.f32.mrb[0].mxu0
    %v343 = vadd.f32 0.0, %v342
    %v344 = vpop.f32.mrb[0].mxu0
    %v345 = vadd.f32 0.0, %v344
    %346 = vmatprep.mubr.f32.mxu0 0.0
    %347 = vmatmul.mubr.f32.gmra.mrb[0].mxu0 %v83
    %v348 = vpop.f32.mrb[0].mxu0
    %v349 = vadd.f32 0.0, %v348
    %v350 = vpop.f32.mrb[0].mxu0
    %v351 = vadd.f32 0.0, %v350
    %352 = vmatprep.mubr.f32.mxu0 0.0
    %353 = vmatmul.mubr.f32.gmra.mrb[0].mxu0 %v84
    %v354 = vpop.f32.mrb[0].mxu0
    %v355 = vadd.f32 0.0, %v354
    %v356 = vpop.f32.mrb[0].mxu0
    %v357 = vadd.f32 0.0, %v356
    %358 = vmatprep.mubr.f32.mxu0 0.0
    %359 = vmatmul.mubr.f32.gmra.mrb[0].mxu0 %v85
    %v360 = vpop.f32.mrb[0].mxu0
    %v361 = vadd.f32 0.0, %v360
    %v362 = vpop.f32.mrb[0].mxu0
    %v363 = vadd.f32 0.0, %v362
    %364 = vmatprep.mubr.f32.mxu0 0.0
    %365 = vmatmul.mubr.f32.gmra.mrb[0].mxu0 %v86
    %v366 = vpop.f32.mrb[0].mxu0
    %v367 = vadd.f32 0.0, %v366
    %v368 = vpop.f32.mrb[0].mxu0
    %v369 = vadd.f32 0.0, %v368
    %370 = vmatprep.mubr.f32.mxu0 0.0
    %371 = vmatmul.mubr.f32.gmra.mrb[0].mxu0 %v87
    %v372 = vpop.f32.mrb[0].mxu0
    %v373 = vadd.f32 0.0, %v372
    %v374 = vpop.f32.mrb[0].mxu0
    %v375 = vadd.f32 0.0, %v374
    %376 = vdwg.mxu0
    %v377 = vld [vmem:[#allocation7] sm:$0xff]
    %v378 = vld [vmem:[#allocation7 + $0x8] sm:$0xff]
    %v379 = vld [vmem:[#allocation7 + $0x10] sm:$0xff]
    %v380 = vld [vmem:[#allocation7 + $0x18] sm:$0xff]
    %v381 = vld [vmem:[#allocation7 + $0x20] sm:$0xff]
    %v382 = vld [vmem:[#allocation7 + $0x28] sm:$0xff]
    %v383 = vld [vmem:[#allocation7 + $0x30] sm:$0xff]
    %v384 = vld [vmem:[#allocation7 + $0x38] sm:$0xff]
    %v385 = vld [vmem:[#allocation7 + $0x40] sm:$0xff]
    %v386 = vld [vmem:[#allocation7 + $0x48] sm:$0xff]
    %v387 = vld [vmem:[#allocation7 + $0x50] sm:$0xff]
    %v388 = vld [vmem:[#allocation7 + $0x58] sm:$0xff]
    %v389 = vld [vmem:[#allocation7 + $0x60] sm:$0xff]
    %v390 = vld [vmem:[#allocation7 + $0x68] sm:$0xff]
    %v391 = vld [vmem:[#allocation7 + $0x70] sm:$0xff]
    %v392 = vld [vmem:[#allocation7 + $0x78] sm:$0xff]
    %v393 = vunpack.c.0.s8 %v377
    %v394 = vunpack.c.0.s8 %v378
    %v395 = vunpack.c.1.s8 %v377
    %v396 = vunpack.c.1.s8 %v378
    %v397 = vunpack.c.2.s8 %v377
    %v398 = vunpack.c.2.s8 %v378
    %v399 = vunpack.c.3.s8 %v377
    %v400 = vunpack.c.3.s8 %v378
    %v401 = vunpack.c.0.s8 %v379
    %v402 = vunpack.c.0.s8 %v380
    %v403 = vunpack.c.1.s8 %v379
    %v404 = vunpack.c.1.s8 %v380
    %v405 = vunpack.c.2.s8 %v379
    %v406 = vunpack.c.2.s8 %v380
    %v407 = vunpack.c.3.s8 %v379
    %v408 = vunpack.c.3.s8 %v380
    %v409 = vunpack.c.0.s8 %v381
    %v410 = vunpack.c.0.s8 %v382
    %v411 = vunpack.c.1.s8 %v381
    %v412 = vunpack.c.1.s8 %v382
    %v413 = vunpack.c.2.s8 %v381
    %v414 = vunpack.c.2.s8 %v382
    %v415 = vunpack.c.3.s8 %v381
    %v416 = vunpack.c.3.s8 %v382
    %v417 = vunpack.c.0.s8 %v383
    %v418 = vunpack.c.0.s8 %v384
    %v419 = vunpack.c.1.s8 %v383
    %v420 = vunpack.c.1.s8 %v384
    %v421 = vunpack.c.2.s8 %v383
    %v422 = vunpack.c.2.s8 %v384
    %v423 = vunpack.c.3.s8 %v383
    %v424 = vunpack.c.3.s8 %v384
    %v425 = vunpack.c.0.s8 %v385
    %v426 = vunpack.c.0.s8 %v386
    %v427 = vunpack.c.1.s8 %v385
    %v428 = vunpack.c.1.s8 %v386
    %v429 = vunpack.c.2.s8 %v385
    %v430 = vunpack.c.2.s8 %v386
    %v431 = vunpack.c.3.s8 %v385
    %v432 = vunpack.c.3.s8 %v386
    %v433 = vunpack.c.0.s8 %v387
    %v434 = vunpack.c.0.s8 %v388
    %v435 = vunpack.c.1.s8 %v387
    %v436 = vunpack.c.1.s8 %v388
    %v437 = vunpack.c.2.s8 %v387
    %v438 = vunpack.c.2.s8 %v388
    %v439 = vunpack.c.3.s8 %v387
    %v440 = vunpack.c.3.s8 %v388
    %v441 = vunpack.c.0.s8 %v389
    %v442 = vunpack.c.0.s8 %v390
    %v443 = vunpack.c.1.s8 %v389
    %v444 = vunpack.c.1.s8 %v390
    %v445 = vunpack.c.2.s8 %v389
    %v446 = vunpack.c.2.s8 %v390
    %v447 = vunpack.c.3.s8 %v389
    %v448 = vunpack.c.3.s8 %v390
    %v449 = vunpack.c.0.s8 %v391
    %v450 = vunpack.c.0.s8 %v392
    %v451 = vunpack.c.1.s8 %v391
    %v452 = vunpack.c.1.s8 %v392
    %v453 = vunpack.c.2.s8 %v391
    %v454 = vunpack.c.2.s8 %v392
    %v455 = vunpack.c.3.s8 %v391
    %v456 = vunpack.c.3.s8 %v392
    %v457 = vcvt.s32.f32 %v393
    %v458 = vcvt.s32.f32 %v394
    %v459 = vcvt.s32.f32 %v395
    %v460 = vcvt.s32.f32 %v396
    %v461 = vcvt.s32.f32 %v397
    %v462 = vcvt.s32.f32 %v398
    %v463 = vcvt.s32.f32 %v399
    %v464 = vcvt.s32.f32 %v400
    %v465 = vcvt.s32.f32 %v401
    %v466 = vcvt.s32.f32 %v402
    %v467 = vcvt.s32.f32 %v403
    %v468 = vcvt.s32.f32 %v404
    %v469 = vcvt.s32.f32 %v405
    %v470 = vcvt.s32.f32 %v406
    %v471 = vcvt.s32.f32 %v407
    %v472 = vcvt.s32.f32 %v408
    %v473 = vcvt.s32.f32 %v409
    %v474 = vcvt.s32.f32 %v410
    %v475 = vcvt.s32.f32 %v411
    %v476 = vcvt.s32.f32 %v412
    %v477 = vcvt.s32.f32 %v413
    %v478 = vcvt.s32.f32 %v414
    %v479 = vcvt.s32.f32 %v415
    %v480 = vcvt.s32.f32 %v416
    %v481 = vcvt.s32.f32 %v417
    %v482 = vcvt.s32.f32 %v418
    %v483 = vcvt.s32.f32 %v419
    %v484 = vcvt.s32.f32 %v420
    %v485 = vcvt.s32.f32 %v421
    %v486 = vcvt.s32.f32 %v422
    %v487 = vcvt.s32.f32 %v423
    %v488 = vcvt.s32.f32 %v424
    %v489 = vcvt.s32.f32 %v425
    %v490 = vcvt.s32.f32 %v426
    %v491 = vcvt.s32.f32 %v427
    %v492 = vcvt.s32.f32 %v428
    %v493 = vcvt.s32.f32 %v429
    %v494 = vcvt.s32.f32 %v430
    %v495 = vcvt.s32.f32 %v431
    %v496 = vcvt.s32.f32 %v432
    %v497 = vcvt.s32.f32 %v433
    %v498 = vcvt.s32.f32 %v434
    %v499 = vcvt.s32.f32 %v435
    %v500 = vcvt.s32.f32 %v436
    %v501 = vcvt.s32.f32 %v437
    %v502 = vcvt.s32.f32 %v438
    %v503 = vcvt.s32.f32 %v439
    %v504 = vcvt.s32.f32 %v440
    %v505 = vcvt.s32.f32 %v441
    %v506 = vcvt.s32.f32 %v442
    %v507 = vcvt.s32.f32 %v443
    %v508 = vcvt.s32.f32 %v444
    %v509 = vcvt.s32.f32 %v445
    %v510 = vcvt.s32.f32 %v446
    %v511 = vcvt.s32.f32 %v447
    %v512 = vcvt.s32.f32 %v448
    %v513 = vcvt.s32.f32 %v449
    %v514 = vcvt.s32.f32 %v450
    %v515 = vcvt.s32.f32 %v451
    %v516 = vcvt.s32.f32 %v452
    %v517 = vcvt.s32.f32 %v453
    %v518 = vcvt.s32.f32 %v454
    %v519 = vcvt.s32.f32 %v455
    %v520 = vcvt.s32.f32 %v456
    %v521 = vmul.f32 %v187, %v457
    %v522 = vmul.f32 %v189, %v458
    %v523 = vmul.f32 %v193, %v459
    %v524 = vmul.f32 %v195, %v460
    %v525 = vmul.f32 %v199, %v461
    %v526 = vmul.f32 %v201, %v462
    %v527 = vmul.f32 %v205, %v463
    %v528 = vmul.f32 %v207, %v464
    %v529 = vmul.f32 %v211, %v465
    %v530 = vmul.f32 %v213, %v466
    %v531 = vmul.f32 %v217, %v467
    %v532 = vmul.f32 %v219, %v468
    %v533 = vmul.f32 %v223, %v469
    %v534 = vmul.f32 %v225, %v470
    %v535 = vmul.f32 %v229, %v471
    %v536 = vmul.f32 %v231, %v472
    %v537 = vmul.f32 %v235, %v473
    %v538 = vmul.f32 %v237, %v474
    %v539 = vmul.f32 %v241, %v475
    %v540 = vmul.f32 %v243, %v476
    %v541 = vmul.f32 %v247, %v477
    %v542 = vmul.f32 %v249, %v478
    %v543 = vmul.f32 %v253, %v479
    %v544 = vmul.f32 %v255, %v480
    %v545 = vmul.f32 %v259, %v481
    %v546 = vmul.f32 %v261, %v482
    %v547 = vmul.f32 %v265, %v483
    %v548 = vmul.f32 %v267, %v484
    %v549 = vmul.f32 %v271, %v485
    %v550 = vmul.f32 %v273, %v486
    %v551 = vmul.f32 %v277, %v487
    %v552 = vmul.f32 %v279, %v488
    %v553 = vmul.f32 %v283, %v489
    %v554 = vmul.f32 %v285, %v490
    %v555 = vmul.f32 %v289, %v491
    %v556 = vmul.f32 %v291, %v492
    %v557 = vmul.f32 %v295, %v493
    %v558 = vmul.f32 %v297, %v494
    %v559 = vmul.f32 %v301, %v495
    %v560 = vmul.f32 %v303, %v496
    %v561 = vmul.f32 %v307, %v497
    %v562 = vmul.f32 %v309, %v498
    %v563 = vmul.f32 %v313, %v499
    %v564 = vmul.f32 %v315, %v500
    %v565 = vmul.f32 %v319, %v501
    %v566 = vmul.f32 %v321, %v502
    %v567 = vmul.f32 %v325, %v503
    %v568 = vmul.f32 %v327, %v504
    %v569 = vmul.f32 %v331, %v505
    %v570 = vmul.f32 %v333, %v506
    %v571 = vmul.f32 %v337, %v507
    %v572 = vmul.f32 %v339, %v508
    %v573 = vmul.f32 %v343, %v509
    %v574 = vmul.f32 %v345, %v510
    %v575 = vmul.f32 %v349, %v511
    %v576 = vmul.f32 %v351, %v512
    %v577 = vmul.f32 %v355, %v513
    %v578 = vmul.f32 %v357, %v514
    %v579 = vmul.f32 %v361, %v515
    %v580 = vmul.f32 %v363, %v516
    %v581 = vmul.f32 %v367, %v517
    %v582 = vmul.f32 %v369, %v518
    %v583 = vmul.f32 %v373, %v519
    %v584 = vmul.f32 %v375, %v520
    %v585 = vadd.f32 %v521, %v522
    %v586 = vadd.f32 %v585, %v523
    %v587 = vadd.f32 %v586, %v524
    %v588 = vadd.f32 %v587, %v525
    %v589 = vadd.f32 %v588, %v526
    %v590 = vadd.f32 %v589, %v527
    %v591 = vadd.f32 %v590, %v528
    %v592 = vadd.f32 %v591, %v529
    %v593 = vadd.f32 %v592, %v530
    %v594 = vadd.f32 %v593, %v531
    %v595 = vadd.f32 %v594, %v532
    %v596 = vadd.f32 %v595, %v533
    %v597 = vadd.f32 %v596, %v534
    %v598 = vadd.f32 %v597, %v535
    %v599 = vadd.f32 %v598, %v536
    %v600 = vadd.f32 %v599, %v537
    %v601 = vadd.f32 %v600, %v538
    %v602 = vadd.f32 %v601, %v539
    %v603 = vadd.f32 %v602, %v540
    %v604 = vadd.f32 %v603, %v541
    %v605 = vadd.f32 %v604, %v542
    %v606 = vadd.f32 %v605, %v543
    %v607 = vadd.f32 %v606, %v544
    %v608 = vadd.f32 %v607, %v545
    %v609 = vadd.f32 %v608, %v546
    %v610 = vadd.f32 %v609, %v547
    %v611 = vadd.f32 %v610, %v548
    %v612 = vadd.f32 %v611, %v549
    %v613 = vadd.f32 %v612, %v550
    %v614 = vadd.f32 %v613, %v551
    %v615 = vadd.f32 %v614, %v552
    %v616 = vadd.f32 %v615, %v553
    %v617 = vadd.f32 %v616, %v554
    %v618 = vadd.f32 %v617, %v555
    %v619 = vadd.f32 %v618, %v556
    %v620 = vadd.f32 %v619, %v557
    %v621 = vadd.f32 %v620, %v558
    %v622 = vadd.f32 %v621, %v559
    %v623 = vadd.f32 %v622, %v560
    %v624 = vadd.f32 %v623, %v561
    %v625 = vadd.f32 %v624, %v562
    %v626 = vadd.f32 %v625, %v563
    %v627 = vadd.f32 %v626, %v564
    %v628 = vadd.f32 %v627, %v565
    %v629 = vadd.f32 %v628, %v566
    %v630 = vadd.f32 %v629, %v567
    %v631 = vadd.f32 %v630, %v568
    %v632 = vadd.f32 %v631, %v569
    %v633 = vadd.f32 %v632, %v570
    %v634 = vadd.f32 %v633, %v571
    %v635 = vadd.f32 %v634, %v572
    %v636 = vadd.f32 %v635, %v573
    %v637 = vadd.f32 %v636, %v574
    %v638 = vadd.f32 %v637, %v575
    %v639 = vadd.f32 %v638, %v576
    %v640 = vadd.f32 %v639, %v577
    %v641 = vadd.f32 %v640, %v578
    %v642 = vadd.f32 %v641, %v579
    %v643 = vadd.f32 %v642, %v580
    %v644 = vadd.f32 %v643, %v581
    %v645 = vadd.f32 %v644, %v582
    %v646 = vadd.f32 %v645, %v583
    %v647 = vadd.f32 %v646, %v584
    %648 = vadd.xlane.f32.xlu0 %v647
    %v649 = vpop.xlane.xlu0 %648
    %v650 = vrot.slane %v649, 4
    %v651 = vadd.f32 %v649, %v650
    %v652 = vrot.slane %v651, 2
    %v653 = vadd.f32 %v651, %v652
    %v654 = vrot.slane %v653, 1
    %v655 = vadd.f32 %v653, %v654
    %s656 = vtos %v655
    %v657 = vmul.f32 %v521, %v187
    %v658 = vmul.f32 %v522, %v189
    %v659 = vmul.f32 %v523, %v193
    %v660 = vmul.f32 %v524, %v195
    %v661 = vmul.f32 %v525, %v199
    %v662 = vmul.f32 %v526, %v201
    %v663 = vmul.f32 %v527, %v205
    %v664 = vmul.f32 %v528, %v207
    %v665 = vmul.f32 %v529, %v211
    %v666 = vmul.f32 %v530, %v213
    %v667 = vmul.f32 %v531, %v217
    %v668 = vmul.f32 %v532, %v219
    %v669 = vmul.f32 %v533, %v223
    %v670 = vmul.f32 %v534, %v225
    %v671 = vmul.f32 %v535, %v229
    %v672 = vmul.f32 %v536, %v231
    %v673 = vmul.f32 %v537, %v235
    %v674 = vmul.f32 %v538, %v237
    %v675 = vmul.f32 %v539, %v241
    %v676 = vmul.f32 %v540, %v243
    %v677 = vmul.f32 %v541, %v247
    %v678 = vmul.f32 %v542, %v249
    %v679 = vmul.f32 %v543, %v253
    %v680 = vmul.f32 %v544, %v255
    %v681 = vmul.f32 %v545, %v259
    %v682 = vmul.f32 %v546, %v261
    %v683 = vmul.f32 %v547, %v265
    %v684 = vmul.f32 %v548, %v267
    %v685 = vmul.f32 %v549, %v271
    %v686 = vmul.f32 %v550, %v273
    %v687 = vmul.f32 %v551, %v277
    %v688 = vmul.f32 %v552, %v279
    %v689 = vmul.f32 %v553, %v283
    %v690 = vmul.f32 %v554, %v285
    %v691 = vmul.f32 %v555, %v289
    %v692 = vmul.f32 %v556, %v291
    %v693 = vmul.f32 %v557, %v295
    %v694 = vmul.f32 %v558, %v297
    %v695 = vmul.f32 %v559, %v301
    %v696 = vmul.f32 %v560, %v303
    %v697 = vmul.f32 %v561, %v307
    %v698 = vmul.f32 %v562, %v309
    %v699 = vmul.f32 %v563, %v313
    %v700 = vmul.f32 %v564, %v315
    %v701 = vmul.f32 %v565, %v319
    %v702 = vmul.f32 %v566, %v321
    %v703 = vmul.f32 %v567, %v325
    %v704 = vmul.f32 %v568, %v327
    %v705 = vmul.f32 %v569, %v331
    %v706 = vmul.f32 %v570, %v333
    %v707 = vmul.f32 %v571, %v337
    %v708 = vmul.f32 %v572, %v339
    %v709 = vmul.f32 %v573, %v343
    %v710 = vmul.f32 %v574, %v345
    %v711 = vmul.f32 %v575, %v349
    %v712 = vmul.f32 %v576, %v351
    %v713 = vmul.f32 %v577, %v355
    %v714 = vmul.f32 %v578, %v357
    %v715 = vmul.f32 %v579, %v361
    %v716 = vmul.f32 %v580, %v363
    %v717 = vmul.f32 %v581, %v367
    %v718 = vmul.f32 %v582, %v369
    %v719 = vmul.f32 %v583, %v373
    %v720 = vmul.f32 %v584, %v375
    %v721 = vadd.f32 %v657, %v658
    %v722 = vadd.f32 %v721, %v659
    %v723 = vadd.f32 %v722, %v660
    %v724 = vadd.f32 %v723, %v661
    %v725 = vadd.f32 %v724, %v662
    %v726 = vadd.f32 %v725, %v663
    %v727 = vadd.f32 %v726, %v664
    %v728 = vadd.f32 %v727, %v665
    %v729 = vadd.f32 %v728, %v666
    %v730 = vadd.f32 %v729, %v667
    %v731 = vadd.f32 %v730, %v668
    %v732 = vadd.f32 %v731, %v669
    %v733 = vadd.f32 %v732, %v670
    %v734 = vadd.f32 %v733, %v671
    %v735 = vadd.f32 %v734, %v672
    %v736 = vadd.f32 %v735, %v673
    %v737 = vadd.f32 %v736, %v674
    %v738 = vadd.f32 %v737, %v675
    %v739 = vadd.f32 %v738, %v676
    %v740 = vadd.f32 %v739, %v677
    %v741 = vadd.f32 %v740, %v678
    %v742 = vadd.f32 %v741, %v679
    %v743 = vadd.f32 %v742, %v680
    %v744 = vadd.f32 %v743, %v681
    %v745 = vadd.f32 %v744, %v682
    %v746 = vadd.f32 %v745, %v683
    %v747 = vadd.f32 %v746, %v684
    %v748 = vadd.f32 %v747, %v685
    %v749 = vadd.f32 %v748, %v686
    %v750 = vadd.f32 %v749, %v687
    %v751 = vadd.f32 %v750, %v688
    %v752 = vadd.f32 %v751, %v689
    %v753 = vadd.f32 %v752, %v690
    %v754 = vadd.f32 %v753, %v691
    %v755 = vadd.f32 %v754, %v692
    %v756 = vadd.f32 %v755, %v693
    %v757 = vadd.f32 %v756, %v694
    %v758 = vadd.f32 %v757, %v695
    %v759 = vadd.f32 %v758, %v696
    %v760 = vadd.f32 %v759, %v697
    %v761 = vadd.f32 %v760, %v698
    %v762 = vadd.f32 %v761, %v699
    %v763 = vadd.f32 %v762, %v700
    %v764 = vadd.f32 %v763, %v701
    %v765 = vadd.f32 %v764, %v702
    %v766 = vadd.f32 %v765, %v703
    %v767 = vadd.f32 %v766, %v704
    %v768 = vadd.f32 %v767, %v705
    %v769 = vadd.f32 %v768, %v706
    %v770 = vadd.f32 %v769, %v707
    %v771 = vadd.f32 %v770, %v708
    %v772 = vadd.f32 %v771, %v709
    %v773 = vadd.f32 %v772, %v710
    %v774 = vadd.f32 %v773, %v711
    %v775 = vadd.f32 %v774, %v712
    %v776 = vadd.f32 %v775, %v713
    %v777 = vadd.f32 %v776, %v714
    %v778 = vadd.f32 %v777, %v715
    %v779 = vadd.f32 %v778, %v716
    %v780 = vadd.f32 %v779, %v717
    %v781 = vadd.f32 %v780, %v718
    %v782 = vadd.f32 %v781, %v719
    %v783 = vadd.f32 %v782, %v720
    %784 = vadd.xlane.f32.xlu0 %v783
    %v785 = vpop.xlane.xlu0 %784
    %v786 = vrot.slane %v785, 4
    %v787 = vadd.f32 %v785, %v786
    %v788 = vrot.slane %v787, 2
    %v789 = vadd.f32 %v787, %v788
    %v790 = vrot.slane %v789, 1
    %v791 = vadd.f32 %v789, %v790
    %s792 = vtos %v791
    %v793 = vlaneseq
    %v794 = vshrl.u32 %v793, 7
    %vm795 = vcmp.eq.s32.totalorder %v794, 0
    %vm796 = vcmp.eq.s32.totalorder %v794, 1
    %v797 = vstv %s792
    %v798 = vsel %vm796, %v797, 0.0
    %v799 = vstv %s656
    %v800 = vsel %vm795, %v799, %v798
    %801 = vst [vmem:[#allocation8] sm:$0xff] %v800
    // Predicated region
    $region26: #{gcs_layer_pallas.4} parent=1 // pred_check
      _
    $region27: #{gcs_layer_pallas.4} parent=1 // pred_check_branch
      %803 = sbr.rel (0) target = $region29
    $region28: #{gcs_layer_pallas.4} parent=1 // pred_region
      %s805 = ssub.s32 128, 128
      %806 = vsyncadd [#allocation4], %s805
      %s808 = sshll.u32 [#allocation8], 4
      %s809 = int_to_ptr.vmem [resolvable:$true] %s808
      %811 = dma.vmem_to_hbm [thread:$0]  %s809, 128, %s3, [#allocation4]
    $region29: #{gcs_layer_pallas.4} parent=1 // pred_fallthru
      _
    // Predicated region
    $region30: #{gcs_layer_pallas.4} parent=1 // pred_check
      _
    $region31: #{gcs_layer_pallas.4} parent=1 // pred_check_branch
      %813 = sbr.rel (0) target = $region33
    $region32: #{gcs_layer_pallas.4} parent=1 // pred_region
      %814 = dma.done [#allocation4], 128
    $region33: #{gcs_layer_pallas.4} parent=1 // pred_fallthru
      _
    %815 = vsyncpa [#allocation3], 1
    %816 = vsyncpa [#allocation6], 1
    %817 = vsyncpa [#allocation4], 1

// kernel: gcs_layer_pallas.3
$region0: #{gcs_layer_pallas.3}
  #allocation0 [shape = 'u32[]', space=smem, size = 0x4, offset = 0x4, fixed_abs, tag = 'smem constant byte address 0x4 - core index']
  #allocation1 [shape = 'u32[144,128]{1,0:T(1,128)}', space=vmem, size = 0x12000, scoped, tag = 'internal scratch']
  %s0 = inlined_call_operand.hbm [shape: f32[256,128], index: 0, kind: input, shape index: {}]
  %s1 = inlined_call_operand.hbm [shape: f32[128,384], index: 1, kind: input, shape index: {}]
  %s2 = inlined_call_operand.hbm [shape: f32[1,384], index: 2, kind: input, shape index: {}]
  %s3 = inlined_call_operand.hbm [shape: f32[256,128], index: 3, kind: output, shape index: {0}]
  %s4 = inlined_call_operand.hbm [shape: f32[256,128], index: 4, kind: output, shape index: {1}]
  %s5 = inlined_call_operand.hbm [shape: f32[256,128], index: 5, kind: output, shape index: {2}]
  %6 = xla_tuple %s3, %s4, %s5
  %s7 = sld [smem:[#allocation0]]
  $region50: #{gcs_layer_pallas.3} parent=0
    _
  %s9 = ssub.s32 1, %s7
  %s10 = scalar_select 0, %s9, %s7
  $region1: #{gcs_layer_pallas.3} parent=0
    #allocation2 [shape = 'u8[131072]{0}', space=vmem, size = 0x20000, scoped, tag = 'input window, operand 0, single buffered']
    #allocation3 [shape = 's32[1]{0}', space=sflag, size = 0x4, scoped, tag = 'scoped memory for gcs_layer_pallas.3']
    #allocation4 [shape = 's32[1]{0}', space=sflag, size = 0x4, scoped, tag = 'scoped memory for gcs_layer_pallas.3']
    #allocation5 [shape = 'u8[196608]{0}', space=vmem, size = 0x30000, scoped, tag = 'input window, operand 1, single buffered']
    #allocation6 [shape = 's32[1]{0}', space=sflag, size = 0x4, scoped, tag = 'scoped memory for gcs_layer_pallas.3']
    #allocation7 [shape = 'u8[1536]{0}', space=vmem, size = 0x800, scoped, tag = 'input window, operand 2, single buffered']
    #allocation8 [shape = 'u8[131072]{0}', space=vmem, size = 0x20000, scoped, tag = 'output window, operand 0, single buffered']
    #allocation9 [shape = 'u8[131072]{0}', space=vmem, size = 0x20000, scoped, tag = 'output window, operand 1, single buffered']
    #allocation10 [shape = 's32[1]{0}', space=sflag, size = 0x4, scoped, tag = 'scoped memory for gcs_layer_pallas.3']
    #allocation11 [shape = 'u8[131072]{0}', space=vmem, size = 0x20000, scoped, tag = 'output window, operand 2, single buffered']
    %11 = vsyncpa [#allocation3], 0
    %12 = vsyncpa [#allocation6], 0
    %13 = vsyncpa [#allocation4], 0
    %14 = vsyncpa [#allocation10], 0
    // Predicated region
    $region2: #{gcs_layer_pallas.3} parent=1 // pred_check
      _
    $region3: #{gcs_layer_pallas.3} parent=1 // pred_check_branch
      %16 = sbr.rel (0) target = $region5
    $region4: #{gcs_layer_pallas.3} parent=1 // pred_region
      %s18 = ssub.s32 4096, 4096
      %19 = vsyncadd [#allocation3], %s18
      %s20 = sshll.u32 [#allocation2], 4
      %s21 = int_to_ptr.vmem [resolvable:$true] %s20
      %26 = dma.hbm_to_vmem [thread:$0]  %s0, 4096, %s21, [#allocation3], 128, 128, 8
    $region5: #{gcs_layer_pallas.3} parent=1 // pred_fallthru
      _
    // Predicated region
    $region6: #{gcs_layer_pallas.3} parent=1 // pred_check
      _
    $region7: #{gcs_layer_pallas.3} parent=1 // pred_check_branch
      %28 = sbr.rel (0) target = $region9
    $region8: #{gcs_layer_pallas.3} parent=1 // pred_region
      %s30 = ssub.s32 6144, 6144
      %31 = vsyncadd [#allocation6], %s30
      %s32 = sshll.u32 [#allocation5], 4
      %s33 = int_to_ptr.vmem [resolvable:$true] %s32
      %38 = dma.hbm_to_vmem [thread:$0]  %s1, 6144, %s33, [#allocation6], 384, 384, 24
    $region9: #{gcs_layer_pallas.3} parent=1 // pred_fallthru
      _
    // Predicated region
    $region10: #{gcs_layer_pallas.3} parent=1 // pred_check
      _
    $region11: #{gcs_layer_pallas.3} parent=1 // pred_check_branch
      %40 = sbr.rel (0) target = $region13
    $region12: #{gcs_layer_pallas.3} parent=1 // pred_region
      %s42 = ssub.s32 48, 48
      %43 = vsyncadd [#allocation6], %s42
      %s45 = sshll.u32 [#allocation7], 4
      %s46 = int_to_ptr.vmem [resolvable:$true] %s45
      %48 = dma.hbm_to_vmem [thread:$0]  %s2, 48, %s46, [#allocation6]
    $region13: #{gcs_layer_pallas.3} parent=1 // pred_fallthru
      _
    // Predicated region
    $region14: #{gcs_layer_pallas.3} parent=1 // pred_check
      _
    $region15: #{gcs_layer_pallas.3} parent=1 // pred_check_branch
      %50 = sbr.rel (0) target = $region17
    $region16: #{gcs_layer_pallas.3} parent=1 // pred_region
      %51 = dma.done [#allocation3], 4096
    $region17: #{gcs_layer_pallas.3} parent=1 // pred_fallthru
      _
    // Predicated region
    $region18: #{gcs_layer_pallas.3} parent=1 // pred_check
      _
    $region19: #{gcs_layer_pallas.3} parent=1 // pred_check_branch
      %53 = sbr.rel (0) target = $region21
    $region20: #{gcs_layer_pallas.3} parent=1 // pred_region
      %54 = dma.done [#allocation6], 6144
    $region21: #{gcs_layer_pallas.3} parent=1 // pred_fallthru
      _
    // Predicated region
    $region22: #{gcs_layer_pallas.3} parent=1 // pred_check
      _
    $region23: #{gcs_layer_pallas.3} parent=1 // pred_check_branch
      %56 = sbr.rel (0) target = $region25
    $region24: #{gcs_layer_pallas.3} parent=1 // pred_region
      %57 = dma.done [#allocation6], 48
    $region25: #{gcs_layer_pallas.3} parent=1 // pred_fallthru
      _
    %v58 = vld [vmem:[#allocation2] sm:$0xff]
    %v59 = vld [vmem:[#allocation2 + $0x8] sm:$0xff]
    %v60 = vld [vmem:[#allocation2 + $0x10] sm:$0xff]
    %v61 = vld [vmem:[#allocation2 + $0x18] sm:$0xff]
    %v62 = vld [vmem:[#allocation2 + $0x20] sm:$0xff]
    %v63 = vld [vmem:[#allocation2 + $0x28] sm:$0xff]
    %v64 = vld [vmem:[#allocation2 + $0x30] sm:$0xff]
    %v65 = vld [vmem:[#allocation2 + $0x38] sm:$0xff]
    %v66 = vld [vmem:[#allocation2 + $0x40] sm:$0xff]
    %v67 = vld [vmem:[#allocation2 + $0x48] sm:$0xff]
    %v68 = vld [vmem:[#allocation2 + $0x50] sm:$0xff]
    %v69 = vld [vmem:[#allocation2 + $0x58] sm:$0xff]
    %v70 = vld [vmem:[#allocation2 + $0x60] sm:$0xff]
    %v71 = vld [vmem:[#allocation2 + $0x68] sm:$0xff]
    %v72 = vld [vmem:[#allocation2 + $0x70] sm:$0xff]
    %v73 = vld [vmem:[#allocation2 + $0x78] sm:$0xff]
    %v74 = vld [vmem:[#allocation2 + $0x80] sm:$0xff]
    %v75 = vld [vmem:[#allocation2 + $0x88] sm:$0xff]
    %v76 = vld [vmem:[#allocation2 + $0x90] sm:$0xff]
    %v77 = vld [vmem:[#allocation2 + $0x98] sm:$0xff]
    %v78 = vld [vmem:[#allocation2 + $0xa0] sm:$0xff]
    %v79 = vld [vmem:[#allocation2 + $0xa8] sm:$0xff]
    %v80 = vld [vmem:[#allocation2 + $0xb0] sm:$0xff]
    %v81 = vld [vmem:[#allocation2 + $0xb8] sm:$0xff]
    %v82 = vld [vmem:[#allocation2 + $0xc0] sm:$0xff]
    %v83 = vld [vmem:[#allocation2 + $0xc8] sm:$0xff]
    %v84 = vld [vmem:[#allocation2 + $0xd0] sm:$0xff]
    %v85 = vld [vmem:[#allocation2 + $0xd8] sm:$0xff]
    %v86 = vld [vmem:[#allocation2 + $0xe0] sm:$0xff]
    %v87 = vld [vmem:[#allocation2 + $0xe8] sm:$0xff]
    %v88 = vld [vmem:[#allocation2 + $0xf0] sm:$0xff]
    %v89 = vld [vmem:[#allocation2 + $0xf8] sm:$0xff]
    %v90 = vld [vmem:[#allocation5] sm:$0xff]
    %v91 = vld [vmem:[#allocation5 + $0x8] sm:$0xff]
    %v92 = vld [vmem:[#allocation5 + $0x10] sm:$0xff]
    %v93 = vld [vmem:[#allocation5 + $0x18] sm:$0xff]
    %v94 = vld [vmem:[#allocation5 + $0x20] sm:$0xff]
    %v95 = vld [vmem:[#allocation5 + $0x28] sm:$0xff]
    %v96 = vld [vmem:[#allocation5 + $0x30] sm:$0xff]
    %v97 = vld [vmem:[#allocation5 + $0x38] sm:$0xff]
    %v98 = vld [vmem:[#allocation5 + $0x40] sm:$0xff]
    %v99 = vld [vmem:[#allocation5 + $0x48] sm:$0xff]
    %v100 = vld [vmem:[#allocation5 + $0x50] sm:$0xff]
    %v101 = vld [vmem:[#allocation5 + $0x58] sm:$0xff]
    %v102 = vld [vmem:[#allocation5 + $0x60] sm:$0xff]
    %v103 = vld [vmem:[#allocation5 + $0x68] sm:$0xff]
    %v104 = vld [vmem:[#allocation5 + $0x70] sm:$0xff]
    %v105 = vld [vmem:[#allocation5 + $0x78] sm:$0xff]
    %v106 = vld [vmem:[#allocation5 + $0x80] sm:$0xff]
    %v107 = vld [vmem:[#allocation5 + $0x88] sm:$0xff]
    %v108 = vld [vmem:[#allocation5 + $0x90] sm:$0xff]
    %v109 = vld [vmem:[#allocation5 + $0x98] sm:$0xff]
    %v110 = vld [vmem:[#allocation5 + $0xa0] sm:$0xff]
    %v111 = vld [vmem:[#allocation5 + $0xa8] sm:$0xff]
    %v112 = vld [vmem:[#allocation5 + $0xb0] sm:$0xff]
    %v113 = vld [vmem:[#allocation5 + $0xb8] sm:$0xff]
    %v114 = vld [vmem:[#allocation5 + $0xc0] sm:$0xff]
    %v115 = vld [vmem:[#allocation5 + $0xc8] sm:$0xff]
    %v116 = vld [vmem:[#allocation5 + $0xd0] sm:$0xff]
    %v117 = vld [vmem:[#allocation5 + $0xd8] sm:$0xff]
    %v118 = vld [vmem:[#allocation5 + $0xe0] sm:$0xff]
    %v119 = vld [vmem:[#allocation5 + $0xe8] sm:$0xff]
    %v120 = vld [vmem:[#allocation5 + $0xf0] sm:$0xff]
    %v121 = vld [vmem:[#allocation5 + $0xf8] sm:$0xff]
    %v122 = vld [vmem:[#allocation5 + $0x100] sm:$0xff]
    %v123 = vld [vmem:[#allocation5 + $0x108] sm:$0xff]
    %v124 = vld [vmem:[#allocation5 + $0x110] sm:$0xff]
    %v125 = vld [vmem:[#allocation5 + $0x118] sm:$0xff]
    %v126 = vld [vmem:[#allocation5 + $0x120] sm:$0xff]
    %v127 = vld [vmem:[#allocation5 + $0x128] sm:$0xff]
    %v128 = vld [vmem:[#allocation5 + $0x130] sm:$0xff]
    %v129 = vld [vmem:[#allocation5 + $0x138] sm:$0xff]
    %v130 = vld [vmem:[#allocation5 + $0x140] sm:$0xff]
    %v131 = vld [vmem:[#allocation5 + $0x148] sm:$0xff]
    %v132 = vld [vmem:[#allocation5 + $0x150] sm:$0xff]
    %v133 = vld [vmem:[#allocation5 + $0x158] sm:$0xff]
    %v134 = vld [vmem:[#allocation5 + $0x160] sm:$0xff]
    %v135 = vld [vmem:[#allocation5 + $0x168] sm:$0xff]
    %v136 = vld [vmem:[#allocation5 + $0x170] sm:$0xff]
    %v137 = vld [vmem:[#allocation5 + $0x178] sm:$0xff]
    %v138 = vld [vmem:[#allocation7] sm:$0x7]
    %v140 = vlaneseq
    %v141 = vshrl.u32 %v140, 7
    %v142 = vsub.s32 0, %v141
    %v143 = vrot.slane %v138, %v142
    %v144 = vlaneseq
    %v145 = vshrl.u32 %v144, 7
    %v146 = vsub.s32 1, %v145
    %v147 = vrot.slane %v138, %v146
    %v148 = vlaneseq
    %v149 = vshrl.u32 %v148, 7
    %v150 = vsub.s32 2, %v149
    %v151 = vrot.slane %v138, %v150
    %155 = vmatprep.subr.mxu0 %v91
    %156 = vmatpush1.msra.mxu0 %v90
    %157 = vmatprep.subr.mxu0 %v94
    %158 = vmatpush1.msra.mxu0 %v93
    %159 = vmatprep.subr.mxu0 %v97
    %160 = vmatpush1.msra.mxu0 %v96
    %161 = vmatprep.subr.mxu0 %v100
    %162 = vmatpush1.msra.mxu0 %v99
    %163 = vmatprep.subr.mxu0 %v103
    %164 = vmatpush1.msra.mxu0 %v102
    %165 = vmatprep.subr.mxu0 %v106
    %166 = vmatpush1.msra.mxu0 %v105
    %167 = vmatprep.subr.mxu0 %v109
    %168 = vmatpush1.msra.mxu0 %v108
    %169 = vmatprep.subr.mxu0 %v112
    %170 = vmatpush1.msra.mxu0 %v111
    %171 = vmatprep.subr.mxu0 %v115
    %172 = vmatpush1.msra.mxu0 %v114
    %173 = vmatprep.subr.mxu0 %v118
    %174 = vmatpush1.msra.mxu0 %v117
    %175 = vmatprep.subr.mxu0 %v121
    %176 = vmatpush1.msra.mxu0 %v120
    %177 = vmatprep.subr.mxu0 %v124
    %178 = vmatpush1.msra.mxu0 %v123
    %179 = vmatprep.subr.mxu0 %v127
    %180 = vmatpush1.msra.mxu0 %v126
    %181 = vmatprep.subr.mxu0 %v130
    %182 = vmatpush1.msra.mxu0 %v129
    %183 = vmatprep.subr.mxu0 %v133
    %184 = vmatpush1.msra.mxu0 %v132
    %185 = vmatprep.subr.mxu0 %v136
    %186 = vmatpush1.msra.mxu0 %v135
    %187 = vmatprep.subr.mxu0 0.0
    %188 = vmatpush1.msra.mxu0 0.0
    %189 = vmatprep.subr.mxu0 0.0
    %190 = vmatpush1.msra.mxu0 0.0
    %191 = vmatprep.subr.mxu0 0.0
    %192 = vmatpush1.msra.mxu0 0.0
    %193 = vmatprep.subr.mxu0 0.0
    %194 = vmatpush1.msra.mxu0 0.0
    %195 = vmatprep.subr.mxu0 0.0
    %196 = vmatpush1.msra.mxu0 0.0
    %197 = vmatprep.subr.mxu0 0.0
    %198 = vmatpush1.msra.mxu0 0.0
    %199 = vmatprep.subr.mxu0 0.0
    %200 = vmatpush1.msra.mxu0 0.0
    %201 = vmatprep.subr.mxu0 0.0
    %202 = vmatpush1.msra.mxu0 0.0
    %203 = vmatprep.subr.mxu0 0.0
    %204 = vmatpush1.msra.mxu0 0.0
    %205 = vmatprep.subr.mxu0 0.0
    %206 = vmatpush1.msra.mxu0 0.0
    %207 = vmatprep.subr.mxu0 0.0
    %208 = vmatpush1.msra.mxu0 0.0
    %209 = vmatprep.subr.mxu0 0.0
    %210 = vmatpush1.msra.mxu0 0.0
    %211 = vmatprep.subr.mxu0 0.0
    %212 = vmatpush1.msra.mxu0 0.0
    %213 = vmatprep.subr.mxu0 0.0
    %214 = vmatpush1.msra.mxu0 0.0
    %215 = vmatprep.subr.mxu0 0.0
    %216 = vmatpush1.msra.mxu0 0.0
    %217 = vmatprep.subr.mxu0 0.0
    %218 = vmatpush1.msra.mxu0 0.0
    %219 = vmatprep.mubr.f32.mxu0 0.0
    %220 = vmatmul.mubr.f32.gmra.mrb[0].mxu0 %v58
    %v221 = vpop.f32.mrb[0].mxu0
    %v222 = vadd.f32 %v143, %v221
    %v223 = vpop.f32.mrb[0].mxu0
    %v224 = vadd.f32 %v147, %v223
    %225 = vmatprep.mubr.f32.mxu0 0.0
    %226 = vmatmul.mubr.f32.gmra.mrb[0].mxu0 %v59
    %v227 = vpop.f32.mrb[0].mxu0
    %v228 = vadd.f32 %v143, %v227
    %v229 = vpop.f32.mrb[0].mxu0
    %v230 = vadd.f32 %v147, %v229
    %231 = vmatprep.mubr.f32.mxu0 0.0
    %232 = vmatmul.mubr.f32.gmra.mrb[0].mxu0 %v60
    %v233 = vpop.f32.mrb[0].mxu0
    %v234 = vadd.f32 %v143, %v233
    %v235 = vpop.f32.mrb[0].mxu0
    %v236 = vadd.f32 %v147, %v235
    %237 = vmatprep.mubr.f32.mxu0 0.0
    %238 = vmatmul.mubr.f32.gmra.mrb[0].mxu0 %v61
    %v239 = vpop.f32.mrb[0].mxu0
    %v240 = vadd.f32 %v143, %v239
    %v241 = vpop.f32.mrb[0].mxu0
    %v242 = vadd.f32 %v147, %v241
    %243 = vmatprep.mubr.f32.mxu0 0.0
    %244 = vmatmul.mubr.f32.gmra.mrb[0].mxu0 %v62
    %v245 = vpop.f32.mrb[0].mxu0
    %v246 = vadd.f32 %v143, %v245
    %v247 = vpop.f32.mrb[0].mxu0
    %v248 = vadd.f32 %v147, %v247
    %249 = vmatprep.mubr.f32.mxu0 0.0
    %250 = vmatmul.mubr.f32.gmra.mrb[0].mxu0 %v63
    %v251 = vpop.f32.mrb[0].mxu0
    %v252 = vadd.f32 %v143, %v251
    %v253 = vpop.f32.mrb[0].mxu0
    %v254 = vadd.f32 %v147, %v253
    %255 = vmatprep.mubr.f32.mxu0 0.0
    %256 = vmatmul.mubr.f32.gmra.mrb[0].mxu0 %v64
    %v257 = vpop.f32.mrb[0].mxu0
    %v258 = vadd.f32 %v143, %v257
    %v259 = vpop.f32.mrb[0].mxu0
    %v260 = vadd.f32 %v147, %v259
    %261 = vmatprep.mubr.f32.mxu0 0.0
    %262 = vmatmul.mubr.f32.gmra.mrb[0].mxu0 %v65
    %v263 = vpop.f32.mrb[0].mxu0
    %v264 = vadd.f32 %v143, %v263
    %v265 = vpop.f32.mrb[0].mxu0
    %v266 = vadd.f32 %v147, %v265
    %267 = vmatprep.mubr.f32.mxu0 0.0
    %268 = vmatmul.mubr.f32.gmra.mrb[0].mxu0 %v66
    %v269 = vpop.f32.mrb[0].mxu0
    %v270 = vadd.f32 %v143, %v269
    %v271 = vpop.f32.mrb[0].mxu0
    %v272 = vadd.f32 %v147, %v271
    %273 = vmatprep.mubr.f32.mxu0 0.0
    %274 = vmatmul.mubr.f32.gmra.mrb[0].mxu0 %v67
    %v275 = vpop.f32.mrb[0].mxu0
    %v276 = vadd.f32 %v143, %v275
    %v277 = vpop.f32.mrb[0].mxu0
    %v278 = vadd.f32 %v147, %v277
    %279 = vmatprep.mubr.f32.mxu0 0.0
    %280 = vmatmul.mubr.f32.gmra.mrb[0].mxu0 %v68
    %v281 = vpop.f32.mrb[0].mxu0
    %v282 = vadd.f32 %v143, %v281
    %v283 = vpop.f32.mrb[0].mxu0
    %v284 = vadd.f32 %v147, %v283
    %285 = vmatprep.mubr.f32.mxu0 0.0
    %286 = vmatmul.mubr.f32.gmra.mrb[0].mxu0 %v69
    %v287 = vpop.f32.mrb[0].mxu0
    %v288 = vadd.f32 %v143, %v287
    %v289 = vpop.f32.mrb[0].mxu0
    %v290 = vadd.f32 %v147, %v289
    %291 = vmatprep.mubr.f32.mxu0 0.0
    %292 = vmatmul.mubr.f32.gmra.mrb[0].mxu0 %v70
    %v293 = vpop.f32.mrb[0].mxu0
    %v294 = vadd.f32 %v143, %v293
    %v295 = vpop.f32.mrb[0].mxu0
    %v296 = vadd.f32 %v147, %v295
    %297 = vmatprep.mubr.f32.mxu0 0.0
    %298 = vmatmul.mubr.f32.gmra.mrb[0].mxu0 %v71
    %v299 = vpop.f32.mrb[0].mxu0
    %v300 = vadd.f32 %v143, %v299
    %v301 = vpop.f32.mrb[0].mxu0
    %v302 = vadd.f32 %v147, %v301
    %303 = vmatprep.mubr.f32.mxu0 0.0
    %304 = vmatmul.mubr.f32.gmra.mrb[0].mxu0 %v72
    %v305 = vpop.f32.mrb[0].mxu0
    %v306 = vadd.f32 %v143, %v305
    %v307 = vpop.f32.mrb[0].mxu0
    %v308 = vadd.f32 %v147, %v307
    %309 = vmatprep.mubr.f32.mxu0 0.0
    %310 = vmatmul.mubr.f32.gmra.mrb[0].mxu0 %v73
    %v311 = vpop.f32.mrb[0].mxu0
    %v312 = vadd.f32 %v143, %v311
    %v313 = vpop.f32.mrb[0].mxu0
    %v314 = vadd.f32 %v147, %v313
    %315 = vmatprep.mubr.f32.mxu0 0.0
    %316 = vmatmul.mubr.f32.gmra.mrb[0].mxu0 %v74
    %v317 = vpop.f32.mrb[0].mxu0
    %v318 = vadd.f32 %v143, %v317
    %v319 = vpop.f32.mrb[0].mxu0
    %v320 = vadd.f32 %v147, %v319
    %321 = vmatprep.mubr.f32.mxu0 0.0
    %322 = vmatmul.mubr.f32.gmra.mrb[0].mxu0 %v75
    %v323 = vpop.f32.mrb[0].mxu0
    %v324 = vadd.f32 %v143, %v323
    %v325 = vpop.f32.mrb[0].mxu0
    %v326 = vadd.f32 %v147, %v325
    %327 = vmatprep.mubr.f32.mxu0 0.0
    %328 = vmatmul.mubr.f32.gmra.mrb[0].mxu0 %v76
    %v329 = vpop.f32.mrb[0].mxu0
    %v330 = vadd.f32 %v143, %v329
    %v331 = vpop.f32.mrb[0].mxu0
    %v332 = vadd.f32 %v147, %v331
    %333 = vmatprep.mubr.f32.mxu0 0.0
    %334 = vmatmul.mubr.f32.gmra.mrb[0].mxu0 %v77
    %v335 = vpop.f32.mrb[0].mxu0
    %v336 = vadd.f32 %v143, %v335
    %v337 = vpop.f32.mrb[0].mxu0
    %v338 = vadd.f32 %v147, %v337
    %339 = vmatprep.mubr.f32.mxu0 0.0
    %340 = vmatmul.mubr.f32.gmra.mrb[0].mxu0 %v78
    %v341 = vpop.f32.mrb[0].mxu0
    %v342 = vadd.f32 %v143, %v341
    %v343 = vpop.f32.mrb[0].mxu0
    %v344 = vadd.f32 %v147, %v343
    %345 = vmatprep.mubr.f32.mxu0 0.0
    %346 = vmatmul.mubr.f32.gmra.mrb[0].mxu0 %v79
    %v347 = vpop.f32.mrb[0].mxu0
    %v348 = vadd.f32 %v143, %v347
    %v349 = vpop.f32.mrb[0].mxu0
    %v350 = vadd.f32 %v147, %v349
    %351 = vmatprep.mubr.f32.mxu0 0.0
    %352 = vmatmul.mubr.f32.gmra.mrb[0].mxu0 %v80
    %v353 = vpop.f32.mrb[0].mxu0
    %v354 = vadd.f32 %v143, %v353
    %v355 = vpop.f32.mrb[0].mxu0
    %v356 = vadd.f32 %v147, %v355
    %357 = vmatprep.mubr.f32.mxu0 0.0
    %358 = vmatmul.mubr.f32.gmra.mrb[0].mxu0 %v81
    %v359 = vpop.f32.mrb[0].mxu0
    %v360 = vadd.f32 %v143, %v359
    %v361 = vpop.f32.mrb[0].mxu0
    %v362 = vadd.f32 %v147, %v361
    %363 = vmatprep.mubr.f32.mxu0 0.0
    %364 = vmatmul.mubr.f32.gmra.mrb[0].mxu0 %v82
    %v365 = vpop.f32.mrb[0].mxu0
    %v366 = vadd.f32 %v143, %v365
    %v367 = vpop.f32.mrb[0].mxu0
    %v368 = vadd.f32 %v147, %v367
    %369 = vmatprep.mubr.f32.mxu0 0.0
    %370 = vmatmul.mubr.f32.gmra.mrb[0].mxu0 %v83
    %v371 = vpop.f32.mrb[0].mxu0
    %v372 = vadd.f32 %v143, %v371
    %v373 = vpop.f32.mrb[0].mxu0
    %v374 = vadd.f32 %v147, %v373
    %375 = vmatprep.mubr.f32.mxu0 0.0
    %376 = vmatmul.mubr.f32.gmra.mrb[0].mxu0 %v84
    %v377 = vpop.f32.mrb[0].mxu0
    %v378 = vadd.f32 %v143, %v377
    %v379 = vpop.f32.mrb[0].mxu0
    %v380 = vadd.f32 %v147, %v379
    %381 = vmatprep.mubr.f32.mxu0 0.0
    %382 = vmatmul.mubr.f32.gmra.mrb[0].mxu0 %v85
    %v383 = vpop.f32.mrb[0].mxu0
    %v384 = vadd.f32 %v143, %v383
    %v385 = vpop.f32.mrb[0].mxu0
    %v386 = vadd.f32 %v147, %v385
    %387 = vmatprep.mubr.f32.mxu0 0.0
    %388 = vmatmul.mubr.f32.gmra.mrb[0].mxu0 %v86
    %v389 = vpop.f32.mrb[0].mxu0
    %v390 = vadd.f32 %v143, %v389
    %v391 = vpop.f32.mrb[0].mxu0
    %v392 = vadd.f32 %v147, %v391
    %393 = vmatprep.mubr.f32.mxu0 0.0
    %394 = vmatmul.mubr.f32.gmra.mrb[0].mxu0 %v87
    %v395 = vpop.f32.mrb[0].mxu0
    %v396 = vadd.f32 %v143, %v395
    %v397 = vpop.f32.mrb[0].mxu0
    %v398 = vadd.f32 %v147, %v397
    %399 = vmatprep.mubr.f32.mxu0 0.0
    %400 = vmatmul.mubr.f32.gmra.mrb[0].mxu0 %v88
    %v401 = vpop.f32.mrb[0].mxu0
    %v402 = vadd.f32 %v143, %v401
    %v403 = vpop.f32.mrb[0].mxu0
    %v404 = vadd.f32 %v147, %v403
    %405 = vmatprep.mubr.f32.mxu0 0.0
    %406 = vmatmul.mubr.f32.gmra.mrb[0].mxu0 %v89
    %v407 = vpop.f32.mrb[0].mxu0
    %v408 = vadd.f32 %v143, %v407
    %v409 = vpop.f32.mrb[0].mxu0
    %v410 = vadd.f32 %v147, %v409
    %411 = vdwg.mxu0
    %412 = vmatprep.subr.mxu0 0.0
    %413 = vmatpush1.msra.mxu0 %v92
    %414 = vmatprep.subr.mxu0 0.0
    %415 = vmatpush1.msra.mxu0 %v95
    %416 = vmatprep.subr.mxu0 0.0
    %417 = vmatpush1.msra.mxu0 %v98
    %418 = vmatprep.subr.mxu0 0.0
    %419 = vmatpush1.msra.mxu0 %v101
    %420 = vmatprep.subr.mxu0 0.0
    %421 = vmatpush1.msra.mxu0 %v104
    %422 = vmatprep.subr.mxu0 0.0
    %423 = vmatpush1.msra.mxu0 %v107
    %424 = vmatprep.subr.mxu0 0.0
    %425 = vmatpush1.msra.mxu0 %v110
    %426 = vmatprep.subr.mxu0 0.0
    %427 = vmatpush1.msra.mxu0 %v113
    %428 = vmatprep.subr.mxu0 0.0
    %429 = vmatpush1.msra.mxu0 %v116
    %430 = vmatprep.subr.mxu0 0.0
    %431 = vmatpush1.msra.mxu0 %v119
    %432 = vmatprep.subr.mxu0 0.0
    %433 = vmatpush1.msra.mxu0 %v122
    %434 = vmatprep.subr.mxu0 0.0
    %435 = vmatpush1.msra.mxu0 %v125
    %436 = vmatprep.subr.mxu0 0.0
    %437 = vmatpush1.msra.mxu0 %v128
    %438 = vmatprep.subr.mxu0 0.0
    %439 = vmatpush1.msra.mxu0 %v131
    %440 = vmatprep.subr.mxu0 0.0
    %441 = vmatpush1.msra.mxu0 %v134
    %442 = vmatprep.subr.mxu0 0.0
    %443 = vmatpush1.msra.mxu0 %v137
    %444 = vmatprep.subr.mxu0 0.0
    %445 = vmatpush1.msra.mxu0 0.0
    %446 = vmatprep.subr.mxu0 0.0
    %447 = vmatpush1.msra.mxu0 0.0
    %448 = vmatprep.subr.mxu0 0.0
    %449 = vmatpush1.msra.mxu0 0.0
    %450 = vmatprep.subr.mxu0 0.0
    %451 = vmatpush1.msra.mxu0 0.0
    %452 = vmatprep.subr.mxu0 0.0
    %453 = vmatpush1.msra.mxu0 0.0
    %454 = vmatprep.subr.mxu0 0.0
    %455 = vmatpush1.msra.mxu0 0.0
    %456 = vmatprep.subr.mxu0 0.0
    %457 = vmatpush1.msra.mxu0 0.0
    %458 = vmatprep.subr.mxu0 0.0
    %459 = vmatpush1.msra.mxu0 0.0
    %460 = vmatprep.subr.mxu0 0.0
    %461 = vmatpush1.msra.mxu0 0.0
    %462 = vmatprep.subr.mxu0 0.0
    %463 = vmatpush1.msra.mxu0 0.0
    %464 = vmatprep.subr.mxu0 0.0
    %465 = vmatpush1.msra.mxu0 0.0
    %466 = vmatprep.subr.mxu0 0.0
    %467 = vmatpush1.msra.mxu0 0.0
    %468 = vmatprep.subr.mxu0 0.0
    %469 = vmatpush1.msra.mxu0 0.0
    %470 = vmatprep.subr.mxu0 0.0
    %471 = vmatpush1.msra.mxu0 0.0
    %472 = vmatprep.subr.mxu0 0.0
    %473 = vmatpush1.msra.mxu0 0.0
    %474 = vmatprep.subr.mxu0 0.0
    %475 = vmatpush1.msra.mxu0 0.0
    %476 = vmatprep.mubr.f32.mxu0 0.0
    %477 = vmatmul.mubr.f32.gmra.mrb[0].mxu0 %v58
    %v478 = vpop.f32.mrb[0].mxu0
    %v479 = vadd.f32 %v151, %v478
    %v480 = vpop.f32.mrb[0].mxu0
    %481 = vmatprep.mubr.f32.mxu0 0.0
    %482 = vmatmul.mubr.f32.gmra.mrb[0].mxu0 %v59
    %v483 = vpop.f32.mrb[0].mxu0
    %v484 = vadd.f32 %v151, %v483
    %v485 = vpop.f32.mrb[0].mxu0
    %486 = vmatprep.mubr.f32.mxu0 0.0
    %487 = vmatmul.mubr.f32.gmra.mrb[0].mxu0 %v60
    %v488 = vpop.f32.mrb[0].mxu0
    %v489 = vadd.f32 %v151, %v488
    %v490 = vpop.f32.mrb[0].mxu0
    %491 = vmatprep.mubr.f32.mxu0 0.0
    %492 = vmatmul.mubr.f32.gmra.mrb[0].mxu0 %v61
    %v493 = vpop.f32.mrb[0].mxu0
    %v494 = vadd.f32 %v151, %v493
    %v495 = vpop.f32.mrb[0].mxu0
    %496 = vmatprep.mubr.f32.mxu0 0.0
    %497 = vmatmul.mubr.f32.gmra.mrb[0].mxu0 %v62
    %v498 = vpop.f32.mrb[0].mxu0
    %v499 = vadd.f32 %v151, %v498
    %v500 = vpop.f32.mrb[0].mxu0
    %501 = vmatprep.mubr.f32.mxu0 0.0
    %502 = vmatmul.mubr.f32.gmra.mrb[0].mxu0 %v63
    %v503 = vpop.f32.mrb[0].mxu0
    %v504 = vadd.f32 %v151, %v503
    %v505 = vpop.f32.mrb[0].mxu0
    %506 = vmatprep.mubr.f32.mxu0 0.0
    %507 = vmatmul.mubr.f32.gmra.mrb[0].mxu0 %v64
    %v508 = vpop.f32.mrb[0].mxu0
    %v509 = vadd.f32 %v151, %v508
    %v510 = vpop.f32.mrb[0].mxu0
    %511 = vmatprep.mubr.f32.mxu0 0.0
    %512 = vmatmul.mubr.f32.gmra.mrb[0].mxu0 %v65
    %v513 = vpop.f32.mrb[0].mxu0
    %v514 = vadd.f32 %v151, %v513
    %v515 = vpop.f32.mrb[0].mxu0
    %516 = vmatprep.mubr.f32.mxu0 0.0
    %517 = vmatmul.mubr.f32.gmra.mrb[0].mxu0 %v66
    %v518 = vpop.f32.mrb[0].mxu0
    %v519 = vadd.f32 %v151, %v518
    %v520 = vpop.f32.mrb[0].mxu0
    %521 = vmatprep.mubr.f32.mxu0 0.0
    %522 = vmatmul.mubr.f32.gmra.mrb[0].mxu0 %v67
    %v523 = vpop.f32.mrb[0].mxu0
    %v524 = vadd.f32 %v151, %v523
    %v525 = vpop.f32.mrb[0].mxu0
    %526 = vmatprep.mubr.f32.mxu0 0.0
    %527 = vmatmul.mubr.f32.gmra.mrb[0].mxu0 %v68
    %v528 = vpop.f32.mrb[0].mxu0
    %v529 = vadd.f32 %v151, %v528
    %v530 = vpop.f32.mrb[0].mxu0
    %531 = vmatprep.mubr.f32.mxu0 0.0
    %532 = vmatmul.mubr.f32.gmra.mrb[0].mxu0 %v69
    %v533 = vpop.f32.mrb[0].mxu0
    %v534 = vadd.f32 %v151, %v533
    %v535 = vpop.f32.mrb[0].mxu0
    %536 = vmatprep.mubr.f32.mxu0 0.0
    %537 = vmatmul.mubr.f32.gmra.mrb[0].mxu0 %v70
    %v538 = vpop.f32.mrb[0].mxu0
    %v539 = vadd.f32 %v151, %v538
    %v540 = vpop.f32.mrb[0].mxu0
    %541 = vmatprep.mubr.f32.mxu0 0.0
    %542 = vmatmul.mubr.f32.gmra.mrb[0].mxu0 %v71
    %v543 = vpop.f32.mrb[0].mxu0
    %v544 = vadd.f32 %v151, %v543
    %v545 = vpop.f32.mrb[0].mxu0
    %546 = vmatprep.mubr.f32.mxu0 0.0
    %547 = vmatmul.mubr.f32.gmra.mrb[0].mxu0 %v72
    %v548 = vpop.f32.mrb[0].mxu0
    %v549 = vadd.f32 %v151, %v548
    %v550 = vpop.f32.mrb[0].mxu0
    %551 = vmatprep.mubr.f32.mxu0 0.0
    %552 = vmatmul.mubr.f32.gmra.mrb[0].mxu0 %v73
    %v553 = vpop.f32.mrb[0].mxu0
    %v554 = vadd.f32 %v151, %v553
    %v555 = vpop.f32.mrb[0].mxu0
    %556 = vmatprep.mubr.f32.mxu0 0.0
    %557 = vmatmul.mubr.f32.gmra.mrb[0].mxu0 %v74
    %v558 = vpop.f32.mrb[0].mxu0
    %v559 = vadd.f32 %v151, %v558
    %v560 = vpop.f32.mrb[0].mxu0
    %561 = vmatprep.mubr.f32.mxu0 0.0
    %562 = vmatmul.mubr.f32.gmra.mrb[0].mxu0 %v75
    %v563 = vpop.f32.mrb[0].mxu0
    %v564 = vadd.f32 %v151, %v563
    %v565 = vpop.f32.mrb[0].mxu0
    %566 = vmatprep.mubr.f32.mxu0 0.0
    %567 = vmatmul.mubr.f32.gmra.mrb[0].mxu0 %v76
    %v568 = vpop.f32.mrb[0].mxu0
    %v569 = vadd.f32 %v151, %v568
    %v570 = vpop.f32.mrb[0].mxu0
    %571 = vmatprep.mubr.f32.mxu0 0.0
    %572 = vmatmul.mubr.f32.gmra.mrb[0].mxu0 %v77
    %v573 = vpop.f32.mrb[0].mxu0
    %v574 = vadd.f32 %v151, %v573
    %v575 = vpop.f32.mrb[0].mxu0
    %576 = vmatprep.mubr.f32.mxu0 0.0
    %577 = vmatmul.mubr.f32.gmra.mrb[0].mxu0 %v78
    %v578 = vpop.f32.mrb[0].mxu0
    %v579 = vadd.f32 %v151, %v578
    %v580 = vpop.f32.mrb[0].mxu0
    %581 = vmatprep.mubr.f32.mxu0 0.0
    %582 = vmatmul.mubr.f32.gmra.mrb[0].mxu0 %v79
    %v583 = vpop.f32.mrb[0].mxu0
    %v584 = vadd.f32 %v151, %v583
    %v585 = vpop.f32.mrb[0].mxu0
    %586 = vmatprep.mubr.f32.mxu0 0.0
    %587 = vmatmul.mubr.f32.gmra.mrb[0].mxu0 %v80
    %v588 = vpop.f32.mrb[0].mxu0
    %v589 = vadd.f32 %v151, %v588
    %v590 = vpop.f32.mrb[0].mxu0
    %591 = vmatprep.mubr.f32.mxu0 0.0
    %592 = vmatmul.mubr.f32.gmra.mrb[0].mxu0 %v81
    %v593 = vpop.f32.mrb[0].mxu0
    %v594 = vadd.f32 %v151, %v593
    %v595 = vpop.f32.mrb[0].mxu0
    %596 = vmatprep.mubr.f32.mxu0 0.0
    %597 = vmatmul.mubr.f32.gmra.mrb[0].mxu0 %v82
    %v598 = vpop.f32.mrb[0].mxu0
    %v599 = vadd.f32 %v151, %v598
    %v600 = vpop.f32.mrb[0].mxu0
    %601 = vmatprep.mubr.f32.mxu0 0.0
    %602 = vmatmul.mubr.f32.gmra.mrb[0].mxu0 %v83
    %v603 = vpop.f32.mrb[0].mxu0
    %v604 = vadd.f32 %v151, %v603
    %v605 = vpop.f32.mrb[0].mxu0
    %606 = vmatprep.mubr.f32.mxu0 0.0
    %607 = vmatmul.mubr.f32.gmra.mrb[0].mxu0 %v84
    %v608 = vpop.f32.mrb[0].mxu0
    %v609 = vadd.f32 %v151, %v608
    %v610 = vpop.f32.mrb[0].mxu0
    %611 = vmatprep.mubr.f32.mxu0 0.0
    %612 = vmatmul.mubr.f32.gmra.mrb[0].mxu0 %v85
    %v613 = vpop.f32.mrb[0].mxu0
    %v614 = vadd.f32 %v151, %v613
    %v615 = vpop.f32.mrb[0].mxu0
    %616 = vmatprep.mubr.f32.mxu0 0.0
    %617 = vmatmul.mubr.f32.gmra.mrb[0].mxu0 %v86
    %v618 = vpop.f32.mrb[0].mxu0
    %v619 = vadd.f32 %v151, %v618
    %v620 = vpop.f32.mrb[0].mxu0
    %621 = vmatprep.mubr.f32.mxu0 0.0
    %622 = vmatmul.mubr.f32.gmra.mrb[0].mxu0 %v87
    %v623 = vpop.f32.mrb[0].mxu0
    %v624 = vadd.f32 %v151, %v623
    %v625 = vpop.f32.mrb[0].mxu0
    %626 = vmatprep.mubr.f32.mxu0 0.0
    %627 = vmatmul.mubr.f32.gmra.mrb[0].mxu0 %v88
    %v628 = vpop.f32.mrb[0].mxu0
    %v629 = vadd.f32 %v151, %v628
    %v630 = vpop.f32.mrb[0].mxu0
    %631 = vmatprep.mubr.f32.mxu0 0.0
    %632 = vmatmul.mubr.f32.gmra.mrb[0].mxu0 %v89
    %v633 = vpop.f32.mrb[0].mxu0
    %v634 = vadd.f32 %v151, %v633
    %v635 = vpop.f32.mrb[0].mxu0
    %636 = vdwg.mxu0
    %637 = vst [vmem:[#allocation8] sm:$0xff] %v222
    %638 = vst [vmem:[#allocation8 + $0x8] sm:$0xff] %v228
    %639 = vst [vmem:[#allocation8 + $0x10] sm:$0xff] %v234
    %640 = vst [vmem:[#allocation8 + $0x18] sm:$0xff] %v240
    %641 = vst [vmem:[#allocation8 + $0x20] sm:$0xff] %v246
    %642 = vst [vmem:[#allocation8 + $0x28] sm:$0xff] %v252
    %643 = vst [vmem:[#allocation8 + $0x30] sm:$0xff] %v258
    %644 = vst [vmem:[#allocation8 + $0x38] sm:$0xff] %v264
    %645 = vst [vmem:[#allocation8 + $0x40] sm:$0xff] %v270
    %646 = vst [vmem:[#allocation8 + $0x48] sm:$0xff] %v276
    %647 = vst [vmem:[#allocation8 + $0x50] sm:$0xff] %v282
    %648 = vst [vmem:[#allocation8 + $0x58] sm:$0xff] %v288
    %649 = vst [vmem:[#allocation8 + $0x60] sm:$0xff] %v294
    %650 = vst [vmem:[#allocation8 + $0x68] sm:$0xff] %v300
    %651 = vst [vmem:[#allocation8 + $0x70] sm:$0xff] %v306
    %652 = vst [vmem:[#allocation8 + $0x78] sm:$0xff] %v312
    %653 = vst [vmem:[#allocation8 + $0x80] sm:$0xff] %v318
    %654 = vst [vmem:[#allocation8 + $0x88] sm:$0xff] %v324
    %655 = vst [vmem:[#allocation8 + $0x90] sm:$0xff] %v330
    %656 = vst [vmem:[#allocation8 + $0x98] sm:$0xff] %v336
    %657 = vst [vmem:[#allocation8 + $0xa0] sm:$0xff] %v342
    %658 = vst [vmem:[#allocation8 + $0xa8] sm:$0xff] %v348
    %659 = vst [vmem:[#allocation8 + $0xb0] sm:$0xff] %v354
    %660 = vst [vmem:[#allocation8 + $0xb8] sm:$0xff] %v360
    %661 = vst [vmem:[#allocation8 + $0xc0] sm:$0xff] %v366
    %662 = vst [vmem:[#allocation8 + $0xc8] sm:$0xff] %v372
    %663 = vst [vmem:[#allocation8 + $0xd0] sm:$0xff] %v378
    %664 = vst [vmem:[#allocation8 + $0xd8] sm:$0xff] %v384
    %665 = vst [vmem:[#allocation8 + $0xe0] sm:$0xff] %v390
    %666 = vst [vmem:[#allocation8 + $0xe8] sm:$0xff] %v396
    %667 = vst [vmem:[#allocation8 + $0xf0] sm:$0xff] %v402
    %668 = vst [vmem:[#allocation8 + $0xf8] sm:$0xff] %v408
    %669 = vst [vmem:[#allocation9] sm:$0xff] %v224
    %670 = vst [vmem:[#allocation9 + $0x8] sm:$0xff] %v230
    %671 = vst [vmem:[#allocation9 + $0x10] sm:$0xff] %v236
    %672 = vst [vmem:[#allocation9 + $0x18] sm:$0xff] %v242
    %673 = vst [vmem:[#allocation9 + $0x20] sm:$0xff] %v248
    %674 = vst [vmem:[#allocation9 + $0x28] sm:$0xff] %v254
    %675 = vst [vmem:[#allocation9 + $0x30] sm:$0xff] %v260
    %676 = vst [vmem:[#allocation9 + $0x38] sm:$0xff] %v266
    %677 = vst [vmem:[#allocation9 + $0x40] sm:$0xff] %v272
    %678 = vst [vmem:[#allocation9 + $0x48] sm:$0xff] %v278
    %679 = vst [vmem:[#allocation9 + $0x50] sm:$0xff] %v284
    %680 = vst [vmem:[#allocation9 + $0x58] sm:$0xff] %v290
    %681 = vst [vmem:[#allocation9 + $0x60] sm:$0xff] %v296
    %682 = vst [vmem:[#allocation9 + $0x68] sm:$0xff] %v302
    %683 = vst [vmem:[#allocation9 + $0x70] sm:$0xff] %v308
    %684 = vst [vmem:[#allocation9 + $0x78] sm:$0xff] %v314
    %685 = vst [vmem:[#allocation9 + $0x80] sm:$0xff] %v320
    %686 = vst [vmem:[#allocation9 + $0x88] sm:$0xff] %v326
    %687 = vst [vmem:[#allocation9 + $0x90] sm:$0xff] %v332
    %688 = vst [vmem:[#allocation9 + $0x98] sm:$0xff] %v338
    %689 = vst [vmem:[#allocation9 + $0xa0] sm:$0xff] %v344
    %690 = vst [vmem:[#allocation9 + $0xa8] sm:$0xff] %v350
    %691 = vst [vmem:[#allocation9 + $0xb0] sm:$0xff] %v356
    %692 = vst [vmem:[#allocation9 + $0xb8] sm:$0xff] %v362
    %693 = vst [vmem:[#allocation9 + $0xc0] sm:$0xff] %v368
    %694 = vst [vmem:[#allocation9 + $0xc8] sm:$0xff] %v374
    %695 = vst [vmem:[#allocation9 + $0xd0] sm:$0xff] %v380
    %696 = vst [vmem:[#allocation9 + $0xd8] sm:$0xff] %v386
    %697 = vst [vmem:[#allocation9 + $0xe0] sm:$0xff] %v392
    %698 = vst [vmem:[#allocation9 + $0xe8] sm:$0xff] %v398
    %699 = vst [vmem:[#allocation9 + $0xf0] sm:$0xff] %v404
    %700 = vst [vmem:[#allocation9 + $0xf8] sm:$0xff] %v410
    %701 = vst [vmem:[#allocation11] sm:$0xff] %v479
    %702 = vst [vmem:[#allocation11 + $0x8] sm:$0xff] %v484
    %703 = vst [vmem:[#allocation11 + $0x10] sm:$0xff] %v489
    %704 = vst [vmem:[#allocation11 + $0x18] sm:$0xff] %v494
    %705 = vst [vmem:[#allocation11 + $0x20] sm:$0xff] %v499
    %706 = vst [vmem:[#allocation11 + $0x28] sm:$0xff] %v504
    %707 = vst [vmem:[#allocation11 + $0x30] sm:$0xff] %v509
    %708 = vst [vmem:[#allocation11 + $0x38] sm:$0xff] %v514
    %709 = vst [vmem:[#allocation11 + $0x40] sm:$0xff] %v519
    %710 = vst [vmem:[#allocation11 + $0x48] sm:$0xff] %v524
    %711 = vst [vmem:[#allocation11 + $0x50] sm:$0xff] %v529
    %712 = vst [vmem:[#allocation11 + $0x58] sm:$0xff] %v534
    %713 = vst [vmem:[#allocation11 + $0x60] sm:$0xff] %v539
    %714 = vst [vmem:[#allocation11 + $0x68] sm:$0xff] %v544
    %715 = vst [vmem:[#allocation11 + $0x70] sm:$0xff] %v549
    %716 = vst [vmem:[#allocation11 + $0x78] sm:$0xff] %v554
    %717 = vst [vmem:[#allocation11 + $0x80] sm:$0xff] %v559
    %718 = vst [vmem:[#allocation11 + $0x88] sm:$0xff] %v564
    %719 = vst [vmem:[#allocation11 + $0x90] sm:$0xff] %v569
    %720 = vst [vmem:[#allocation11 + $0x98] sm:$0xff] %v574
    %721 = vst [vmem:[#allocation11 + $0xa0] sm:$0xff] %v579
    %722 = vst [vmem:[#allocation11 + $0xa8] sm:$0xff] %v584
    %723 = vst [vmem:[#allocation11 + $0xb0] sm:$0xff] %v589
    %724 = vst [vmem:[#allocation11 + $0xb8] sm:$0xff] %v594
    %725 = vst [vmem:[#allocation11 + $0xc0] sm:$0xff] %v599
    %726 = vst [vmem:[#allocation11 + $0xc8] sm:$0xff] %v604
    %727 = vst [vmem:[#allocation11 + $0xd0] sm:$0xff] %v609
    %728 = vst [vmem:[#allocation11 + $0xd8] sm:$0xff] %v614
    %729 = vst [vmem:[#allocation11 + $0xe0] sm:$0xff] %v619
    %730 = vst [vmem:[#allocation11 + $0xe8] sm:$0xff] %v624
    %731 = vst [vmem:[#allocation11 + $0xf0] sm:$0xff] %v629
    %732 = vst [vmem:[#allocation11 + $0xf8] sm:$0xff] %v634
    // Predicated region
    $region26: #{gcs_layer_pallas.3} parent=1 // pred_check
      _
    $region27: #{gcs_layer_pallas.3} parent=1 // pred_check_branch
      %734 = sbr.rel (0) target = $region29
    $region28: #{gcs_layer_pallas.3} parent=1 // pred_region
      %s736 = ssub.s32 4096, 4096
      %737 = vsyncadd [#allocation4], %s736
      %s738 = sshll.u32 [#allocation8], 4
      %s739 = int_to_ptr.vmem [resolvable:$true] %s738
      %744 = dma.vmem_to_hbm [thread:$0]  %s739, 4096, %s3, [#allocation4], 128, 128, 8
    $region29: #{gcs_layer_pallas.3} parent=1 // pred_fallthru
      _
    // Predicated region
    $region30: #{gcs_layer_pallas.3} parent=1 // pred_check
      _
    $region31: #{gcs_layer_pallas.3} parent=1 // pred_check_branch
      %746 = sbr.rel (0) target = $region33
    $region32: #{gcs_layer_pallas.3} parent=1 // pred_region
      %s748 = ssub.s32 4096, 4096
      %749 = vsyncadd [#allocation10], %s748
      %s750 = sshll.u32 [#allocation9], 4
      %s751 = int_to_ptr.vmem [resolvable:$true] %s750
      %756 = dma.vmem_to_hbm [thread:$0]  %s751, 4096, %s4, [#allocation10], 128, 128, 8
    $region33: #{gcs_layer_pallas.3} parent=1 // pred_fallthru
      _
    // Predicated region
    $region34: #{gcs_layer_pallas.3} parent=1 // pred_check
      _
    $region35: #{gcs_layer_pallas.3} parent=1 // pred_check_branch
      %758 = sbr.rel (0) target = $region37
    $region36: #{gcs_layer_pallas.3} parent=1 // pred_region
      %s760 = ssub.s32 4096, 4096
      %761 = vsyncadd [#allocation10], %s760
      %s762 = sshll.u32 [#allocation11], 4
      %s763 = int_to_ptr.vmem [resolvable:$true] %s762
      %768 = dma.vmem_to_hbm [thread:$0]  %s763, 4096, %s5, [#allocation10], 128, 128, 8
    $region37: #{gcs_layer_pallas.3} parent=1 // pred_fallthru
      _
    // Predicated region
    $region38: #{gcs_layer_pallas.3} parent=1 // pred_check
      _
    $region39: #{gcs_layer_pallas.3} parent=1 // pred_check_branch
      %770 = sbr.rel (0) target = $region41
    $region40: #{gcs_layer_pallas.3} parent=1 // pred_region
      %771 = dma.done [#allocation4], 4096
    $region41: #{gcs_layer_pallas.3} parent=1 // pred_fallthru
      _
    // Predicated region
    $region42: #{gcs_layer_pallas.3} parent=1 // pred_check
      _
    $region43: #{gcs_layer_pallas.3} parent=1 // pred_check_branch
      %773 = sbr.rel (0) target = $region45
    $region44: #{gcs_layer_pallas.3} parent=1 // pred_region
      %774 = dma.done [#allocation10], 4096
    $region45: #{gcs_layer_pallas.3} parent=1 // pred_fallthru
      _
    // Predicated region
    $region46: #{gcs_layer_pallas.3} parent=1 // pred_check
      _
    $region47: #{gcs_layer_pallas.3} parent=1 // pred_check_branch
      %776 = sbr.rel (0) target = $region49
    $region48: #{gcs_layer_pallas.3} parent=1 // pred_region
      %777 = dma.done [#allocation10], 4096
    $region49: #{gcs_layer_pallas.3} parent=1 // pred_fallthru
      _
    %778 = vsyncpa [#allocation3], 1
    %779 = vsyncpa [#allocation6], 1
    %780 = vsyncpa [#allocation4], 1
    %781 = vsyncpa [#allocation10], 1

// kernel: gcs_layer_pallas.5
$region0: #{gcs_layer_pallas.5}
  #allocation0 [shape = 'u32[]', space=smem, size = 0x4, offset = 0x4, fixed_abs, tag = 'smem constant byte address 0x4 - core index']
  #allocation1 [shape = 'u32[144,128]{1,0:T(1,128)}', space=vmem, size = 0x12000, scoped, tag = 'internal scratch']
  #allocation2 [shape = 'f32[1]{0:T(128)S(6)}', space=smem, size = 0x200, scoped, tag = 'scoped memory for gcs_layer_pallas.5']
  %s0 = inlined_call_operand.<no memory space> [shape: f32[1], index: 0, kind: input, shape index: {}]
  %s1 = inlined_call_operand.hbm [shape: f32[256,128], index: 1, kind: input, shape index: {}]
  %s2 = inlined_call_operand.hbm [shape: f32[256,128], index: 2, kind: input, shape index: {}]
  %s3 = inlined_call_operand.hbm [shape: f32[256,128], index: 3, kind: input, shape index: {}]
  %s4 = inlined_call_operand.hbm [shape: s8[256,256], index: 4, kind: input, shape index: {}]
  %s5 = inlined_call_operand.hbm [shape: f32[256,256], index: 5, kind: output, shape index: {0}]
  %s6 = inlined_call_operand.hbm [shape: f32[256,128], index: 6, kind: output, shape index: {1}]
  %7 = xla_tuple %s5, %s6
  %s8 = sld [smem:[#allocation0]]
  $region54: #{gcs_layer_pallas.5} parent=0
    _
  %s10 = ssub.s32 1, %s8
  %s11 = scalar_select 0, %s10, %s8
  %12 = sst [smem:[#allocation2]] %s0
  $region1: #{gcs_layer_pallas.5} parent=0
    #allocation3 [shape = 'u8[131072]{0}', space=vmem, size = 0x20000, scoped, tag = 'input window, operand 1, single buffered']
    #allocation4 [shape = 's32[1]{0}', space=sflag, size = 0x4, scoped, tag = 'scoped memory for gcs_layer_pallas.5']
    #allocation5 [shape = 's32[1]{0}', space=sflag, size = 0x4, scoped, tag = 'scoped memory for gcs_layer_pallas.5']
    #allocation6 [shape = 'u8[131072]{0}', space=vmem, size = 0x20000, scoped, tag = 'input window, operand 2, single buffered']
    #allocation7 [shape = 's32[1]{0}', space=sflag, size = 0x4, scoped, tag = 'scoped memory for gcs_layer_pallas.5']
    #allocation8 [shape = 'u8[131072]{0}', space=vmem, size = 0x20000, scoped, tag = 'input window, operand 3, single buffered']
    #allocation9 [shape = 'u8[65536]{0}', space=vmem, size = 0x10000, scoped, tag = 'input window, operand 4, single buffered']
    #allocation10 [shape = 's32[1]{0}', space=sflag, size = 0x4, scoped, tag = 'scoped memory for gcs_layer_pallas.5']
    #allocation11 [shape = 'u8[262144]{0}', space=vmem, size = 0x40000, scoped, tag = 'output window, operand 0, single buffered']
    #allocation12 [shape = 'u8[131072]{0}', space=vmem, size = 0x20000, scoped, tag = 'output window, operand 1, single buffered']
    #allocation13 [shape = 's32[1]{0}', space=sflag, size = 0x4, scoped, tag = 'scoped memory for gcs_layer_pallas.5']
    %13 = vsyncpa [#allocation4], 0
    %14 = vsyncpa [#allocation7], 0
    %15 = vsyncpa [#allocation10], 0
    %16 = vsyncpa [#allocation5], 0
    %17 = vsyncpa [#allocation13], 0
    // Predicated region
    $region2: #{gcs_layer_pallas.5} parent=1 // pred_check
      _
    $region3: #{gcs_layer_pallas.5} parent=1 // pred_check_branch
      %19 = sbr.rel (0) target = $region5
    $region4: #{gcs_layer_pallas.5} parent=1 // pred_region
      _
    $region5: #{gcs_layer_pallas.5} parent=1 // pred_fallthru
      _
    // Predicated region
    $region6: #{gcs_layer_pallas.5} parent=1 // pred_check
      _
    $region7: #{gcs_layer_pallas.5} parent=1 // pred_check_branch
      %21 = sbr.rel (0) target = $region9
    $region8: #{gcs_layer_pallas.5} parent=1 // pred_region
      %s23 = ssub.s32 4096, 4096
      %24 = vsyncadd [#allocation4], %s23
      %s25 = sshll.u32 [#allocation3], 4
      %s26 = int_to_ptr.vmem [resolvable:$true] %s25
      %31 = dma.hbm_to_vmem [thread:$0]  %s1, 4096, %s26, [#allocation4], 128, 128, 8
    $region9: #{gcs_layer_pallas.5} parent=1 // pred_fallthru
      _
    // Predicated region
    $region10: #{gcs_layer_pallas.5} parent=1 // pred_check
      _
    $region11: #{gcs_layer_pallas.5} parent=1 // pred_check_branch
      %33 = sbr.rel (0) target = $region13
    $region12: #{gcs_layer_pallas.5} parent=1 // pred_region
      %s35 = ssub.s32 4096, 4096
      %36 = vsyncadd [#allocation7], %s35
      %s37 = sshll.u32 [#allocation6], 4
      %s38 = int_to_ptr.vmem [resolvable:$true] %s37
      %43 = dma.hbm_to_vmem [thread:$0]  %s2, 4096, %s38, [#allocation7], 128, 128, 8
    $region13: #{gcs_layer_pallas.5} parent=1 // pred_fallthru
      _
    // Predicated region
    $region14: #{gcs_layer_pallas.5} parent=1 // pred_check
      _
    $region15: #{gcs_layer_pallas.5} parent=1 // pred_check_branch
      %45 = sbr.rel (0) target = $region17
    $region16: #{gcs_layer_pallas.5} parent=1 // pred_region
      %s47 = ssub.s32 4096, 4096
      %48 = vsyncadd [#allocation7], %s47
      %s49 = sshll.u32 [#allocation8], 4
      %s50 = int_to_ptr.vmem [resolvable:$true] %s49
      %55 = dma.hbm_to_vmem [thread:$0]  %s3, 4096, %s50, [#allocation7], 128, 128, 8
    $region17: #{gcs_layer_pallas.5} parent=1 // pred_fallthru
      _
    // Predicated region
    $region18: #{gcs_layer_pallas.5} parent=1 // pred_check
      _
    $region19: #{gcs_layer_pallas.5} parent=1 // pred_check_branch
      %57 = sbr.rel (0) target = $region21
    $region20: #{gcs_layer_pallas.5} parent=1 // pred_region
      %s59 = ssub.s32 2048, 2048
      %60 = vsyncadd [#allocation10], %s59
      %s61 = sshll.u32 [#allocation9], 4
      %s62 = int_to_ptr.vmem [resolvable:$true] %s61
      %67 = dma.hbm_to_vmem [thread:$0]  %s4, 2048, %s62, [#allocation10], 256, 256, 16
    $region21: #{gcs_layer_pallas.5} parent=1 // pred_fallthru
      _
    // Predicated region
    $region22: #{gcs_layer_pallas.5} parent=1 // pred_check
      _
    $region23: #{gcs_layer_pallas.5} parent=1 // pred_check_branch
      %69 = sbr.rel (0) target = $region25
    $region24: #{gcs_layer_pallas.5} parent=1 // pred_region
      %70 = dma.done [#allocation4], 4096
    $region25: #{gcs_layer_pallas.5} parent=1 // pred_fallthru
      _
    // Predicated region
    $region26: #{gcs_layer_pallas.5} parent=1 // pred_check
      _
    $region27: #{gcs_layer_pallas.5} parent=1 // pred_check_branch
      %72 = sbr.rel (0) target = $region29
    $region28: #{gcs_layer_pallas.5} parent=1 // pred_region
      %73 = dma.done [#allocation7], 4096
    $region29: #{gcs_layer_pallas.5} parent=1 // pred_fallthru
      _
    // Predicated region
    $region30: #{gcs_layer_pallas.5} parent=1 // pred_check
      _
    $region31: #{gcs_layer_pallas.5} parent=1 // pred_check_branch
      %75 = sbr.rel (0) target = $region33
    $region32: #{gcs_layer_pallas.5} parent=1 // pred_region
      %76 = dma.done [#allocation7], 4096
    $region33: #{gcs_layer_pallas.5} parent=1 // pred_fallthru
      _
    // Predicated region
    $region34: #{gcs_layer_pallas.5} parent=1 // pred_check
      _
    $region35: #{gcs_layer_pallas.5} parent=1 // pred_check_branch
      %78 = sbr.rel (0) target = $region37
    $region36: #{gcs_layer_pallas.5} parent=1 // pred_region
      %79 = dma.done [#allocation10], 2048
    $region37: #{gcs_layer_pallas.5} parent=1 // pred_fallthru
      _
    %s80 = sld [smem:[#allocation2]]
    %v81 = vld [vmem:[#allocation3] sm:$0xff]
    %v82 = vld [vmem:[#allocation3 + $0x8] sm:$0xff]
    %v83 = vld [vmem:[#allocation3 + $0x10] sm:$0xff]
    %v84 = vld [vmem:[#allocation3 + $0x18] sm:$0xff]
    %v85 = vld [vmem:[#allocation3 + $0x20] sm:$0xff]
    %v86 = vld [vmem:[#allocation3 + $0x28] sm:$0xff]
    %v87 = vld [vmem:[#allocation3 + $0x30] sm:$0xff]
    %v88 = vld [vmem:[#allocation3 + $0x38] sm:$0xff]
    %v89 = vld [vmem:[#allocation3 + $0x40] sm:$0xff]
    %v90 = vld [vmem:[#allocation3 + $0x48] sm:$0xff]
    %v91 = vld [vmem:[#allocation3 + $0x50] sm:$0xff]
    %v92 = vld [vmem:[#allocation3 + $0x58] sm:$0xff]
    %v93 = vld [vmem:[#allocation3 + $0x60] sm:$0xff]
    %v94 = vld [vmem:[#allocation3 + $0x68] sm:$0xff]
    %v95 = vld [vmem:[#allocation3 + $0x70] sm:$0xff]
    %v96 = vld [vmem:[#allocation3 + $0x78] sm:$0xff]
    %v97 = vld [vmem:[#allocation3 + $0x80] sm:$0xff]
    %v98 = vld [vmem:[#allocation3 + $0x88] sm:$0xff]
    %v99 = vld [vmem:[#allocation3 + $0x90] sm:$0xff]
    %v100 = vld [vmem:[#allocation3 + $0x98] sm:$0xff]
    %v101 = vld [vmem:[#allocation3 + $0xa0] sm:$0xff]
    %v102 = vld [vmem:[#allocation3 + $0xa8] sm:$0xff]
    %v103 = vld [vmem:[#allocation3 + $0xb0] sm:$0xff]
    %v104 = vld [vmem:[#allocation3 + $0xb8] sm:$0xff]
    %v105 = vld [vmem:[#allocation3 + $0xc0] sm:$0xff]
    %v106 = vld [vmem:[#allocation3 + $0xc8] sm:$0xff]
    %v107 = vld [vmem:[#allocation3 + $0xd0] sm:$0xff]
    %v108 = vld [vmem:[#allocation3 + $0xd8] sm:$0xff]
    %v109 = vld [vmem:[#allocation3 + $0xe0] sm:$0xff]
    %v110 = vld [vmem:[#allocation3 + $0xe8] sm:$0xff]
    %v111 = vld [vmem:[#allocation3 + $0xf0] sm:$0xff]
    %v112 = vld [vmem:[#allocation3 + $0xf8] sm:$0xff]
    %v113 = vld [vmem:[#allocation6] sm:$0xff]
    %v114 = vld [vmem:[#allocation6 + $0x8] sm:$0xff]
    %v115 = vld [vmem:[#allocation6 + $0x10] sm:$0xff]
    %v116 = vld [vmem:[#allocation6 + $0x18] sm:$0xff]
    %v117 = vld [vmem:[#allocation6 + $0x20] sm:$0xff]
    %v118 = vld [vmem:[#allocation6 + $0x28] sm:$0xff]
    %v119 = vld [vmem:[#allocation6 + $0x30] sm:$0xff]
    %v120 = vld [vmem:[#allocation6 + $0x38] sm:$0xff]
    %v121 = vld [vmem:[#allocation6 + $0x40] sm:$0xff]
    %v122 = vld [vmem:[#allocation6 + $0x48] sm:$0xff]
    %v123 = vld [vmem:[#allocation6 + $0x50] sm:$0xff]
    %v124 = vld [vmem:[#allocation6 + $0x58] sm:$0xff]
    %v125 = vld [vmem:[#allocation6 + $0x60] sm:$0xff]
    %v126 = vld [vmem:[#allocation6 + $0x68] sm:$0xff]
    %v127 = vld [vmem:[#allocation6 + $0x70] sm:$0xff]
    %v128 = vld [vmem:[#allocation6 + $0x78] sm:$0xff]
    %v129 = vld [vmem:[#allocation6 + $0x80] sm:$0xff]
    %v130 = vld [vmem:[#allocation6 + $0x88] sm:$0xff]
    %v131 = vld [vmem:[#allocation6 + $0x90] sm:$0xff]
    %v132 = vld [vmem:[#allocation6 + $0x98] sm:$0xff]
    %v133 = vld [vmem:[#allocation6 + $0xa0] sm:$0xff]
    %v134 = vld [vmem:[#allocation6 + $0xa8] sm:$0xff]
    %v135 = vld [vmem:[#allocation6 + $0xb0] sm:$0xff]
    %v136 = vld [vmem:[#allocation6 + $0xb8] sm:$0xff]
    %v137 = vld [vmem:[#allocation6 + $0xc0] sm:$0xff]
    %v138 = vld [vmem:[#allocation6 + $0xc8] sm:$0xff]
    %v139 = vld [vmem:[#allocation6 + $0xd0] sm:$0xff]
    %v140 = vld [vmem:[#allocation6 + $0xd8] sm:$0xff]
    %v141 = vld [vmem:[#allocation6 + $0xe0] sm:$0xff]
    %v142 = vld [vmem:[#allocation6 + $0xe8] sm:$0xff]
    %v143 = vld [vmem:[#allocation6 + $0xf0] sm:$0xff]
    %v144 = vld [vmem:[#allocation6 + $0xf8] sm:$0xff]
    %145 = vmatprep.subr.mxu0 0.0
    %146 = vmatpush1.xpose.msra.mxu0 %v113
    %147 = vmatprep.subr.mxu0 0.0
    %148 = vmatpush1.xpose.msra.mxu0 %v114
    %149 = vmatprep.subr.mxu0 0.0
    %150 = vmatpush1.xpose.msra.mxu0 %v115
    %151 = vmatprep.subr.mxu0 0.0
    %152 = vmatpush1.xpose.msra.mxu0 %v116
    %153 = vmatprep.subr.mxu0 0.0
    %154 = vmatpush1.xpose.msra.mxu0 %v117
    %155 = vmatprep.subr.mxu0 0.0
    %156 = vmatpush1.xpose.msra.mxu0 %v118
    %157 = vmatprep.subr.mxu0 0.0
    %158 = vmatpush1.xpose.msra.mxu0 %v119
    %159 = vmatprep.subr.mxu0 0.0
    %160 = vmatpush1.xpose.msra.mxu0 %v120
    %161 = vmatprep.subr.mxu0 0.0
    %162 = vmatpush1.xpose.msra.mxu0 %v121
    %163 = vmatprep.subr.mxu0 0.0
    %164 = vmatpush1.xpose.msra.mxu0 %v122
    %165 = vmatprep.subr.mxu0 0.0
    %166 = vmatpush1.xpose.msra.mxu0 %v123
    %167 = vmatprep.subr.mxu0 0.0
    %168 = vmatpush1.xpose.msra.mxu0 %v124
    %169 = vmatprep.subr.mxu0 0.0
    %170 = vmatpush1.xpose.msra.mxu0 %v125
    %171 = vmatprep.subr.mxu0 0.0
    %172 = vmatpush1.xpose.msra.mxu0 %v126
    %173 = vmatprep.subr.mxu0 0.0
    %174 = vmatpush1.xpose.msra.mxu0 %v127
    %175 = vmatprep.subr.mxu0 0.0
    %176 = vmatpush1.xpose.msra.mxu0 %v128
    %177 = vmatprep.subr.mxu0 0.0
    %178 = vmatpush1.xpose.msra.mxu0 %v129
    %179 = vmatprep.subr.mxu0 0.0
    %180 = vmatpush1.xpose.msra.mxu0 %v130
    %181 = vmatprep.subr.mxu0 0.0
    %182 = vmatpush1.xpose.msra.mxu0 %v131
    %183 = vmatprep.subr.mxu0 0.0
    %184 = vmatpush1.xpose.msra.mxu0 %v132
    %185 = vmatprep.subr.mxu0 0.0
    %186 = vmatpush1.xpose.msra.mxu0 %v133
    %187 = vmatprep.subr.mxu0 0.0
    %188 = vmatpush1.xpose.msra.mxu0 %v134
    %189 = vmatprep.subr.mxu0 0.0
    %190 = vmatpush1.xpose.msra.mxu0 %v135
    %191 = vmatprep.subr.mxu0 0.0
    %192 = vmatpush1.xpose.msra.mxu0 %v136
    %193 = vmatprep.subr.mxu0 0.0
    %194 = vmatpush1.xpose.msra.mxu0 %v137
    %195 = vmatprep.subr.mxu0 0.0
    %196 = vmatpush1.xpose.msra.mxu0 %v138
    %197 = vmatprep.subr.mxu0 0.0
    %198 = vmatpush1.xpose.msra.mxu0 %v139
    %199 = vmatprep.subr.mxu0 0.0
    %200 = vmatpush1.xpose.msra.mxu0 %v140
    %201 = vmatprep.subr.mxu0 0.0
    %202 = vmatpush1.xpose.msra.mxu0 %v141
    %203 = vmatprep.subr.mxu0 0.0
    %204 = vmatpush1.xpose.msra.mxu0 %v142
    %205 = vmatprep.subr.mxu0 0.0
    %206 = vmatpush1.xpose.msra.mxu0 %v143
    %207 = vmatprep.subr.mxu0 0.0
    %208 = vmatpush1.xpose.msra.mxu0 %v144
    %209 = vmatprep.mubr.f32.mxu0 0.0
    %210 = vmatmul.mubr.f32.gmra.mrb[0].mxu0 %v81
    %v211 = vpop.f32.mrb[0].mxu0
    %v212 = vadd.f32 0.0, %v211
    %v213 = vpop.f32.mrb[0].mxu0
    %v214 = vadd.f32 0.0, %v213
    %215 = vmatprep.mubr.f32.mxu0 0.0
    %216 = vmatmul.mubr.f32.gmra.mrb[0].mxu0 %v82
    %v217 = vpop.f32.mrb[0].mxu0
    %v218 = vadd.f32 0.0, %v217
    %v219 = vpop.f32.mrb[0].mxu0
    %v220 = vadd.f32 0.0, %v219
    %221 = vmatprep.mubr.f32.mxu0 0.0
    %222 = vmatmul.mubr.f32.gmra.mrb[0].mxu0 %v83
    %v223 = vpop.f32.mrb[0].mxu0
    %v224 = vadd.f32 0.0, %v223
    %v225 = vpop.f32.mrb[0].mxu0
    %v226 = vadd.f32 0.0, %v225
    %227 = vmatprep.mubr.f32.mxu0 0.0
    %228 = vmatmul.mubr.f32.gmra.mrb[0].mxu0 %v84
    %v229 = vpop.f32.mrb[0].mxu0
    %v230 = vadd.f32 0.0, %v229
    %v231 = vpop.f32.mrb[0].mxu0
    %v232 = vadd.f32 0.0, %v231
    %233 = vmatprep.mubr.f32.mxu0 0.0
    %234 = vmatmul.mubr.f32.gmra.mrb[0].mxu0 %v85
    %v235 = vpop.f32.mrb[0].mxu0
    %v236 = vadd.f32 0.0, %v235
    %v237 = vpop.f32.mrb[0].mxu0
    %v238 = vadd.f32 0.0, %v237
    %239 = vmatprep.mubr.f32.mxu0 0.0
    %240 = vmatmul.mubr.f32.gmra.mrb[0].mxu0 %v86
    %v241 = vpop.f32.mrb[0].mxu0
    %v242 = vadd.f32 0.0, %v241
    %v243 = vpop.f32.mrb[0].mxu0
    %v244 = vadd.f32 0.0, %v243
    %245 = vmatprep.mubr.f32.mxu0 0.0
    %246 = vmatmul.mubr.f32.gmra.mrb[0].mxu0 %v87
    %v247 = vpop.f32.mrb[0].mxu0
    %v248 = vadd.f32 0.0, %v247
    %v249 = vpop.f32.mrb[0].mxu0
    %v250 = vadd.f32 0.0, %v249
    %251 = vmatprep.mubr.f32.mxu0 0.0
    %252 = vmatmul.mubr.f32.gmra.mrb[0].mxu0 %v88
    %v253 = vpop.f32.mrb[0].mxu0
    %v254 = vadd.f32 0.0, %v253
    %v255 = vpop.f32.mrb[0].mxu0
    %v256 = vadd.f32 0.0, %v255
    %257 = vmatprep.mubr.f32.mxu0 0.0
    %258 = vmatmul.mubr.f32.gmra.mrb[0].mxu0 %v89
    %v259 = vpop.f32.mrb[0].mxu0
    %v260 = vadd.f32 0.0, %v259
    %v261 = vpop.f32.mrb[0].mxu0
    %v262 = vadd.f32 0.0, %v261
    %263 = vmatprep.mubr.f32.mxu0 0.0
    %264 = vmatmul.mubr.f32.gmra.mrb[0].mxu0 %v90
    %v265 = vpop.f32.mrb[0].mxu0
    %v266 = vadd.f32 0.0, %v265
    %v267 = vpop.f32.mrb[0].mxu0
    %v268 = vadd.f32 0.0, %v267
    %269 = vmatprep.mubr.f32.mxu0 0.0
    %270 = vmatmul.mubr.f32.gmra.mrb[0].mxu0 %v91
    %v271 = vpop.f32.mrb[0].mxu0
    %v272 = vadd.f32 0.0, %v271
    %v273 = vpop.f32.mrb[0].mxu0
    %v274 = vadd.f32 0.0, %v273
    %275 = vmatprep.mubr.f32.mxu0 0.0
    %276 = vmatmul.mubr.f32.gmra.mrb[0].mxu0 %v92
    %v277 = vpop.f32.mrb[0].mxu0
    %v278 = vadd.f32 0.0, %v277
    %v279 = vpop.f32.mrb[0].mxu0
    %v280 = vadd.f32 0.0, %v279
    %281 = vmatprep.mubr.f32.mxu0 0.0
    %282 = vmatmul.mubr.f32.gmra.mrb[0].mxu0 %v93
    %v283 = vpop.f32.mrb[0].mxu0
    %v284 = vadd.f32 0.0, %v283
    %v285 = vpop.f32.mrb[0].mxu0
    %v286 = vadd.f32 0.0, %v285
    %287 = vmatprep.mubr.f32.mxu0 0.0
    %288 = vmatmul.mubr.f32.gmra.mrb[0].mxu0 %v94
    %v289 = vpop.f32.mrb[0].mxu0
    %v290 = vadd.f32 0.0, %v289
    %v291 = vpop.f32.mrb[0].mxu0
    %v292 = vadd.f32 0.0, %v291
    %293 = vmatprep.mubr.f32.mxu0 0.0
    %294 = vmatmul.mubr.f32.gmra.mrb[0].mxu0 %v95
    %v295 = vpop.f32.mrb[0].mxu0
    %v296 = vadd.f32 0.0, %v295
    %v297 = vpop.f32.mrb[0].mxu0
    %v298 = vadd.f32 0.0, %v297
    %299 = vmatprep.mubr.f32.mxu0 0.0
    %300 = vmatmul.mubr.f32.gmra.mrb[0].mxu0 %v96
    %v301 = vpop.f32.mrb[0].mxu0
    %v302 = vadd.f32 0.0, %v301
    %v303 = vpop.f32.mrb[0].mxu0
    %v304 = vadd.f32 0.0, %v303
    %305 = vmatprep.mubr.f32.mxu0 0.0
    %306 = vmatmul.mubr.f32.gmra.mrb[0].mxu0 %v97
    %v307 = vpop.f32.mrb[0].mxu0
    %v308 = vadd.f32 0.0, %v307
    %v309 = vpop.f32.mrb[0].mxu0
    %v310 = vadd.f32 0.0, %v309
    %311 = vmatprep.mubr.f32.mxu0 0.0
    %312 = vmatmul.mubr.f32.gmra.mrb[0].mxu0 %v98
    %v313 = vpop.f32.mrb[0].mxu0
    %v314 = vadd.f32 0.0, %v313
    %v315 = vpop.f32.mrb[0].mxu0
    %v316 = vadd.f32 0.0, %v315
    %317 = vmatprep.mubr.f32.mxu0 0.0
    %318 = vmatmul.mubr.f32.gmra.mrb[0].mxu0 %v99
    %v319 = vpop.f32.mrb[0].mxu0
    %v320 = vadd.f32 0.0, %v319
    %v321 = vpop.f32.mrb[0].mxu0
    %v322 = vadd.f32 0.0, %v321
    %323 = vmatprep.mubr.f32.mxu0 0.0
    %324 = vmatmul.mubr.f32.gmra.mrb[0].mxu0 %v100
    %v325 = vpop.f32.mrb[0].mxu0
    %v326 = vadd.f32 0.0, %v325
    %v327 = vpop.f32.mrb[0].mxu0
    %v328 = vadd.f32 0.0, %v327
    %329 = vmatprep.mubr.f32.mxu0 0.0
    %330 = vmatmul.mubr.f32.gmra.mrb[0].mxu0 %v101
    %v331 = vpop.f32.mrb[0].mxu0
    %v332 = vadd.f32 0.0, %v331
    %v333 = vpop.f32.mrb[0].mxu0
    %v334 = vadd.f32 0.0, %v333
    %335 = vmatprep.mubr.f32.mxu0 0.0
    %336 = vmatmul.mubr.f32.gmra.mrb[0].mxu0 %v102
    %v337 = vpop.f32.mrb[0].mxu0
    %v338 = vadd.f32 0.0, %v337
    %v339 = vpop.f32.mrb[0].mxu0
    %v340 = vadd.f32 0.0, %v339
    %341 = vmatprep.mubr.f32.mxu0 0.0
    %342 = vmatmul.mubr.f32.gmra.mrb[0].mxu0 %v103
    %v343 = vpop.f32.mrb[0].mxu0
    %v344 = vadd.f32 0.0, %v343
    %v345 = vpop.f32.mrb[0].mxu0
    %v346 = vadd.f32 0.0, %v345
    %347 = vmatprep.mubr.f32.mxu0 0.0
    %348 = vmatmul.mubr.f32.gmra.mrb[0].mxu0 %v104
    %v349 = vpop.f32.mrb[0].mxu0
    %v350 = vadd.f32 0.0, %v349
    %v351 = vpop.f32.mrb[0].mxu0
    %v352 = vadd.f32 0.0, %v351
    %353 = vmatprep.mubr.f32.mxu0 0.0
    %354 = vmatmul.mubr.f32.gmra.mrb[0].mxu0 %v105
    %v355 = vpop.f32.mrb[0].mxu0
    %v356 = vadd.f32 0.0, %v355
    %v357 = vpop.f32.mrb[0].mxu0
    %v358 = vadd.f32 0.0, %v357
    %359 = vmatprep.mubr.f32.mxu0 0.0
    %360 = vmatmul.mubr.f32.gmra.mrb[0].mxu0 %v106
    %v361 = vpop.f32.mrb[0].mxu0
    %v362 = vadd.f32 0.0, %v361
    %v363 = vpop.f32.mrb[0].mxu0
    %v364 = vadd.f32 0.0, %v363
    %365 = vmatprep.mubr.f32.mxu0 0.0
    %366 = vmatmul.mubr.f32.gmra.mrb[0].mxu0 %v107
    %v367 = vpop.f32.mrb[0].mxu0
    %v368 = vadd.f32 0.0, %v367
    %v369 = vpop.f32.mrb[0].mxu0
    %v370 = vadd.f32 0.0, %v369
    %371 = vmatprep.mubr.f32.mxu0 0.0
    %372 = vmatmul.mubr.f32.gmra.mrb[0].mxu0 %v108
    %v373 = vpop.f32.mrb[0].mxu0
    %v374 = vadd.f32 0.0, %v373
    %v375 = vpop.f32.mrb[0].mxu0
    %v376 = vadd.f32 0.0, %v375
    %377 = vmatprep.mubr.f32.mxu0 0.0
    %378 = vmatmul.mubr.f32.gmra.mrb[0].mxu0 %v109
    %v379 = vpop.f32.mrb[0].mxu0
    %v380 = vadd.f32 0.0, %v379
    %v381 = vpop.f32.mrb[0].mxu0
    %v382 = vadd.f32 0.0, %v381
    %383 = vmatprep.mubr.f32.mxu0 0.0
    %384 = vmatmul.mubr.f32.gmra.mrb[0].mxu0 %v110
    %v385 = vpop.f32.mrb[0].mxu0
    %v386 = vadd.f32 0.0, %v385
    %v387 = vpop.f32.mrb[0].mxu0
    %v388 = vadd.f32 0.0, %v387
    %389 = vmatprep.mubr.f32.mxu0 0.0
    %390 = vmatmul.mubr.f32.gmra.mrb[0].mxu0 %v111
    %v391 = vpop.f32.mrb[0].mxu0
    %v392 = vadd.f32 0.0, %v391
    %v393 = vpop.f32.mrb[0].mxu0
    %v394 = vadd.f32 0.0, %v393
    %395 = vmatprep.mubr.f32.mxu0 0.0
    %396 = vmatmul.mubr.f32.gmra.mrb[0].mxu0 %v112
    %v397 = vpop.f32.mrb[0].mxu0
    %v398 = vadd.f32 0.0, %v397
    %v399 = vpop.f32.mrb[0].mxu0
    %v400 = vadd.f32 0.0, %v399
    %401 = vdwg.mxu0
    %v402 = vld [vmem:[#allocation9] sm:$0xff]
    %v403 = vld [vmem:[#allocation9 + $0x8] sm:$0xff]
    %v404 = vld [vmem:[#allocation9 + $0x10] sm:$0xff]
    %v405 = vld [vmem:[#allocation9 + $0x18] sm:$0xff]
    %v406 = vld [vmem:[#allocation9 + $0x20] sm:$0xff]
    %v407 = vld [vmem:[#allocation9 + $0x28] sm:$0xff]
    %v408 = vld [vmem:[#allocation9 + $0x30] sm:$0xff]
    %v409 = vld [vmem:[#allocation9 + $0x38] sm:$0xff]
    %v410 = vld [vmem:[#allocation9 + $0x40] sm:$0xff]
    %v411 = vld [vmem:[#allocation9 + $0x48] sm:$0xff]
    %v412 = vld [vmem:[#allocation9 + $0x50] sm:$0xff]
    %v413 = vld [vmem:[#allocation9 + $0x58] sm:$0xff]
    %v414 = vld [vmem:[#allocation9 + $0x60] sm:$0xff]
    %v415 = vld [vmem:[#allocation9 + $0x68] sm:$0xff]
    %v416 = vld [vmem:[#allocation9 + $0x70] sm:$0xff]
    %v417 = vld [vmem:[#allocation9 + $0x78] sm:$0xff]
    %v418 = vunpack.c.0.s8 %v402
    %v419 = vunpack.c.0.s8 %v403
    %v420 = vunpack.c.1.s8 %v402
    %v421 = vunpack.c.1.s8 %v403
    %v422 = vunpack.c.2.s8 %v402
    %v423 = vunpack.c.2.s8 %v403
    %v424 = vunpack.c.3.s8 %v402
    %v425 = vunpack.c.3.s8 %v403
    %v426 = vunpack.c.0.s8 %v404
    %v427 = vunpack.c.0.s8 %v405
    %v428 = vunpack.c.1.s8 %v404
    %v429 = vunpack.c.1.s8 %v405
    %v430 = vunpack.c.2.s8 %v404
    %v431 = vunpack.c.2.s8 %v405
    %v432 = vunpack.c.3.s8 %v404
    %v433 = vunpack.c.3.s8 %v405
    %v434 = vunpack.c.0.s8 %v406
    %v435 = vunpack.c.0.s8 %v407
    %v436 = vunpack.c.1.s8 %v406
    %v437 = vunpack.c.1.s8 %v407
    %v438 = vunpack.c.2.s8 %v406
    %v439 = vunpack.c.2.s8 %v407
    %v440 = vunpack.c.3.s8 %v406
    %v441 = vunpack.c.3.s8 %v407
    %v442 = vunpack.c.0.s8 %v408
    %v443 = vunpack.c.0.s8 %v409
    %v444 = vunpack.c.1.s8 %v408
    %v445 = vunpack.c.1.s8 %v409
    %v446 = vunpack.c.2.s8 %v408
    %v447 = vunpack.c.2.s8 %v409
    %v448 = vunpack.c.3.s8 %v408
    %v449 = vunpack.c.3.s8 %v409
    %v450 = vunpack.c.0.s8 %v410
    %v451 = vunpack.c.0.s8 %v411
    %v452 = vunpack.c.1.s8 %v410
    %v453 = vunpack.c.1.s8 %v411
    %v454 = vunpack.c.2.s8 %v410
    %v455 = vunpack.c.2.s8 %v411
    %v456 = vunpack.c.3.s8 %v410
    %v457 = vunpack.c.3.s8 %v411
    %v458 = vunpack.c.0.s8 %v412
    %v459 = vunpack.c.0.s8 %v413
    %v460 = vunpack.c.1.s8 %v412
    %v461 = vunpack.c.1.s8 %v413
    %v462 = vunpack.c.2.s8 %v412
    %v463 = vunpack.c.2.s8 %v413
    %v464 = vunpack.c.3.s8 %v412
    %v465 = vunpack.c.3.s8 %v413
    %v466 = vunpack.c.0.s8 %v414
    %v467 = vunpack.c.0.s8 %v415
    %v468 = vunpack.c.1.s8 %v414
    %v469 = vunpack.c.1.s8 %v415
    %v470 = vunpack.c.2.s8 %v414
    %v471 = vunpack.c.2.s8 %v415
    %v472 = vunpack.c.3.s8 %v414
    %v473 = vunpack.c.3.s8 %v415
    %v474 = vunpack.c.0.s8 %v416
    %v475 = vunpack.c.0.s8 %v417
    %v476 = vunpack.c.1.s8 %v416
    %v477 = vunpack.c.1.s8 %v417
    %v478 = vunpack.c.2.s8 %v416
    %v479 = vunpack.c.2.s8 %v417
    %v480 = vunpack.c.3.s8 %v416
    %v481 = vunpack.c.3.s8 %v417
    %v482 = vcvt.s32.f32 %v418
    %v483 = vcvt.s32.f32 %v419
    %v484 = vcvt.s32.f32 %v420
    %v485 = vcvt.s32.f32 %v421
    %v486 = vcvt.s32.f32 %v422
    %v487 = vcvt.s32.f32 %v423
    %v488 = vcvt.s32.f32 %v424
    %v489 = vcvt.s32.f32 %v425
    %v490 = vcvt.s32.f32 %v426
    %v491 = vcvt.s32.f32 %v427
    %v492 = vcvt.s32.f32 %v428
    %v493 = vcvt.s32.f32 %v429
    %v494 = vcvt.s32.f32 %v430
    %v495 = vcvt.s32.f32 %v431
    %v496 = vcvt.s32.f32 %v432
    %v497 = vcvt.s32.f32 %v433
    %v498 = vcvt.s32.f32 %v434
    %v499 = vcvt.s32.f32 %v435
    %v500 = vcvt.s32.f32 %v436
    %v501 = vcvt.s32.f32 %v437
    %v502 = vcvt.s32.f32 %v438
    %v503 = vcvt.s32.f32 %v439
    %v504 = vcvt.s32.f32 %v440
    %v505 = vcvt.s32.f32 %v441
    %v506 = vcvt.s32.f32 %v442
    %v507 = vcvt.s32.f32 %v443
    %v508 = vcvt.s32.f32 %v444
    %v509 = vcvt.s32.f32 %v445
    %v510 = vcvt.s32.f32 %v446
    %v511 = vcvt.s32.f32 %v447
    %v512 = vcvt.s32.f32 %v448
    %v513 = vcvt.s32.f32 %v449
    %v514 = vcvt.s32.f32 %v450
    %v515 = vcvt.s32.f32 %v451
    %v516 = vcvt.s32.f32 %v452
    %v517 = vcvt.s32.f32 %v453
    %v518 = vcvt.s32.f32 %v454
    %v519 = vcvt.s32.f32 %v455
    %v520 = vcvt.s32.f32 %v456
    %v521 = vcvt.s32.f32 %v457
    %v522 = vcvt.s32.f32 %v458
    %v523 = vcvt.s32.f32 %v459
    %v524 = vcvt.s32.f32 %v460
    %v525 = vcvt.s32.f32 %v461
    %v526 = vcvt.s32.f32 %v462
    %v527 = vcvt.s32.f32 %v463
    %v528 = vcvt.s32.f32 %v464
    %v529 = vcvt.s32.f32 %v465
    %v530 = vcvt.s32.f32 %v466
    %v531 = vcvt.s32.f32 %v467
    %v532 = vcvt.s32.f32 %v468
    %v533 = vcvt.s32.f32 %v469
    %v534 = vcvt.s32.f32 %v470
    %v535 = vcvt.s32.f32 %v471
    %v536 = vcvt.s32.f32 %v472
    %v537 = vcvt.s32.f32 %v473
    %v538 = vcvt.s32.f32 %v474
    %v539 = vcvt.s32.f32 %v475
    %v540 = vcvt.s32.f32 %v476
    %v541 = vcvt.s32.f32 %v477
    %v542 = vcvt.s32.f32 %v478
    %v543 = vcvt.s32.f32 %v479
    %v544 = vcvt.s32.f32 %v480
    %v545 = vcvt.s32.f32 %v481
    %vm546 = vcmp.gt.f32.partialorder %v482, 0.0
    %vm547 = vcmp.gt.f32.partialorder %v483, 0.0
    %vm548 = vcmp.gt.f32.partialorder %v484, 0.0
    %vm549 = vcmp.gt.f32.partialorder %v485, 0.0
    %vm550 = vcmp.gt.f32.partialorder %v486, 0.0
    %vm551 = vcmp.gt.f32.partialorder %v487, 0.0
    %vm552 = vcmp.gt.f32.partialorder %v488, 0.0
    %vm553 = vcmp.gt.f32.partialorder %v489, 0.0
    %vm554 = vcmp.gt.f32.partialorder %v490, 0.0
    %vm555 = vcmp.gt.f32.partialorder %v491, 0.0
    %vm556 = vcmp.gt.f32.partialorder %v492, 0.0
    %vm557 = vcmp.gt.f32.partialorder %v493, 0.0
    %vm558 = vcmp.gt.f32.partialorder %v494, 0.0
    %vm559 = vcmp.gt.f32.partialorder %v495, 0.0
    %vm560 = vcmp.gt.f32.partialorder %v496, 0.0
    %vm561 = vcmp.gt.f32.partialorder %v497, 0.0
    %vm562 = vcmp.gt.f32.partialorder %v498, 0.0
    %vm563 = vcmp.gt.f32.partialorder %v499, 0.0
    %vm564 = vcmp.gt.f32.partialorder %v500, 0.0
    %vm565 = vcmp.gt.f32.partialorder %v501, 0.0
    %vm566 = vcmp.gt.f32.partialorder %v502, 0.0
    %vm567 = vcmp.gt.f32.partialorder %v503, 0.0
    %vm568 = vcmp.gt.f32.partialorder %v504, 0.0
    %vm569 = vcmp.gt.f32.partialorder %v505, 0.0
    %vm570 = vcmp.gt.f32.partialorder %v506, 0.0
    %vm571 = vcmp.gt.f32.partialorder %v507, 0.0
    %vm572 = vcmp.gt.f32.partialorder %v508, 0.0
    %vm573 = vcmp.gt.f32.partialorder %v509, 0.0
    %vm574 = vcmp.gt.f32.partialorder %v510, 0.0
    %vm575 = vcmp.gt.f32.partialorder %v511, 0.0
    %vm576 = vcmp.gt.f32.partialorder %v512, 0.0
    %vm577 = vcmp.gt.f32.partialorder %v513, 0.0
    %vm578 = vcmp.gt.f32.partialorder %v514, 0.0
    %vm579 = vcmp.gt.f32.partialorder %v515, 0.0
    %vm580 = vcmp.gt.f32.partialorder %v516, 0.0
    %vm581 = vcmp.gt.f32.partialorder %v517, 0.0
    %vm582 = vcmp.gt.f32.partialorder %v518, 0.0
    %vm583 = vcmp.gt.f32.partialorder %v519, 0.0
    %vm584 = vcmp.gt.f32.partialorder %v520, 0.0
    %vm585 = vcmp.gt.f32.partialorder %v521, 0.0
    %vm586 = vcmp.gt.f32.partialorder %v522, 0.0
    %vm587 = vcmp.gt.f32.partialorder %v523, 0.0
    %vm588 = vcmp.gt.f32.partialorder %v524, 0.0
    %vm589 = vcmp.gt.f32.partialorder %v525, 0.0
    %vm590 = vcmp.gt.f32.partialorder %v526, 0.0
    %vm591 = vcmp.gt.f32.partialorder %v527, 0.0
    %vm592 = vcmp.gt.f32.partialorder %v528, 0.0
    %vm593 = vcmp.gt.f32.partialorder %v529, 0.0
    %vm594 = vcmp.gt.f32.partialorder %v530, 0.0
    %vm595 = vcmp.gt.f32.partialorder %v531, 0.0
    %vm596 = vcmp.gt.f32.partialorder %v532, 0.0
    %vm597 = vcmp.gt.f32.partialorder %v533, 0.0
    %vm598 = vcmp.gt.f32.partialorder %v534, 0.0
    %vm599 = vcmp.gt.f32.partialorder %v535, 0.0
    %vm600 = vcmp.gt.f32.partialorder %v536, 0.0
    %vm601 = vcmp.gt.f32.partialorder %v537, 0.0
    %vm602 = vcmp.gt.f32.partialorder %v538, 0.0
    %vm603 = vcmp.gt.f32.partialorder %v539, 0.0
    %vm604 = vcmp.gt.f32.partialorder %v540, 0.0
    %vm605 = vcmp.gt.f32.partialorder %v541, 0.0
    %vm606 = vcmp.gt.f32.partialorder %v542, 0.0
    %vm607 = vcmp.gt.f32.partialorder %v543, 0.0
    %vm608 = vcmp.gt.f32.partialorder %v544, 0.0
    %vm609 = vcmp.gt.f32.partialorder %v545, 0.0
    %v610 = vstv %s80
    %v611 = vmul.f32 %v212, %v610
    %v612 = vmul.f32 %v214, %v610
    %v613 = vmul.f32 %v218, %v610
    %v614 = vmul.f32 %v220, %v610
    %v615 = vmul.f32 %v224, %v610
    %v616 = vmul.f32 %v226, %v610
    %v617 = vmul.f32 %v230, %v610
    %v618 = vmul.f32 %v232, %v610
    %v619 = vmul.f32 %v236, %v610
    %v620 = vmul.f32 %v238, %v610
    %v621 = vmul.f32 %v242, %v610
    %v622 = vmul.f32 %v244, %v610
    %v623 = vmul.f32 %v248, %v610
    %v624 = vmul.f32 %v250, %v610
    %v625 = vmul.f32 %v254, %v610
    %v626 = vmul.f32 %v256, %v610
    %v627 = vmul.f32 %v260, %v610
    %v628 = vmul.f32 %v262, %v610
    %v629 = vmul.f32 %v266, %v610
    %v630 = vmul.f32 %v268, %v610
    %v631 = vmul.f32 %v272, %v610
    %v632 = vmul.f32 %v274, %v610
    %v633 = vmul.f32 %v278, %v610
    %v634 = vmul.f32 %v280, %v610
    %v635 = vmul.f32 %v284, %v610
    %v636 = vmul.f32 %v286, %v610
    %v637 = vmul.f32 %v290, %v610
    %v638 = vmul.f32 %v292, %v610
    %v639 = vmul.f32 %v296, %v610
    %v640 = vmul.f32 %v298, %v610
    %v641 = vmul.f32 %v302, %v610
    %v642 = vmul.f32 %v304, %v610
    %v643 = vmul.f32 %v308, %v610
    %v644 = vmul.f32 %v310, %v610
    %v645 = vmul.f32 %v314, %v610
    %v646 = vmul.f32 %v316, %v610
    %v647 = vmul.f32 %v320, %v610
    %v648 = vmul.f32 %v322, %v610
    %v649 = vmul.f32 %v326, %v610
    %v650 = vmul.f32 %v328, %v610
    %v651 = vmul.f32 %v332, %v610
    %v652 = vmul.f32 %v334, %v610
    %v653 = vmul.f32 %v338, %v610
    %v654 = vmul.f32 %v340, %v610
    %v655 = vmul.f32 %v344, %v610
    %v656 = vmul.f32 %v346, %v610
    %v657 = vmul.f32 %v350, %v610
    %v658 = vmul.f32 %v352, %v610
    %v659 = vmul.f32 %v356, %v610
    %v660 = vmul.f32 %v358, %v610
    %v661 = vmul.f32 %v362, %v610
    %v662 = vmul.f32 %v364, %v610
    %v663 = vmul.f32 %v368, %v610
    %v664 = vmul.f32 %v370, %v610
    %v665 = vmul.f32 %v374, %v610
    %v666 = vmul.f32 %v376, %v610
    %v667 = vmul.f32 %v380, %v610
    %v668 = vmul.f32 %v382, %v610
    %v669 = vmul.f32 %v386, %v610
    %v670 = vmul.f32 %v388, %v610
    %v671 = vmul.f32 %v392, %v610
    %v672 = vmul.f32 %v394, %v610
    %v673 = vmul.f32 %v398, %v610
    %v674 = vmul.f32 %v400, %v610
    %v675 = vsel %vm546, %v611, -1e+30
    %v676 = vsel %vm547, %v612, -1e+30
    %v677 = vsel %vm548, %v613, -1e+30
    %v678 = vsel %vm549, %v614, -1e+30
    %v679 = vsel %vm550, %v615, -1e+30
    %v680 = vsel %vm551, %v616, -1e+30
    %v681 = vsel %vm552, %v617, -1e+30
    %v682 = vsel %vm553, %v618, -1e+30
    %v683 = vsel %vm554, %v619, -1e+30
    %v684 = vsel %vm555, %v620, -1e+30
    %v685 = vsel %vm556, %v621, -1e+30
    %v686 = vsel %vm557, %v622, -1e+30
    %v687 = vsel %vm558, %v623, -1e+30
    %v688 = vsel %vm559, %v624, -1e+30
    %v689 = vsel %vm560, %v625, -1e+30
    %v690 = vsel %vm561, %v626, -1e+30
    %v691 = vsel %vm562, %v627, -1e+30
    %v692 = vsel %vm563, %v628, -1e+30
    %v693 = vsel %vm564, %v629, -1e+30
    %v694 = vsel %vm565, %v630, -1e+30
    %v695 = vsel %vm566, %v631, -1e+30
    %v696 = vsel %vm567, %v632, -1e+30
    %v697 = vsel %vm568, %v633, -1e+30
    %v698 = vsel %vm569, %v634, -1e+30
    %v699 = vsel %vm570, %v635, -1e+30
    %v700 = vsel %vm571, %v636, -1e+30
    %v701 = vsel %vm572, %v637, -1e+30
    %v702 = vsel %vm573, %v638, -1e+30
    %v703 = vsel %vm574, %v639, -1e+30
    %v704 = vsel %vm575, %v640, -1e+30
    %v705 = vsel %vm576, %v641, -1e+30
    %v706 = vsel %vm577, %v642, -1e+30
    %v707 = vsel %vm578, %v643, -1e+30
    %v708 = vsel %vm579, %v644, -1e+30
    %v709 = vsel %vm580, %v645, -1e+30
    %v710 = vsel %vm581, %v646, -1e+30
    %v711 = vsel %vm582, %v647, -1e+30
    %v712 = vsel %vm583, %v648, -1e+30
    %v713 = vsel %vm584, %v649, -1e+30
    %v714 = vsel %vm585, %v650, -1e+30
    %v715 = vsel %vm586, %v651, -1e+30
    %v716 = vsel %vm587, %v652, -1e+30
    %v717 = vsel %vm588, %v653, -1e+30
    %v718 = vsel %vm589, %v654, -1e+30
    %v719 = vsel %vm590, %v655, -1e+30
    %v720 = vsel %vm591, %v656, -1e+30
    %v721 = vsel %vm592, %v657, -1e+30
    %v722 = vsel %vm593, %v658, -1e+30
    %v723 = vsel %vm594, %v659, -1e+30
    %v724 = vsel %vm595, %v660, -1e+30
    %v725 = vsel %vm596, %v661, -1e+30
    %v726 = vsel %vm597, %v662, -1e+30
    %v727 = vsel %vm598, %v663, -1e+30
    %v728 = vsel %vm599, %v664, -1e+30
    %v729 = vsel %vm600, %v665, -1e+30
    %v730 = vsel %vm601, %v666, -1e+30
    %v731 = vsel %vm602, %v667, -1e+30
    %v732 = vsel %vm603, %v668, -1e+30
    %v733 = vsel %vm604, %v669, -1e+30
    %v734 = vsel %vm605, %v670, -1e+30
    %v735 = vsel %vm606, %v671, -1e+30
    %v736 = vsel %vm607, %v672, -1e+30
    %v737 = vsel %vm608, %v673, -1e+30
    %v738 = vsel %vm609, %v674, -1e+30
    %v739 = vmax.f32 %v675, %v679
    %v740 = vmax.f32 %v677, %v681
    %v741 = vmax.f32 %v739, %v683
    %v742 = vmax.f32 %v740, %v685
    %v743 = vmax.f32 %v741, %v687
    %v744 = vmax.f32 %v742, %v689
    %v745 = vmax.f32 %v743, %v691
    %v746 = vmax.f32 %v744, %v693
    %v747 = vmax.f32 %v745, %v695
    %v748 = vmax.f32 %v746, %v697
    %v749 = vmax.f32 %v747, %v699
    %v750 = vmax.f32 %v748, %v701
    %v751 = vmax.f32 %v749, %v703
    %v752 = vmax.f32 %v750, %v705
    %v753 = vmax.f32 %v751, %v707
    %v754 = vmax.f32 %v752, %v709
    %v755 = vmax.f32 %v753, %v711
    %v756 = vmax.f32 %v754, %v713
    %v757 = vmax.f32 %v755, %v715
    %v758 = vmax.f32 %v756, %v717
    %v759 = vmax.f32 %v757, %v719
    %v760 = vmax.f32 %v758, %v721
    %v761 = vmax.f32 %v759, %v723
    %v762 = vmax.f32 %v760, %v725
    %v763 = vmax.f32 %v761, %v727
    %v764 = vmax.f32 %v762, %v729
    %v765 = vmax.f32 %v763, %v731
    %v766 = vmax.f32 %v764, %v733
    %v767 = vmax.f32 %v765, %v735
    %v768 = vmax.f32 %v766, %v737
    %v769 = vmax.f32 %v767, %v768
    %v770 = vrot.slane %v769, 4
    %v771 = vmax.f32 %v769, %v770
    %v772 = vrot.slane %v771, 2
    %v773 = vmax.f32 %v771, %v772
    %v774 = vrot.slane %v773, 1
    %v775 = vmax.f32 %v773, %v774
    %v776 = vmax.f32 %v676, %v680
    %v777 = vmax.f32 %v678, %v682
    %v778 = vmax.f32 %v776, %v684
    %v779 = vmax.f32 %v777, %v686
    %v780 = vmax.f32 %v778, %v688
    %v781 = vmax.f32 %v779, %v690
    %v782 = vmax.f32 %v780, %v692
    %v783 = vmax.f32 %v781, %v694
    %v784 = vmax.f32 %v782, %v696
    %v785 = vmax.f32 %v783, %v698
    %v786 = vmax.f32 %v784, %v700
    %v787 = vmax.f32 %v785, %v702
    %v788 = vmax.f32 %v786, %v704
    %v789 = vmax.f32 %v787, %v706
    %v790 = vmax.f32 %v788, %v708
    %v791 = vmax.f32 %v789, %v710
    %v792 = vmax.f32 %v790, %v712
    %v793 = vmax.f32 %v791, %v714
    %v794 = vmax.f32 %v792, %v716
    %v795 = vmax.f32 %v793, %v718
    %v796 = vmax.f32 %v794, %v720
    %v797 = vmax.f32 %v795, %v722
    %v798 = vmax.f32 %v796, %v724
    %v799 = vmax.f32 %v797, %v726
    %v800 = vmax.f32 %v798, %v728
    %v801 = vmax.f32 %v799, %v730
    %v802 = vmax.f32 %v800, %v732
    %v803 = vmax.f32 %v801, %v734
    %v804 = vmax.f32 %v802, %v736
    %v805 = vmax.f32 %v803, %v738
    %v806 = vmax.f32 %v804, %v805
    %v807 = vrot.slane %v806, 4
    %v808 = vmax.f32 %v806, %v807
    %v809 = vrot.slane %v808, 2
    %v810 = vmax.f32 %v808, %v809
    %v811 = vrot.slane %v810, 1
    %v812 = vmax.f32 %v810, %v811
    %v813 = vsub.f32 %v675, %v775
    %v814 = vsub.f32 %v676, %v812
    %v815 = vsub.f32 %v677, %v775
    %v816 = vsub.f32 %v678, %v812
    %v817 = vsub.f32 %v679, %v775
    %v818 = vsub.f32 %v680, %v812
    %v819 = vsub.f32 %v681, %v775
    %v820 = vsub.f32 %v682, %v812
    %v821 = vsub.f32 %v683, %v775
    %v822 = vsub.f32 %v684, %v812
    %v823 = vsub.f32 %v685, %v775
    %v824 = vsub.f32 %v686, %v812
    %v825 = vsub.f32 %v687, %v775
    %v826 = vsub.f32 %v688, %v812
    %v827 = vsub.f32 %v689, %v775
    %v828 = vsub.f32 %v690, %v812
    %v829 = vsub.f32 %v691, %v775
    %v830 = vsub.f32 %v692, %v812
    %v831 = vsub.f32 %v693, %v775
    %v832 = vsub.f32 %v694, %v812
    %v833 = vsub.f32 %v695, %v775
    %v834 = vsub.f32 %v696, %v812
    %v835 = vsub.f32 %v697, %v775
    %v836 = vsub.f32 %v698, %v812
    %v837 = vsub.f32 %v699, %v775
    %v838 = vsub.f32 %v700, %v812
    %v839 = vsub.f32 %v701, %v775
    %v840 = vsub.f32 %v702, %v812
    %v841 = vsub.f32 %v703, %v775
    %v842 = vsub.f32 %v704, %v812
    %v843 = vsub.f32 %v705, %v775
    %v844 = vsub.f32 %v706, %v812
    %v845 = vsub.f32 %v707, %v775
    %v846 = vsub.f32 %v708, %v812
    %v847 = vsub.f32 %v709, %v775
    %v848 = vsub.f32 %v710, %v812
    %v849 = vsub.f32 %v711, %v775
    %v850 = vsub.f32 %v712, %v812
    %v851 = vsub.f32 %v713, %v775
    %v852 = vsub.f32 %v714, %v812
    %v853 = vsub.f32 %v715, %v775
    %v854 = vsub.f32 %v716, %v812
    %v855 = vsub.f32 %v717, %v775
    %v856 = vsub.f32 %v718, %v812
    %v857 = vsub.f32 %v719, %v775
    %v858 = vsub.f32 %v720, %v812
    %v859 = vsub.f32 %v721, %v775
    %v860 = vsub.f32 %v722, %v812
    %v861 = vsub.f32 %v723, %v775
    %v862 = vsub.f32 %v724, %v812
    %v863 = vsub.f32 %v725, %v775
    %v864 = vsub.f32 %v726, %v812
    %v865 = vsub.f32 %v727, %v775
    %v866 = vsub.f32 %v728, %v812
    %v867 = vsub.f32 %v729, %v775
    %v868 = vsub.f32 %v730, %v812
    %v869 = vsub.f32 %v731, %v775
    %v870 = vsub.f32 %v732, %v812
    %v871 = vsub.f32 %v733, %v775
    %v872 = vsub.f32 %v734, %v812
    %v873 = vsub.f32 %v735, %v775
    %v874 = vsub.f32 %v736, %v812
    %v875 = vsub.f32 %v737, %v775
    %v876 = vsub.f32 %v738, %v812
    %v877 = vmul.f32 %v813, 1.442695
    %v878 = vpow.pop %v877
    %v879 = vmul.f32 %v814, 1.442695
    %v880 = vpow.pop %v879
    %v881 = vmul.f32 %v815, 1.442695
    %v882 = vpow.pop %v881
    %v883 = vmul.f32 %v816, 1.442695
    %v884 = vpow.pop %v883
    %v885 = vmul.f32 %v817, 1.442695
    %v886 = vpow.pop %v885
    %v887 = vmul.f32 %v818, 1.442695
    %v888 = vpow.pop %v887
    %v889 = vmul.f32 %v819, 1.442695
    %v890 = vpow.pop %v889
    %v891 = vmul.f32 %v820, 1.442695
    %v892 = vpow.pop %v891
    %v893 = vmul.f32 %v821, 1.442695
    %v894 = vpow.pop %v893
    %v895 = vmul.f32 %v822, 1.442695
    %v896 = vpow.pop %v895
    %v897 = vmul.f32 %v823, 1.442695
    %v898 = vpow.pop %v897
    %v899 = vmul.f32 %v824, 1.442695
    %v900 = vpow.pop %v899
    %v901 = vmul.f32 %v825, 1.442695
    %v902 = vpow.pop %v901
    %v903 = vmul.f32 %v826, 1.442695
    %v904 = vpow.pop %v903
    %v905 = vmul.f32 %v827, 1.442695
    %v906 = vpow.pop %v905
    %v907 = vmul.f32 %v828, 1.442695
    %v908 = vpow.pop %v907
    %v909 = vmul.f32 %v829, 1.442695
    %v910 = vpow.pop %v909
    %v911 = vmul.f32 %v830, 1.442695
    %v912 = vpow.pop %v911
    %v913 = vmul.f32 %v831, 1.442695
    %v914 = vpow.pop %v913
    %v915 = vmul.f32 %v832, 1.442695
    %v916 = vpow.pop %v915
    %v917 = vmul.f32 %v833, 1.442695
    %v918 = vpow.pop %v917
    %v919 = vmul.f32 %v834, 1.442695
    %v920 = vpow.pop %v919
    %v921 = vmul.f32 %v835, 1.442695
    %v922 = vpow.pop %v921
    %v923 = vmul.f32 %v836, 1.442695
    %v924 = vpow.pop %v923
    %v925 = vmul.f32 %v837, 1.442695
    %v926 = vpow.pop %v925
    %v927 = vmul.f32 %v838, 1.442695
    %v928 = vpow.pop %v927
    %v929 = vmul.f32 %v839, 1.442695
    %v930 = vpow.pop %v929
    %v931 = vmul.f32 %v840, 1.442695
    %v932 = vpow.pop %v931
    %v933 = vmul.f32 %v841, 1.442695
    %v934 = vpow.pop %v933
    %v935 = vmul.f32 %v842, 1.442695
    %v936 = vpow.pop %v935
    %v937 = vmul.f32 %v843, 1.442695
    %v938 = vpow.pop %v937
    %v939 = vmul.f32 %v844, 1.442695
    %v940 = vpow.pop %v939
    %v941 = vmul.f32 %v845, 1.442695
    %v942 = vpow.pop %v941
    %v943 = vmul.f32 %v846, 1.442695
    %v944 = vpow.pop %v943
    %v945 = vmul.f32 %v847, 1.442695
    %v946 = vpow.pop %v945
    %v947 = vmul.f32 %v848, 1.442695
    %v948 = vpow.pop %v947
    %v949 = vmul.f32 %v849, 1.442695
    %v950 = vpow.pop %v949
    %v951 = vmul.f32 %v850, 1.442695
    %v952 = vpow.pop %v951
    %v953 = vmul.f32 %v851, 1.442695
    %v954 = vpow.pop %v953
    %v955 = vmul.f32 %v852, 1.442695
    %v956 = vpow.pop %v955
    %v957 = vmul.f32 %v853, 1.442695
    %v958 = vpow.pop %v957
    %v959 = vmul.f32 %v854, 1.442695
    %v960 = vpow.pop %v959
    %v961 = vmul.f32 %v855, 1.442695
    %v962 = vpow.pop %v961
    %v963 = vmul.f32 %v856, 1.442695
    %v964 = vpow.pop %v963
    %v965 = vmul.f32 %v857, 1.442695
    %v966 = vpow.pop %v965
    %v967 = vmul.f32 %v858, 1.442695
    %v968 = vpow.pop %v967
    %v969 = vmul.f32 %v859, 1.442695
    %v970 = vpow.pop %v969
    %v971 = vmul.f32 %v860, 1.442695
    %v972 = vpow.pop %v971
    %v973 = vmul.f32 %v861, 1.442695
    %v974 = vpow.pop %v973
    %v975 = vmul.f32 %v862, 1.442695
    %v976 = vpow.pop %v975
    %v977 = vmul.f32 %v863, 1.442695
    %v978 = vpow.pop %v977
    %v979 = vmul.f32 %v864, 1.442695
    %v980 = vpow.pop %v979
    %v981 = vmul.f32 %v865, 1.442695
    %v982 = vpow.pop %v981
    %v983 = vmul.f32 %v866, 1.442695
    %v984 = vpow.pop %v983
    %v985 = vmul.f32 %v867, 1.442695
    %v986 = vpow.pop %v985
    %v987 = vmul.f32 %v868, 1.442695
    %v988 = vpow.pop %v987
    %v989 = vmul.f32 %v869, 1.442695
    %v990 = vpow.pop %v989
    %v991 = vmul.f32 %v870, 1.442695
    %v992 = vpow.pop %v991
    %v993 = vmul.f32 %v871, 1.442695
    %v994 = vpow.pop %v993
    %v995 = vmul.f32 %v872, 1.442695
    %v996 = vpow.pop %v995
    %v997 = vmul.f32 %v873, 1.442695
    %v998 = vpow.pop %v997
    %v999 = vmul.f32 %v874, 1.442695
    %v1000 = vpow.pop %v999
    %v1001 = vmul.f32 %v875, 1.442695
    %v1002 = vpow.pop %v1001
    %v1003 = vmul.f32 %v876, 1.442695
    %v1004 = vpow.pop %v1003
    %v1005 = vmul.f32 %v878, %v482
    %v1006 = vmul.f32 %v880, %v483
    %v1007 = vmul.f32 %v882, %v484
    %v1008 = vmul.f32 %v884, %v485
    %v1009 = vmul.f32 %v886, %v486
    %v1010 = vmul.f32 %v888, %v487
    %v1011 = vmul.f32 %v890, %v488
    %v1012 = vmul.f32 %v892, %v489
    %v1013 = vmul.f32 %v894, %v490
    %v1014 = vmul.f32 %v896, %v491
    %v1015 = vmul.f32 %v898, %v492
    %v1016 = vmul.f32 %v900, %v493
    %v1017 = vmul.f32 %v902, %v494
    %v1018 = vmul.f32 %v904, %v495
    %v1019 = vmul.f32 %v906, %v496
    %v1020 = vmul.f32 %v908, %v497
    %v1021 = vmul.f32 %v910, %v498
    %v1022 = vmul.f32 %v912, %v499
    %v1023 = vmul.f32 %v914, %v500
    %v1024 = vmul.f32 %v916, %v501
    %v1025 = vmul.f32 %v918, %v502
    %v1026 = vmul.f32 %v920, %v503
    %v1027 = vmul.f32 %v922, %v504
    %v1028 = vmul.f32 %v924, %v505
    %v1029 = vmul.f32 %v926, %v506
    %v1030 = vmul.f32 %v928, %v507
    %v1031 = vmul.f32 %v930, %v508
    %v1032 = vmul.f32 %v932, %v509
    %v1033 = vmul.f32 %v934, %v510
    %v1034 = vmul.f32 %v936, %v511
    %v1035 = vmul.f32 %v938, %v512
    %v1036 = vmul.f32 %v940, %v513
    %v1037 = vmul.f32 %v942, %v514
    %v1038 = vmul.f32 %v944, %v515
    %v1039 = vmul.f32 %v946, %v516
    %v1040 = vmul.f32 %v948, %v517
    %v1041 = vmul.f32 %v950, %v518
    %v1042 = vmul.f32 %v952, %v519
    %v1043 = vmul.f32 %v954, %v520
    %v1044 = vmul.f32 %v956, %v521
    %v1045 = vmul.f32 %v958, %v522
    %v1046 = vmul.f32 %v960, %v523
    %v1047 = vmul.f32 %v962, %v524
    %v1048 = vmul.f32 %v964, %v525
    %v1049 = vmul.f32 %v966, %v526
    %v1050 = vmul.f32 %v968, %v527
    %v1051 = vmul.f32 %v970, %v528
    %v1052 = vmul.f32 %v972, %v529
    %v1053 = vmul.f32 %v974, %v530
    %v1054 = vmul.f32 %v976, %v531
    %v1055 = vmul.f32 %v978, %v532
    %v1056 = vmul.f32 %v980, %v533
    %v1057 = vmul.f32 %v982, %v534
    %v1058 = vmul.f32 %v984, %v535
    %v1059 = vmul.f32 %v986, %v536
    %v1060 = vmul.f32 %v988, %v537
    %v1061 = vmul.f32 %v990, %v538
    %v1062 = vmul.f32 %v992, %v539
    %v1063 = vmul.f32 %v994, %v540
    %v1064 = vmul.f32 %v996, %v541
    %v1065 = vmul.f32 %v998, %v542
    %v1066 = vmul.f32 %v1000, %v543
    %v1067 = vmul.f32 %v1002, %v544
    %v1068 = vmul.f32 %v1004, %v545
    %v1069 = vadd.f32 %v1005, %v1007
    %v1070 = vadd.f32 %v1069, %v1009
    %v1071 = vadd.f32 %v1070, %v1011
    %v1072 = vadd.f32 %v1071, %v1013
    %v1073 = vadd.f32 %v1072, %v1015
    %v1074 = vadd.f32 %v1073, %v1017
    %v1075 = vadd.f32 %v1074, %v1019
    %v1076 = vadd.f32 %v1075, %v1021
    %v1077 = vadd.f32 %v1076, %v1023
    %v1078 = vadd.f32 %v1077, %v1025
    %v1079 = vadd.f32 %v1078, %v1027
    %v1080 = vadd.f32 %v1079, %v1029
    %v1081 = vadd.f32 %v1080, %v1031
    %v1082 = vadd.f32 %v1081, %v1033
    %v1083 = vadd.f32 %v1082, %v1035
    %v1084 = vadd.f32 %v1083, %v1037
    %v1085 = vadd.f32 %v1084, %v1039
    %v1086 = vadd.f32 %v1085, %v1041
    %v1087 = vadd.f32 %v1086, %v1043
    %v1088 = vadd.f32 %v1087, %v1045
    %v1089 = vadd.f32 %v1088, %v1047
    %v1090 = vadd.f32 %v1089, %v1049
    %v1091 = vadd.f32 %v1090, %v1051
    %v1092 = vadd.f32 %v1091, %v1053
    %v1093 = vadd.f32 %v1092, %v1055
    %v1094 = vadd.f32 %v1093, %v1057
    %v1095 = vadd.f32 %v1094, %v1059
    %v1096 = vadd.f32 %v1095, %v1061
    %v1097 = vadd.f32 %v1096, %v1063
    %v1098 = vadd.f32 %v1097, %v1065
    %v1099 = vadd.f32 %v1098, %v1067
    %v1100 = vrot.slane %v1099, 4
    %v1101 = vadd.f32 %v1099, %v1100
    %v1102 = vrot.slane %v1101, 2
    %v1103 = vadd.f32 %v1101, %v1102
    %v1104 = vrot.slane %v1103, 1
    %v1105 = vadd.f32 %v1103, %v1104
    %v1106 = vadd.f32 %v1006, %v1008
    %v1107 = vadd.f32 %v1106, %v1010
    %v1108 = vadd.f32 %v1107, %v1012
    %v1109 = vadd.f32 %v1108, %v1014
    %v1110 = vadd.f32 %v1109, %v1016
    %v1111 = vadd.f32 %v1110, %v1018
    %v1112 = vadd.f32 %v1111, %v1020
    %v1113 = vadd.f32 %v1112, %v1022
    %v1114 = vadd.f32 %v1113, %v1024
    %v1115 = vadd.f32 %v1114, %v1026
    %v1116 = vadd.f32 %v1115, %v1028
    %v1117 = vadd.f32 %v1116, %v1030
    %v1118 = vadd.f32 %v1117, %v1032
    %v1119 = vadd.f32 %v1118, %v1034
    %v1120 = vadd.f32 %v1119, %v1036
    %v1121 = vadd.f32 %v1120, %v1038
    %v1122 = vadd.f32 %v1121, %v1040
    %v1123 = vadd.f32 %v1122, %v1042
    %v1124 = vadd.f32 %v1123, %v1044
    %v1125 = vadd.f32 %v1124, %v1046
    %v1126 = vadd.f32 %v1125, %v1048
    %v1127 = vadd.f32 %v1126, %v1050
    %v1128 = vadd.f32 %v1127, %v1052
    %v1129 = vadd.f32 %v1128, %v1054
    %v1130 = vadd.f32 %v1129, %v1056
    %v1131 = vadd.f32 %v1130, %v1058
    %v1132 = vadd.f32 %v1131, %v1060
    %v1133 = vadd.f32 %v1132, %v1062
    %v1134 = vadd.f32 %v1133, %v1064
    %v1135 = vadd.f32 %v1134, %v1066
    %v1136 = vadd.f32 %v1135, %v1068
    %v1137 = vrot.slane %v1136, 4
    %v1138 = vadd.f32 %v1136, %v1137
    %v1139 = vrot.slane %v1138, 2
    %v1140 = vadd.f32 %v1138, %v1139
    %v1141 = vrot.slane %v1140, 1
    %v1142 = vadd.f32 %v1140, %v1141
    %vm1143 = vcmp.gt.f32.partialorder %v1105, 0.0
    %vm1144 = vcmp.gt.f32.partialorder %v1142, 0.0
    %v1145 = vrcp.pop %v1105
    %v1146 = vrcp.pop %v1142
    %v1147 = vsel %vm1143, %v1145, 0.0
    %v1148 = vsel %vm1144, %v1146, 0.0
    %v1149 = vmul.f32 %v1005, %v1147
    %v1150 = vmul.f32 %v1006, %v1148
    %v1151 = vmul.f32 %v1007, %v1147
    %v1152 = vmul.f32 %v1008, %v1148
    %v1153 = vmul.f32 %v1009, %v1147
    %v1154 = vmul.f32 %v1010, %v1148
    %v1155 = vmul.f32 %v1011, %v1147
    %v1156 = vmul.f32 %v1012, %v1148
    %v1157 = vmul.f32 %v1013, %v1147
    %v1158 = vmul.f32 %v1014, %v1148
    %v1159 = vmul.f32 %v1015, %v1147
    %v1160 = vmul.f32 %v1016, %v1148
    %v1161 = vmul.f32 %v1017, %v1147
    %v1162 = vmul.f32 %v1018, %v1148
    %v1163 = vmul.f32 %v1019, %v1147
    %v1164 = vmul.f32 %v1020, %v1148
    %v1165 = vmul.f32 %v1021, %v1147
    %v1166 = vmul.f32 %v1022, %v1148
    %v1167 = vmul.f32 %v1023, %v1147
    %v1168 = vmul.f32 %v1024, %v1148
    %v1169 = vmul.f32 %v1025, %v1147
    %v1170 = vmul.f32 %v1026, %v1148
    %v1171 = vmul.f32 %v1027, %v1147
    %v1172 = vmul.f32 %v1028, %v1148
    %v1173 = vmul.f32 %v1029, %v1147
    %v1174 = vmul.f32 %v1030, %v1148
    %v1175 = vmul.f32 %v1031, %v1147
    %v1176 = vmul.f32 %v1032, %v1148
    %v1177 = vmul.f32 %v1033, %v1147
    %v1178 = vmul.f32 %v1034, %v1148
    %v1179 = vmul.f32 %v1035, %v1147
    %v1180 = vmul.f32 %v1036, %v1148
    %v1181 = vmul.f32 %v1037, %v1147
    %v1182 = vmul.f32 %v1038, %v1148
    %v1183 = vmul.f32 %v1039, %v1147
    %v1184 = vmul.f32 %v1040, %v1148
    %v1185 = vmul.f32 %v1041, %v1147
    %v1186 = vmul.f32 %v1042, %v1148
    %v1187 = vmul.f32 %v1043, %v1147
    %v1188 = vmul.f32 %v1044, %v1148
    %v1189 = vmul.f32 %v1045, %v1147
    %v1190 = vmul.f32 %v1046, %v1148
    %v1191 = vmul.f32 %v1047, %v1147
    %v1192 = vmul.f32 %v1048, %v1148
    %v1193 = vmul.f32 %v1049, %v1147
    %v1194 = vmul.f32 %v1050, %v1148
    %v1195 = vmul.f32 %v1051, %v1147
    %v1196 = vmul.f32 %v1052, %v1148
    %v1197 = vmul.f32 %v1053, %v1147
    %v1198 = vmul.f32 %v1054, %v1148
    %v1199 = vmul.f32 %v1055, %v1147
    %v1200 = vmul.f32 %v1056, %v1148
    %v1201 = vmul.f32 %v1057, %v1147
    %v1202 = vmul.f32 %v1058, %v1148
    %v1203 = vmul.f32 %v1059, %v1147
    %v1204 = vmul.f32 %v1060, %v1148
    %v1205 = vmul.f32 %v1061, %v1147
    %v1206 = vmul.f32 %v1062, %v1148
    %v1207 = vmul.f32 %v1063, %v1147
    %v1208 = vmul.f32 %v1064, %v1148
    %v1209 = vmul.f32 %v1065, %v1147
    %v1210 = vmul.f32 %v1066, %v1148
    %v1211 = vmul.f32 %v1067, %v1147
    %v1212 = vmul.f32 %v1068, %v1148
    %1213 = vst [vmem:[#allocation11] sm:$0xff] %v1149
    %1214 = vst [vmem:[#allocation11 + $0x8] sm:$0xff] %v1150
    %1215 = vst [vmem:[#allocation11 + $0x10] sm:$0xff] %v1151
    %1216 = vst [vmem:[#allocation11 + $0x18] sm:$0xff] %v1152
    %1217 = vst [vmem:[#allocation11 + $0x20] sm:$0xff] %v1153
    %1218 = vst [vmem:[#allocation11 + $0x28] sm:$0xff] %v1154
    %1219 = vst [vmem:[#allocation11 + $0x30] sm:$0xff] %v1155
    %1220 = vst [vmem:[#allocation11 + $0x38] sm:$0xff] %v1156
    %1221 = vst [vmem:[#allocation11 + $0x40] sm:$0xff] %v1157
    %1222 = vst [vmem:[#allocation11 + $0x48] sm:$0xff] %v1158
    %1223 = vst [vmem:[#allocation11 + $0x50] sm:$0xff] %v1159
    %1224 = vst [vmem:[#allocation11 + $0x58] sm:$0xff] %v1160
    %1225 = vst [vmem:[#allocation11 + $0x60] sm:$0xff] %v1161
    %1226 = vst [vmem:[#allocation11 + $0x68] sm:$0xff] %v1162
    %1227 = vst [vmem:[#allocation11 + $0x70] sm:$0xff] %v1163
    %1228 = vst [vmem:[#allocation11 + $0x78] sm:$0xff] %v1164
    %1229 = vst [vmem:[#allocation11 + $0x80] sm:$0xff] %v1165
    %1230 = vst [vmem:[#allocation11 + $0x88] sm:$0xff] %v1166
    %1231 = vst [vmem:[#allocation11 + $0x90] sm:$0xff] %v1167
    %1232 = vst [vmem:[#allocation11 + $0x98] sm:$0xff] %v1168
    %1233 = vst [vmem:[#allocation11 + $0xa0] sm:$0xff] %v1169
    %1234 = vst [vmem:[#allocation11 + $0xa8] sm:$0xff] %v1170
    %1235 = vst [vmem:[#allocation11 + $0xb0] sm:$0xff] %v1171
    %1236 = vst [vmem:[#allocation11 + $0xb8] sm:$0xff] %v1172
    %1237 = vst [vmem:[#allocation11 + $0xc0] sm:$0xff] %v1173
    %1238 = vst [vmem:[#allocation11 + $0xc8] sm:$0xff] %v1174
    %1239 = vst [vmem:[#allocation11 + $0xd0] sm:$0xff] %v1175
    %1240 = vst [vmem:[#allocation11 + $0xd8] sm:$0xff] %v1176
    %1241 = vst [vmem:[#allocation11 + $0xe0] sm:$0xff] %v1177
    %1242 = vst [vmem:[#allocation11 + $0xe8] sm:$0xff] %v1178
    %1243 = vst [vmem:[#allocation11 + $0xf0] sm:$0xff] %v1179
    %1244 = vst [vmem:[#allocation11 + $0xf8] sm:$0xff] %v1180
    %1245 = vst [vmem:[#allocation11 + $0x100] sm:$0xff] %v1181
    %1246 = vst [vmem:[#allocation11 + $0x108] sm:$0xff] %v1182
    %1247 = vst [vmem:[#allocation11 + $0x110] sm:$0xff] %v1183
    %1248 = vst [vmem:[#allocation11 + $0x118] sm:$0xff] %v1184
    %1249 = vst [vmem:[#allocation11 + $0x120] sm:$0xff] %v1185
    %1250 = vst [vmem:[#allocation11 + $0x128] sm:$0xff] %v1186
    %1251 = vst [vmem:[#allocation11 + $0x130] sm:$0xff] %v1187
    %1252 = vst [vmem:[#allocation11 + $0x138] sm:$0xff] %v1188
    %1253 = vst [vmem:[#allocation11 + $0x140] sm:$0xff] %v1189
    %1254 = vst [vmem:[#allocation11 + $0x148] sm:$0xff] %v1190
    %1255 = vst [vmem:[#allocation11 + $0x150] sm:$0xff] %v1191
    %1256 = vst [vmem:[#allocation11 + $0x158] sm:$0xff] %v1192
    %1257 = vst [vmem:[#allocation11 + $0x160] sm:$0xff] %v1193
    %1258 = vst [vmem:[#allocation11 + $0x168] sm:$0xff] %v1194
    %1259 = vst [vmem:[#allocation11 + $0x170] sm:$0xff] %v1195
    %1260 = vst [vmem:[#allocation11 + $0x178] sm:$0xff] %v1196
    %1261 = vst [vmem:[#allocation11 + $0x180] sm:$0xff] %v1197
    %1262 = vst [vmem:[#allocation11 + $0x188] sm:$0xff] %v1198
    %1263 = vst [vmem:[#allocation11 + $0x190] sm:$0xff] %v1199
    %1264 = vst [vmem:[#allocation11 + $0x198] sm:$0xff] %v1200
    %1265 = vst [vmem:[#allocation11 + $0x1a0] sm:$0xff] %v1201
    %1266 = vst [vmem:[#allocation11 + $0x1a8] sm:$0xff] %v1202
    %1267 = vst [vmem:[#allocation11 + $0x1b0] sm:$0xff] %v1203
    %1268 = vst [vmem:[#allocation11 + $0x1b8] sm:$0xff] %v1204
    %1269 = vst [vmem:[#allocation11 + $0x1c0] sm:$0xff] %v1205
    %1270 = vst [vmem:[#allocation11 + $0x1c8] sm:$0xff] %v1206
    %1271 = vst [vmem:[#allocation11 + $0x1d0] sm:$0xff] %v1207
    %1272 = vst [vmem:[#allocation11 + $0x1d8] sm:$0xff] %v1208
    %1273 = vst [vmem:[#allocation11 + $0x1e0] sm:$0xff] %v1209
    %1274 = vst [vmem:[#allocation11 + $0x1e8] sm:$0xff] %v1210
    %1275 = vst [vmem:[#allocation11 + $0x1f0] sm:$0xff] %v1211
    %1276 = vst [vmem:[#allocation11 + $0x1f8] sm:$0xff] %v1212
    %v1277 = vld [vmem:[#allocation8] sm:$0xff]
    %v1278 = vld [vmem:[#allocation8 + $0x8] sm:$0xff]
    %v1279 = vld [vmem:[#allocation8 + $0x10] sm:$0xff]
    %v1280 = vld [vmem:[#allocation8 + $0x18] sm:$0xff]
    %v1281 = vld [vmem:[#allocation8 + $0x20] sm:$0xff]
    %v1282 = vld [vmem:[#allocation8 + $0x28] sm:$0xff]
    %v1283 = vld [vmem:[#allocation8 + $0x30] sm:$0xff]
    %v1284 = vld [vmem:[#allocation8 + $0x38] sm:$0xff]
    %v1285 = vld [vmem:[#allocation8 + $0x40] sm:$0xff]
    %v1286 = vld [vmem:[#allocation8 + $0x48] sm:$0xff]
    %v1287 = vld [vmem:[#allocation8 + $0x50] sm:$0xff]
    %v1288 = vld [vmem:[#allocation8 + $0x58] sm:$0xff]
    %v1289 = vld [vmem:[#allocation8 + $0x60] sm:$0xff]
    %v1290 = vld [vmem:[#allocation8 + $0x68] sm:$0xff]
    %v1291 = vld [vmem:[#allocation8 + $0x70] sm:$0xff]
    %v1292 = vld [vmem:[#allocation8 + $0x78] sm:$0xff]
    %v1293 = vld [vmem:[#allocation8 + $0x80] sm:$0xff]
    %v1294 = vld [vmem:[#allocation8 + $0x88] sm:$0xff]
    %v1295 = vld [vmem:[#allocation8 + $0x90] sm:$0xff]
    %v1296 = vld [vmem:[#allocation8 + $0x98] sm:$0xff]
    %v1297 = vld [vmem:[#allocation8 + $0xa0] sm:$0xff]
    %v1298 = vld [vmem:[#allocation8 + $0xa8] sm:$0xff]
    %v1299 = vld [vmem:[#allocation8 + $0xb0] sm:$0xff]
    %v1300 = vld [vmem:[#allocation8 + $0xb8] sm:$0xff]
    %v1301 = vld [vmem:[#allocation8 + $0xc0] sm:$0xff]
    %v1302 = vld [vmem:[#allocation8 + $0xc8] sm:$0xff]
    %v1303 = vld [vmem:[#allocation8 + $0xd0] sm:$0xff]
    %v1304 = vld [vmem:[#allocation8 + $0xd8] sm:$0xff]
    %v1305 = vld [vmem:[#allocation8 + $0xe0] sm:$0xff]
    %v1306 = vld [vmem:[#allocation8 + $0xe8] sm:$0xff]
    %v1307 = vld [vmem:[#allocation8 + $0xf0] sm:$0xff]
    %v1308 = vld [vmem:[#allocation8 + $0xf8] sm:$0xff]
    %1309 = vxpose.xlu0.b32.start [1/16] %v1149, 128
    %1310 = vxpose.xlu0.b32.cont [2/16] %v1151, 128
    %1311 = vxpose.xlu0.b32.cont [3/16] %v1153, 128
    %1312 = vxpose.xlu0.b32.cont [4/16] %v1155, 128
    %1313 = vxpose.xlu0.b32.cont [5/16] %v1157, 128
    %1314 = vxpose.xlu0.b32.cont [6/16] %v1159, 128
    %1315 = vxpose.xlu0.b32.cont [7/16] %v1161, 128
    %1316 = vxpose.xlu0.b32.cont [8/16] %v1163, 128
    %1317 = vxpose.xlu0.b32.cont [9/16] %v1165, 128
    %1318 = vxpose.xlu0.b32.cont [10/16] %v1167, 128
    %1319 = vxpose.xlu0.b32.cont [11/16] %v1169, 128
    %1320 = vxpose.xlu0.b32.cont [12/16] %v1171, 128
    %1321 = vxpose.xlu0.b32.cont [13/16] %v1173, 128
    %1322 = vxpose.xlu0.b32.cont [14/16] %v1175, 128
    %1323 = vxpose.xlu0.b32.cont [15/16] %v1177, 128
    %1324 = vxpose.xlu0.b32.end [16/16] %v1179, 128
    %v1325 = vpop.trf.xlu0
    %v1326 = vpop.trf.xlu0
    %v1327 = vpop.trf.xlu0
    %v1328 = vpop.trf.xlu0
    %v1329 = vpop.trf.xlu0
    %v1330 = vpop.trf.xlu0
    %v1331 = vpop.trf.xlu0
    %v1332 = vpop.trf.xlu0
    %v1333 = vpop.trf.xlu0
    %v1334 = vpop.trf.xlu0
    %v1335 = vpop.trf.xlu0
    %v1336 = vpop.trf.xlu0
    %v1337 = vpop.trf.xlu0
    %v1338 = vpop.trf.xlu0
    %v1339 = vpop.trf.xlu0
    %v1340 = vpop.trf.xlu0
    %1341 = vxpose.xlu0.b32.start [1/16] %v1150, 128
    %1342 = vxpose.xlu0.b32.cont [2/16] %v1152, 128
    %1343 = vxpose.xlu0.b32.cont [3/16] %v1154, 128
    %1344 = vxpose.xlu0.b32.cont [4/16] %v1156, 128
    %1345 = vxpose.xlu0.b32.cont [5/16] %v1158, 128
    %1346 = vxpose.xlu0.b32.cont [6/16] %v1160, 128
    %1347 = vxpose.xlu0.b32.cont [7/16] %v1162, 128
    %1348 = vxpose.xlu0.b32.cont [8/16] %v1164, 128
    %1349 = vxpose.xlu0.b32.cont [9/16] %v1166, 128
    %1350 = vxpose.xlu0.b32.cont [10/16] %v1168, 128
    %1351 = vxpose.xlu0.b32.cont [11/16] %v1170, 128
    %1352 = vxpose.xlu0.b32.cont [12/16] %v1172, 128
    %1353 = vxpose.xlu0.b32.cont [13/16] %v1174, 128
    %1354 = vxpose.xlu0.b32.cont [14/16] %v1176, 128
    %1355 = vxpose.xlu0.b32.cont [15/16] %v1178, 128
    %1356 = vxpose.xlu0.b32.end [16/16] %v1180, 128
    %v1357 = vpop.trf.xlu0
    %v1358 = vpop.trf.xlu0
    %v1359 = vpop.trf.xlu0
    %v1360 = vpop.trf.xlu0
    %v1361 = vpop.trf.xlu0
    %v1362 = vpop.trf.xlu0
    %v1363 = vpop.trf.xlu0
    %v1364 = vpop.trf.xlu0
    %v1365 = vpop.trf.xlu0
    %v1366 = vpop.trf.xlu0
    %v1367 = vpop.trf.xlu0
    %v1368 = vpop.trf.xlu0
    %v1369 = vpop.trf.xlu0
    %v1370 = vpop.trf.xlu0
    %v1371 = vpop.trf.xlu0
    %v1372 = vpop.trf.xlu0
    %1373 = vxpose.xlu0.b32.start [1/16] %v1181, 128
    %1374 = vxpose.xlu0.b32.cont [2/16] %v1183, 128
    %1375 = vxpose.xlu0.b32.cont [3/16] %v1185, 128
    %1376 = vxpose.xlu0.b32.cont [4/16] %v1187, 128
    %1377 = vxpose.xlu0.b32.cont [5/16] %v1189, 128
    %1378 = vxpose.xlu0.b32.cont [6/16] %v1191, 128
    %1379 = vxpose.xlu0.b32.cont [7/16] %v1193, 128
    %1380 = vxpose.xlu0.b32.cont [8/16] %v1195, 128
    %1381 = vxpose.xlu0.b32.cont [9/16] %v1197, 128
    %1382 = vxpose.xlu0.b32.cont [10/16] %v1199, 128
    %1383 = vxpose.xlu0.b32.cont [11/16] %v1201, 128
    %1384 = vxpose.xlu0.b32.cont [12/16] %v1203, 128
    %1385 = vxpose.xlu0.b32.cont [13/16] %v1205, 128
    %1386 = vxpose.xlu0.b32.cont [14/16] %v1207, 128
    %1387 = vxpose.xlu0.b32.cont [15/16] %v1209, 128
    %1388 = vxpose.xlu0.b32.end [16/16] %v1211, 128
    %v1389 = vpop.trf.xlu0
    %v1390 = vpop.trf.xlu0
    %v1391 = vpop.trf.xlu0
    %v1392 = vpop.trf.xlu0
    %v1393 = vpop.trf.xlu0
    %v1394 = vpop.trf.xlu0
    %v1395 = vpop.trf.xlu0
    %v1396 = vpop.trf.xlu0
    %v1397 = vpop.trf.xlu0
    %v1398 = vpop.trf.xlu0
    %v1399 = vpop.trf.xlu0
    %v1400 = vpop.trf.xlu0
    %v1401 = vpop.trf.xlu0
    %v1402 = vpop.trf.xlu0
    %v1403 = vpop.trf.xlu0
    %v1404 = vpop.trf.xlu0
    %1405 = vxpose.xlu0.b32.start [1/16] %v1182, 128
    %1406 = vxpose.xlu0.b32.cont [2/16] %v1184, 128
    %1407 = vxpose.xlu0.b32.cont [3/16] %v1186, 128
    %1408 = vxpose.xlu0.b32.cont [4/16] %v1188, 128
    %1409 = vxpose.xlu0.b32.cont [5/16] %v1190, 128
    %1410 = vxpose.xlu0.b32.cont [6/16] %v1192, 128
    %1411 = vxpose.xlu0.b32.cont [7/16] %v1194, 128
    %1412 = vxpose.xlu0.b32.cont [8/16] %v1196, 128
    %1413 = vxpose.xlu0.b32.cont [9/16] %v1198, 128
    %1414 = vxpose.xlu0.b32.cont [10/16] %v1200, 128
    %1415 = vxpose.xlu0.b32.cont [11/16] %v1202, 128
    %1416 = vxpose.xlu0.b32.cont [12/16] %v1204, 128
    %1417 = vxpose.xlu0.b32.cont [13/16] %v1206, 128
    %1418 = vxpose.xlu0.b32.cont [14/16] %v1208, 128
    %1419 = vxpose.xlu0.b32.cont [15/16] %v1210, 128
    %1420 = vxpose.xlu0.b32.end [16/16] %v1212, 128
    %v1421 = vpop.trf.xlu0
    %v1422 = vpop.trf.xlu0
    %v1423 = vpop.trf.xlu0
    %v1424 = vpop.trf.xlu0
    %v1425 = vpop.trf.xlu0
    %v1426 = vpop.trf.xlu0
    %v1427 = vpop.trf.xlu0
    %v1428 = vpop.trf.xlu0
    %v1429 = vpop.trf.xlu0
    %v1430 = vpop.trf.xlu0
    %v1431 = vpop.trf.xlu0
    %v1432 = vpop.trf.xlu0
    %v1433 = vpop.trf.xlu0
    %v1434 = vpop.trf.xlu0
    %v1435 = vpop.trf.xlu0
    %v1436 = vpop.trf.xlu0
    %1437 = vmatprep.subr.mxu0 0.0
    %1438 = vmatpush1.msra.mxu0 %v1277
    %1439 = vmatprep.subr.mxu0 0.0
    %1440 = vmatpush1.msra.mxu0 %v1278
    %1441 = vmatprep.subr.mxu0 0.0
    %1442 = vmatpush1.msra.mxu0 %v1279
    %1443 = vmatprep.subr.mxu0 0.0
    %1444 = vmatpush1.msra.mxu0 %v1280
    %1445 = vmatprep.subr.mxu0 0.0
    %1446 = vmatpush1.msra.mxu0 %v1281
    %1447 = vmatprep.subr.mxu0 0.0
    %1448 = vmatpush1.msra.mxu0 %v1282
    %1449 = vmatprep.subr.mxu0 0.0
    %1450 = vmatpush1.msra.mxu0 %v1283
    %1451 = vmatprep.subr.mxu0 0.0
    %1452 = vmatpush1.msra.mxu0 %v1284
    %1453 = vmatprep.subr.mxu0 0.0
    %1454 = vmatpush1.msra.mxu0 %v1285
    %1455 = vmatprep.subr.mxu0 0.0
    %1456 = vmatpush1.msra.mxu0 %v1286
    %1457 = vmatprep.subr.mxu0 0.0
    %1458 = vmatpush1.msra.mxu0 %v1287
    %1459 = vmatprep.subr.mxu0 0.0
    %1460 = vmatpush1.msra.mxu0 %v1288
    %1461 = vmatprep.subr.mxu0 0.0
    %1462 = vmatpush1.msra.mxu0 %v1289
    %1463 = vmatprep.subr.mxu0 0.0
    %1464 = vmatpush1.msra.mxu0 %v1290
    %1465 = vmatprep.subr.mxu0 0.0
    %1466 = vmatpush1.msra.mxu0 %v1291
    %1467 = vmatprep.subr.mxu0 0.0
    %1468 = vmatpush1.msra.mxu0 %v1292
    %1469 = vmatprep.subr.mxu0 0.0
    %1470 = vmatpush1.msra.mxu0 %v1293
    %1471 = vmatprep.subr.mxu0 0.0
    %1472 = vmatpush1.msra.mxu0 %v1294
    %1473 = vmatprep.subr.mxu0 0.0
    %1474 = vmatpush1.msra.mxu0 %v1295
    %1475 = vmatprep.subr.mxu0 0.0
    %1476 = vmatpush1.msra.mxu0 %v1296
    %1477 = vmatprep.subr.mxu0 0.0
    %1478 = vmatpush1.msra.mxu0 %v1297
    %1479 = vmatprep.subr.mxu0 0.0
    %1480 = vmatpush1.msra.mxu0 %v1298
    %1481 = vmatprep.subr.mxu0 0.0
    %1482 = vmatpush1.msra.mxu0 %v1299
    %1483 = vmatprep.subr.mxu0 0.0
    %1484 = vmatpush1.msra.mxu0 %v1300
    %1485 = vmatprep.subr.mxu0 0.0
    %1486 = vmatpush1.msra.mxu0 %v1301
    %1487 = vmatprep.subr.mxu0 0.0
    %1488 = vmatpush1.msra.mxu0 %v1302
    %1489 = vmatprep.subr.mxu0 0.0
    %1490 = vmatpush1.msra.mxu0 %v1303
    %1491 = vmatprep.subr.mxu0 0.0
    %1492 = vmatpush1.msra.mxu0 %v1304
    %1493 = vmatprep.subr.mxu0 0.0
    %1494 = vmatpush1.msra.mxu0 %v1305
    %1495 = vmatprep.subr.mxu0 0.0
    %1496 = vmatpush1.msra.mxu0 %v1306
    %1497 = vmatprep.subr.mxu0 0.0
    %1498 = vmatpush1.msra.mxu0 %v1307
    %1499 = vmatprep.subr.mxu0 0.0
    %1500 = vmatpush1.msra.mxu0 %v1308
    %1501 = vmatprep.mubr.f32.mxu0 %v1389
    %1502 = vmatmul.mubr.f32.gmra.mrb[0].mxu0 %v1325
    %v1503 = vpop.f32.mrb[0].mxu0
    %v1504 = vadd.f32 0.0, %v1503
    %v1505 = vpop.f32.mrb[0].mxu0
    %1506 = vmatprep.mubr.f32.mxu0 %v1390
    %1507 = vmatmul.mubr.f32.gmra.mrb[0].mxu0 %v1326
    %v1508 = vpop.f32.mrb[0].mxu0
    %v1509 = vadd.f32 0.0, %v1508
    %v1510 = vpop.f32.mrb[0].mxu0
    %1511 = vmatprep.mubr.f32.mxu0 %v1391
    %1512 = vmatmul.mubr.f32.gmra.mrb[0].mxu0 %v1327
    %v1513 = vpop.f32.mrb[0].mxu0
    %v1514 = vadd.f32 0.0, %v1513
    %v1515 = vpop.f32.mrb[0].mxu0
    %1516 = vmatprep.mubr.f32.mxu0 %v1392
    %1517 = vmatmul.mubr.f32.gmra.mrb[0].mxu0 %v1328
    %v1518 = vpop.f32.mrb[0].mxu0
    %v1519 = vadd.f32 0.0, %v1518
    %v1520 = vpop.f32.mrb[0].mxu0
    %1521 = vmatprep.mubr.f32.mxu0 %v1393
    %1522 = vmatmul.mubr.f32.gmra.mrb[0].mxu0 %v1329
    %v1523 = vpop.f32.mrb[0].mxu0
    %v1524 = vadd.f32 0.0, %v1523
    %v1525 = vpop.f32.mrb[0].mxu0
    %1526 = vmatprep.mubr.f32.mxu0 %v1394
    %1527 = vmatmul.mubr.f32.gmra.mrb[0].mxu0 %v1330
    %v1528 = vpop.f32.mrb[0].mxu0
    %v1529 = vadd.f32 0.0, %v1528
    %v1530 = vpop.f32.mrb[0].mxu0
    %1531 = vmatprep.mubr.f32.mxu0 %v1395
    %1532 = vmatmul.mubr.f32.gmra.mrb[0].mxu0 %v1331
    %v1533 = vpop.f32.mrb[0].mxu0
    %v1534 = vadd.f32 0.0, %v1533
    %v1535 = vpop.f32.mrb[0].mxu0
    %1536 = vmatprep.mubr.f32.mxu0 %v1396
    %1537 = vmatmul.mubr.f32.gmra.mrb[0].mxu0 %v1332
    %v1538 = vpop.f32.mrb[0].mxu0
    %v1539 = vadd.f32 0.0, %v1538
    %v1540 = vpop.f32.mrb[0].mxu0
    %1541 = vmatprep.mubr.f32.mxu0 %v1397
    %1542 = vmatmul.mubr.f32.gmra.mrb[0].mxu0 %v1333
    %v1543 = vpop.f32.mrb[0].mxu0
    %v1544 = vadd.f32 0.0, %v1543
    %v1545 = vpop.f32.mrb[0].mxu0
    %1546 = vmatprep.mubr.f32.mxu0 %v1398
    %1547 = vmatmul.mubr.f32.gmra.mrb[0].mxu0 %v1334
    %v1548 = vpop.f32.mrb[0].mxu0
    %v1549 = vadd.f32 0.0, %v1548
    %v1550 = vpop.f32.mrb[0].mxu0
    %1551 = vmatprep.mubr.f32.mxu0 %v1399
    %1552 = vmatmul.mubr.f32.gmra.mrb[0].mxu0 %v1335
    %v1553 = vpop.f32.mrb[0].mxu0
    %v1554 = vadd.f32 0.0, %v1553
    %v1555 = vpop.f32.mrb[0].mxu0
    %1556 = vmatprep.mubr.f32.mxu0 %v1400
    %1557 = vmatmul.mubr.f32.gmra.mrb[0].mxu0 %v1336
    %v1558 = vpop.f32.mrb[0].mxu0
    %v1559 = vadd.f32 0.0, %v1558
    %v1560 = vpop.f32.mrb[0].mxu0
    %1561 = vmatprep.mubr.f32.mxu0 %v1401
    %1562 = vmatmul.mubr.f32.gmra.mrb[0].mxu0 %v1337
    %v1563 = vpop.f32.mrb[0].mxu0
    %v1564 = vadd.f32 0.0, %v1563
    %v1565 = vpop.f32.mrb[0].mxu0
    %1566 = vmatprep.mubr.f32.mxu0 %v1402
    %1567 = vmatmul.mubr.f32.gmra.mrb[0].mxu0 %v1338
    %v1568 = vpop.f32.mrb[0].mxu0
    %v1569 = vadd.f32 0.0, %v1568
    %v1570 = vpop.f32.mrb[0].mxu0
    %1571 = vmatprep.mubr.f32.mxu0 %v1403
    %1572 = vmatmul.mubr.f32.gmra.mrb[0].mxu0 %v1339
    %v1573 = vpop.f32.mrb[0].mxu0
    %v1574 = vadd.f32 0.0, %v1573
    %v1575 = vpop.f32.mrb[0].mxu0
    %1576 = vmatprep.mubr.f32.mxu0 %v1404
    %1577 = vmatmul.mubr.f32.gmra.mrb[0].mxu0 %v1340
    %v1578 = vpop.f32.mrb[0].mxu0
    %v1579 = vadd.f32 0.0, %v1578
    %v1580 = vpop.f32.mrb[0].mxu0
    %1581 = vmatprep.mubr.f32.mxu0 %v1421
    %1582 = vmatmul.mubr.f32.gmra.mrb[0].mxu0 %v1357
    %v1583 = vpop.f32.mrb[0].mxu0
    %v1584 = vadd.f32 0.0, %v1583
    %v1585 = vpop.f32.mrb[0].mxu0
    %1586 = vmatprep.mubr.f32.mxu0 %v1422
    %1587 = vmatmul.mubr.f32.gmra.mrb[0].mxu0 %v1358
    %v1588 = vpop.f32.mrb[0].mxu0
    %v1589 = vadd.f32 0.0, %v1588
    %v1590 = vpop.f32.mrb[0].mxu0
    %1591 = vmatprep.mubr.f32.mxu0 %v1423
    %1592 = vmatmul.mubr.f32.gmra.mrb[0].mxu0 %v1359
    %v1593 = vpop.f32.mrb[0].mxu0
    %v1594 = vadd.f32 0.0, %v1593
    %v1595 = vpop.f32.mrb[0].mxu0
    %1596 = vmatprep.mubr.f32.mxu0 %v1424
    %1597 = vmatmul.mubr.f32.gmra.mrb[0].mxu0 %v1360
    %v1598 = vpop.f32.mrb[0].mxu0
    %v1599 = vadd.f32 0.0, %v1598
    %v1600 = vpop.f32.mrb[0].mxu0
    %1601 = vmatprep.mubr.f32.mxu0 %v1425
    %1602 = vmatmul.mubr.f32.gmra.mrb[0].mxu0 %v1361
    %v1603 = vpop.f32.mrb[0].mxu0
    %v1604 = vadd.f32 0.0, %v1603
    %v1605 = vpop.f32.mrb[0].mxu0
    %1606 = vmatprep.mubr.f32.mxu0 %v1426
    %1607 = vmatmul.mubr.f32.gmra.mrb[0].mxu0 %v1362
    %v1608 = vpop.f32.mrb[0].mxu0
    %v1609 = vadd.f32 0.0, %v1608
    %v1610 = vpop.f32.mrb[0].mxu0
    %1611 = vmatprep.mubr.f32.mxu0 %v1427
    %1612 = vmatmul.mubr.f32.gmra.mrb[0].mxu0 %v1363
    %v1613 = vpop.f32.mrb[0].mxu0
    %v1614 = vadd.f32 0.0, %v1613
    %v1615 = vpop.f32.mrb[0].mxu0
    %1616 = vmatprep.mubr.f32.mxu0 %v1428
    %1617 = vmatmul.mubr.f32.gmra.mrb[0].mxu0 %v1364
    %v1618 = vpop.f32.mrb[0].mxu0
    %v1619 = vadd.f32 0.0, %v1618
    %v1620 = vpop.f32.mrb[0].mxu0
    %1621 = vmatprep.mubr.f32.mxu0 %v1429
    %1622 = vmatmul.mubr.f32.gmra.mrb[0].mxu0 %v1365
    %v1623 = vpop.f32.mrb[0].mxu0
    %v1624 = vadd.f32 0.0, %v1623
    %v1625 = vpop.f32.mrb[0].mxu0
    %1626 = vmatprep.mubr.f32.mxu0 %v1430
    %1627 = vmatmul.mubr.f32.gmra.mrb[0].mxu0 %v1366
    %v1628 = vpop.f32.mrb[0].mxu0
    %v1629 = vadd.f32 0.0, %v1628
    %v1630 = vpop.f32.mrb[0].mxu0
    %1631 = vmatprep.mubr.f32.mxu0 %v1431
    %1632 = vmatmul.mubr.f32.gmra.mrb[0].mxu0 %v1367
    %v1633 = vpop.f32.mrb[0].mxu0
    %v1634 = vadd.f32 0.0, %v1633
    %v1635 = vpop.f32.mrb[0].mxu0
    %1636 = vmatprep.mubr.f32.mxu0 %v1432
    %1637 = vmatmul.mubr.f32.gmra.mrb[0].mxu0 %v1368
    %v1638 = vpop.f32.mrb[0].mxu0
    %v1639 = vadd.f32 0.0, %v1638
    %v1640 = vpop.f32.mrb[0].mxu0
    %1641 = vmatprep.mubr.f32.mxu0 %v1433
    %1642 = vmatmul.mubr.f32.gmra.mrb[0].mxu0 %v1369
    %v1643 = vpop.f32.mrb[0].mxu0
    %v1644 = vadd.f32 0.0, %v1643
    %v1645 = vpop.f32.mrb[0].mxu0
    %1646 = vmatprep.mubr.f32.mxu0 %v1434
    %1647 = vmatmul.mubr.f32.gmra.mrb[0].mxu0 %v1370
    %v1648 = vpop.f32.mrb[0].mxu0
    %v1649 = vadd.f32 0.0, %v1648
    %v1650 = vpop.f32.mrb[0].mxu0
    %1651 = vmatprep.mubr.f32.mxu0 %v1435
    %1652 = vmatmul.mubr.f32.gmra.mrb[0].mxu0 %v1371
    %v1653 = vpop.f32.mrb[0].mxu0
    %v1654 = vadd.f32 0.0, %v1653
    %v1655 = vpop.f32.mrb[0].mxu0
    %1656 = vmatprep.mubr.f32.mxu0 %v1436
    %1657 = vmatmul.mubr.f32.gmra.mrb[0].mxu0 %v1372
    %v1658 = vpop.f32.mrb[0].mxu0
    %v1659 = vadd.f32 0.0, %v1658
    %v1660 = vpop.f32.mrb[0].mxu0
    %1661 = vdwg.mxu0
    %1662 = vst [vmem:[#allocation12] sm:$0xff] %v1504
    %1663 = vst [vmem:[#allocation12 + $0x8] sm:$0xff] %v1509
    %1664 = vst [vmem:[#allocation12 + $0x10] sm:$0xff] %v1514
    %1665 = vst [vmem:[#allocation12 + $0x18] sm:$0xff] %v1519
    %1666 = vst [vmem:[#allocation12 + $0x20] sm:$0xff] %v1524
    %1667 = vst [vmem:[#allocation12 + $0x28] sm:$0xff] %v1529
    %1668 = vst [vmem:[#allocation12 + $0x30] sm:$0xff] %v1534
    %1669 = vst [vmem:[#allocation12 + $0x38] sm:$0xff] %v1539
    %1670 = vst [vmem:[#allocation12 + $0x40] sm:$0xff] %v1544
    %1671 = vst [vmem:[#allocation12 + $0x48] sm:$0xff] %v1549
    %1672 = vst [vmem:[#allocation12 + $0x50] sm:$0xff] %v1554
    %1673 = vst [vmem:[#allocation12 + $0x58] sm:$0xff] %v1559
    %1674 = vst [vmem:[#allocation12 + $0x60] sm:$0xff] %v1564
    %1675 = vst [vmem:[#allocation12 + $0x68] sm:$0xff] %v1569
    %1676 = vst [vmem:[#allocation12 + $0x70] sm:$0xff] %v1574
    %1677 = vst [vmem:[#allocation12 + $0x78] sm:$0xff] %v1579
    %1678 = vst [vmem:[#allocation12 + $0x80] sm:$0xff] %v1584
    %1679 = vst [vmem:[#allocation12 + $0x88] sm:$0xff] %v1589
    %1680 = vst [vmem:[#allocation12 + $0x90] sm:$0xff] %v1594
    %1681 = vst [vmem:[#allocation12 + $0x98] sm:$0xff] %v1599
    %1682 = vst [vmem:[#allocation12 + $0xa0] sm:$0xff] %v1604
    %1683 = vst [vmem:[#allocation12 + $0xa8] sm:$0xff] %v1609
    %1684 = vst [vmem:[#allocation12 + $0xb0] sm:$0xff] %v1614
    %1685 = vst [vmem:[#allocation12 + $0xb8] sm:$0xff] %v1619
    %1686 = vst [vmem:[#allocation12 + $0xc0] sm:$0xff] %v1624
    %1687 = vst [vmem:[#allocation12 + $0xc8] sm:$0xff] %v1629
    %1688 = vst [vmem:[#allocation12 + $0xd0] sm:$0xff] %v1634
    %1689 = vst [vmem:[#allocation12 + $0xd8] sm:$0xff] %v1639
    %1690 = vst [vmem:[#allocation12 + $0xe0] sm:$0xff] %v1644
    %1691 = vst [vmem:[#allocation12 + $0xe8] sm:$0xff] %v1649
    %1692 = vst [vmem:[#allocation12 + $0xf0] sm:$0xff] %v1654
    %1693 = vst [vmem:[#allocation12 + $0xf8] sm:$0xff] %v1659
    // Predicated region
    $region38: #{gcs_layer_pallas.5} parent=1 // pred_check
      _
    $region39: #{gcs_layer_pallas.5} parent=1 // pred_check_branch
      %1695 = sbr.rel (0) target = $region41
    $region40: #{gcs_layer_pallas.5} parent=1 // pred_region
      %s1697 = ssub.s32 8192, 8192
      %1698 = vsyncadd [#allocation5], %s1697
      %s1699 = sshll.u32 [#allocation11], 4
      %s1700 = int_to_ptr.vmem [resolvable:$true] %s1699
      %1705 = dma.vmem_to_hbm [thread:$0]  %s1700, 8192, %s5, [#allocation5], 256, 256, 16
    $region41: #{gcs_layer_pallas.5} parent=1 // pred_fallthru
      _
    // Predicated region
    $region42: #{gcs_layer_pallas.5} parent=1 // pred_check
      _
    $region43: #{gcs_layer_pallas.5} parent=1 // pred_check_branch
      %1707 = sbr.rel (0) target = $region45
    $region44: #{gcs_layer_pallas.5} parent=1 // pred_region
      %s1709 = ssub.s32 4096, 4096
      %1710 = vsyncadd [#allocation13], %s1709
      %s1711 = sshll.u32 [#allocation12], 4
      %s1712 = int_to_ptr.vmem [resolvable:$true] %s1711
      %1717 = dma.vmem_to_hbm [thread:$0]  %s1712, 4096, %s6, [#allocation13], 128, 128, 8
    $region45: #{gcs_layer_pallas.5} parent=1 // pred_fallthru
      _
    // Predicated region
    $region46: #{gcs_layer_pallas.5} parent=1 // pred_check
      _
    $region47: #{gcs_layer_pallas.5} parent=1 // pred_check_branch
      %1719 = sbr.rel (0) target = $region49
    $region48: #{gcs_layer_pallas.5} parent=1 // pred_region
      %1720 = dma.done [#allocation5], 8192
    $region49: #{gcs_layer_pallas.5} parent=1 // pred_fallthru
      _
    // Predicated region
    $region50: #{gcs_layer_pallas.5} parent=1 // pred_check
      _
    $region51: #{gcs_layer_pallas.5} parent=1 // pred_check_branch
      %1722 = sbr.rel (0) target = $region53
    $region52: #{gcs_layer_pallas.5} parent=1 // pred_region
      %1723 = dma.done [#allocation13], 4096
    $region53: #{gcs_layer_pallas.5} parent=1 // pred_fallthru
      _
    %1724 = vsyncpa [#allocation4], 1
    %1725 = vsyncpa [#allocation7], 1
    %1726 = vsyncpa [#allocation10], 1
    %1727 = vsyncpa [#allocation5], 1
    %1728 = vsyncpa [#allocation13], 1

</llo_original>
